<compile_context>
chip_gen: v5e
topology: v5e:2x2
jax: 0.10.0
libtpu: 0.0.40
codegen_flags: <defaults>
</compile_context>

<pallas_src>
import functools

import jax
import jax.numpy as jnp
from jax.experimental import pallas as pl
from jax.experimental.pallas import tpu as pltpu


IN_DIM = 3      # constructor default input_dim=3
OUT_DIM = 4     # constructor default output_dim=4
H1, H2, H3 = 64, 128, 256
HG = 512        # global_mlp width
F1, F2 = 256, 128


def _round_up(a, b):
    return (a + b - 1) // b * b


# ---------------------------------------------------------------------------
# Stage 1: per-point MLP1-3 + per-tile feature max
# ---------------------------------------------------------------------------
def _features_kernel(x_ref, w1_ref, b1_ref, w2_ref, b2_ref, w3_ref, b3_ref,
                     pf_ref, tmax_ref):
    x = x_ref[...]                                     # (TN, IN_DIM)

    # mlp1: K = IN_DIM (tiny) -> VPU broadcast-FMAs instead of a K=3 MXU pass.
    h = jnp.broadcast_to(b1_ref[...], (x.shape[0], H1))
    for k in range(IN_DIM):                            # static unroll
        h = h + x[:, k:k + 1] * w1_ref[k:k + 1, :]
    h = jnp.maximum(h, 0.0)                            # (TN, 64)

    h = jnp.maximum(
        jnp.dot(h, w2_ref[...], preferred_element_type=jnp.float32)
        + b2_ref[...], 0.0)                            # (TN, 128)
    feat = jnp.maximum(
        jnp.dot(h, w3_ref[...], preferred_element_type=jnp.float32)
        + b3_ref[...], 0.0)                            # (TN, 256)

    pf_ref[...] = feat
    # Per-tile column max, broadcast to 8 rows so the (8, 256) output block is
    # layout-friendly; the cross-tile max happens in the wrapper.
    tmax_ref[...] = jnp.broadcast_to(
        jnp.max(feat, axis=0, keepdims=True), tmax_ref.shape)


# ---------------------------------------------------------------------------
# Stage 2: global MLP (8 broadcast rows, recomputed per tile - tiny) + fusion
# ---------------------------------------------------------------------------
def _fusion_kernel(pf_ref, gmax_ref, wg_ref, bg_ref, wf1a_ref, wf1b_ref,
                   bf1_ref, wf2_ref, bf2_ref, wo_ref, bo_ref, out_ref):
    # Global branch: relu(gmax @ Wg + bg) @ Wf1b + bf1  -> the constant row of
    # fusion layer 1 contributed by the global feature (no concat needed).
    g = jnp.maximum(
        jnp.dot(gmax_ref[...], wg_ref[...], preferred_element_type=jnp.float32)
        + bg_ref[...], 0.0)                                         # (8, 512)
    gproj = (jnp.dot(g, wf1b_ref[...], preferred_element_type=jnp.float32)
             + bf1_ref[...])[0:1, :]                                # (1, 256)

    pf = pf_ref[...]                                                # (TN, 256)
    h = jnp.maximum(
        jnp.dot(pf, wf1a_ref[...], preferred_element_type=jnp.float32)
        + gproj, 0.0)                                               # (TN, 256)
    h = jnp.maximum(
        jnp.dot(h, wf2_ref[...], preferred_element_type=jnp.float32)
        + bf2_ref[...], 0.0)                                        # (TN, 128)
    out_ref[...] = (
        jnp.dot(h, wo_ref[...], preferred_element_type=jnp.float32)
        + bo_ref[...]).astype(out_ref.dtype)                        # (TN, OUT)


# ---------------------------------------------------------------------------
# Wrapper
# ---------------------------------------------------------------------------
@functools.partial(jax.jit, static_argnames=("tile_n",))
def pointnet_forward(x, params, tile_n=2048):
    (w1, b1, w2, b2, w3, b3, wg, bg, wf1, bf1, wf2, bf2, wo, bo) = params
    n, in_dim = x.shape

    tn = min(tile_n, _round_up(n, 8))
    n_pad = _round_up(n, tn)
    if n_pad != n:
        # Pad with copies of row 0: padded outputs are discarded and the
        # global max is unchanged.
        pad = jnp.broadcast_to(x[:1], (n_pad - n, in_dim))
        x = jnp.concatenate([x, pad], axis=0)
    num_tiles = n_pad // tn

    def const_spec(p):                 # whole array, resident across the grid
        return pl.BlockSpec(p.shape, lambda i: (0, 0))

    cparams = pltpu.CompilerParams(
        dimension_semantics=("parallel",),
        vmem_limit_bytes=64 * 1024 * 1024,
    )

    # ---- Stage 1 ----
    stage1_params = (w1, b1, w2, b2, w3, b3)
    pf, tile_max = pl.pallas_call(
        _features_kernel,
        out_shape=(
            jax.ShapeDtypeStruct((n_pad, H3), jnp.float32),
            jax.ShapeDtypeStruct((num_tiles * 8, H3), jnp.float32),
        ),
        grid_spec=pltpu.PrefetchScalarGridSpec(
            num_scalar_prefetch=0,
            grid=(num_tiles,),
            in_specs=[pl.BlockSpec((tn, in_dim), lambda i: (i, 0))]
                     + [const_spec(p) for p in stage1_params],
            out_specs=(pl.BlockSpec((tn, H3), lambda i: (i, 0)),
                       pl.BlockSpec((8, H3), lambda i: (i, 0))),
        ),
        compiler_params=cparams,
    )(x, *stage1_params)

    # TODO(synk): the tiny cross-tile max reduction (num_tiles*8, 256) -> (256,)
    # is done here in the JAX wrapper; all 7 Linear layers run inside Pallas.
    gmax8 = jnp.broadcast_to(jnp.max(tile_max, axis=0, keepdims=True), (8, H3))

    # Split fusion weight: rows 0:256 act on point features, rows 256:768 on
    # the (constant per-batch) global feature -> no concat in the kernel.
    wf1a, wf1b = wf1[:H3], wf1[H3:]

    stage2_params = (gmax8, wg, bg, wf1a, wf1b, bf1, wf2, bf2, wo, bo)
    out = pl.pallas_call(
        _fusion_kernel,
        out_shape=jax.ShapeDtypeStruct((n_pad, OUT_DIM), jnp.float32),
        grid_spec=pltpu.PrefetchScalarGridSpec(
            num_scalar_prefetch=0,
            grid=(num_tiles,),
            in_specs=[pl.BlockSpec((tn, H3), lambda i: (i, 0))]
                     + [const_spec(p) for p in stage2_params],
            out_specs=pl.BlockSpec((tn, OUT_DIM), lambda i: (i, 0)),
        ),
        compiler_params=cparams,
    )(pf, *stage2_params)

    return out[:n]


# ---------------------------------------------------------------------------
# Parameter init + pure-JAX reference
# ---------------------------------------------------------------------------
def init_params(key, in_dim=IN_DIM, out_dim=OUT_DIM):
    dims = [(in_dim, H1), (H1, H2), (H2, H3), (H3, HG),
            (H3 + HG, F1), (F1, F2), (F2, out_dim)]
    params = []
    for fan_in, fan_out in dims:
        key, kw, kb = jax.random.split(key, 3)
        s = 1.0 / jnp.sqrt(jnp.float32(fan_in))
        params.append(jax.random.uniform(kw, (fan_in, fan_out), jnp.float32, -s, s))
        params.append(jax.random.uniform(kb, (1, fan_out), jnp.float32, -s, s))
    return tuple(params)


def pointnet_reference(x, params):
    (w1, b1, w2, b2, w3, b3, wg, bg, wf1, bf1, wf2, bf2, wo, bo) = params
    hi = jax.lax.Precision.HIGHEST

    def dot(a, b):
        return jnp.dot(a, b, precision=hi)

    h = jax.nn.relu(dot(x, w1) + b1)
    h = jax.nn.relu(dot(h, w2) + b2)
    feat = jax.nn.relu(dot(h, w3) + b3)                   # (N, 256)
    g = jnp.max(feat, axis=0, keepdims=True)              # (1, 256)
    g = jax.nn.relu(dot(g, wg) + bg)                      # (1, 512)
    gb = jnp.broadcast_to(g, (feat.shape[0], g.shape[1]))
    fusion = jnp.concatenate([feat, gb], axis=-1)         # (N, 768)
    h = jax.nn.relu(dot(fusion, wf1) + bf1)
    h = jax.nn.relu(dot(h, wf2) + bf2)
    return dot(h, wo) + bo


if __name__ == "__main__":
    key = jax.random.PRNGKey(0)
    k_x, k_p = jax.random.split(key)

    N = 256
    x = jax.random.normal(k_x, (N, IN_DIM), jnp.float32)
    params = init_params(k_p)

    out = pointnet_forward(x, params)
    out = jax.block_until_ready(out)

    ref = pointnet_reference(x, params)
    assert out.shape == (N, OUT_DIM)
    assert jnp.allclose(out, ref, atol=1e-3, rtol=1e-3), "mismatch vs JAX reference"

    print("KERNEL_OK")
</pallas_src>

<mosaic_0001>
module attributes {stable_mosaic.version = 11 : i64} {
  func.func @_features_kernel(%arg0: i32, %arg1: memref<256x3xf32, #tpu.memory_space<vmem>>, %arg2: memref<3x64xf32, #tpu.memory_space<vmem>>, %arg3: memref<1x64xf32, #tpu.memory_space<vmem>>, %arg4: memref<64x128xf32, #tpu.memory_space<vmem>>, %arg5: memref<1x128xf32, #tpu.memory_space<vmem>>, %arg6: memref<128x256xf32, #tpu.memory_space<vmem>>, %arg7: memref<1x256xf32, #tpu.memory_space<vmem>>, %arg8: memref<256x256xf32, #tpu.memory_space<vmem>>, %arg9: memref<8x256xf32, #tpu.memory_space<vmem>>) attributes {dimension_semantics = [#tpu.dimension_semantics<parallel>], iteration_bounds = array<i64: 1>, scalar_prefetch = 0 : i64, scratch_operands = 0 : i64, tpu.core_type = #tpu.core_type<tc>, window_params = [{transform_indices = @transform_0, window_bounds = array<i64: 256, 3>}, {pipeline_mode = #tpu.pipeline_mode<synchronous>, transform_indices = @transform_1, window_bounds = array<i64: 3, 64>}, {pipeline_mode = #tpu.pipeline_mode<synchronous>, transform_indices = @transform_2, window_bounds = array<i64: 1, 64>}, {pipeline_mode = #tpu.pipeline_mode<synchronous>, transform_indices = @transform_3, window_bounds = array<i64: 64, 128>}, {pipeline_mode = #tpu.pipeline_mode<synchronous>, transform_indices = @transform_4, window_bounds = array<i64: 1, 128>}, {pipeline_mode = #tpu.pipeline_mode<synchronous>, transform_indices = @transform_5, window_bounds = array<i64: 128, 256>}, {pipeline_mode = #tpu.pipeline_mode<synchronous>, transform_indices = @transform_6, window_bounds = array<i64: 1, 256>}, {transform_indices = @transform_7, window_bounds = array<i64: 256, 256>}, {transform_indices = @transform_8, window_bounds = array<i64: 8, 256>}]} {
    %c0 = arith.constant 0 : index
    %c0_0 = arith.constant 0 : index
    %0 = vector.load %arg1[%c0, %c0_0] : memref<256x3xf32, #tpu.memory_space<vmem>>, vector<256x3xf32>
    %c0_1 = arith.constant 0 : index
    %c0_2 = arith.constant 0 : index
    %1 = vector.load %arg3[%c0_1, %c0_2] : memref<1x64xf32, #tpu.memory_space<vmem>>, vector<1x64xf32>
    %2 = vector.shape_cast %1 : vector<1x64xf32> to vector<1x64xf32>
    %3 = vector.broadcast %2 : vector<1x64xf32> to vector<256x64xf32>
    %4 = vector.extract_strided_slice %0 {offsets = [0, 0], sizes = [256, 1], strides = [1, 1]} : vector<256x3xf32> to vector<256x1xf32>
    %c0_3 = arith.constant 0 : index
    %c0_4 = arith.constant 0 : index
    %5 = vector.load %arg2[%c0_3, %c0_4] : memref<3x64xf32, #tpu.memory_space<vmem>>, vector<1x64xf32>
    %6 = vector.broadcast %4 : vector<256x1xf32> to vector<256x64xf32>
    %7 = vector.broadcast %5 : vector<1x64xf32> to vector<256x64xf32>
    %8 = arith.mulf %6, %7 : vector<256x64xf32>
    %9 = arith.addf %3, %8 : vector<256x64xf32>
    %10 = vector.extract_strided_slice %0 {offsets = [0, 1], sizes = [256, 1], strides = [1, 1]} : vector<256x3xf32> to vector<256x1xf32>
    %c1 = arith.constant 1 : index
    %c0_5 = arith.constant 0 : index
    %11 = vector.load %arg2[%c1, %c0_5] : memref<3x64xf32, #tpu.memory_space<vmem>>, vector<1x64xf32>
    %12 = vector.broadcast %10 : vector<256x1xf32> to vector<256x64xf32>
    %13 = vector.broadcast %11 : vector<1x64xf32> to vector<256x64xf32>
    %14 = arith.mulf %12, %13 : vector<256x64xf32>
    %15 = arith.addf %9, %14 : vector<256x64xf32>
    %16 = vector.extract_strided_slice %0 {offsets = [0, 2], sizes = [256, 1], strides = [1, 1]} : vector<256x3xf32> to vector<256x1xf32>
    %c2 = arith.constant 2 : index
    %c0_6 = arith.constant 0 : index
    %17 = vector.load %arg2[%c2, %c0_6] : memref<3x64xf32, #tpu.memory_space<vmem>>, vector<1x64xf32>
    %18 = vector.broadcast %16 : vector<256x1xf32> to vector<256x64xf32>
    %19 = vector.broadcast %17 : vector<1x64xf32> to vector<256x64xf32>
    %20 = arith.mulf %18, %19 : vector<256x64xf32>
    %21 = arith.addf %15, %20 : vector<256x64xf32>
    %cst = arith.constant 0.000000e+00 : f32
    %22 = vector.broadcast %cst : f32 to vector<256x64xf32>
    %23 = arith.maximumf %21, %22 : vector<256x64xf32>
    %c0_7 = arith.constant 0 : index
    %c0_8 = arith.constant 0 : index
    %24 = vector.load %arg4[%c0_7, %c0_8] : memref<64x128xf32, #tpu.memory_space<vmem>>, vector<64x128xf32>
    %cst_9 = arith.constant dense<0.000000e+00> : vector<256x128xf32>
    %25 = tpu.matmul %23, %24, %cst_9 {dimension_numbers = #tpu.dot_dimension_numbers<[1], [0], [0], [1], [0, 0, 1, 1], [], []>} : vector<256x64xf32>, vector<64x128xf32>, vector<256x128xf32> -> vector<256x128xf32>
    %c0_10 = arith.constant 0 : index
    %c0_11 = arith.constant 0 : index
    %26 = vector.load %arg5[%c0_10, %c0_11] : memref<1x128xf32, #tpu.memory_space<vmem>>, vector<1x128xf32>
    %27 = vector.broadcast %26 : vector<1x128xf32> to vector<256x128xf32>
    %28 = arith.addf %25, %27 : vector<256x128xf32>
    %cst_12 = arith.constant 0.000000e+00 : f32
    %29 = vector.broadcast %cst_12 : f32 to vector<256x128xf32>
    %30 = arith.maximumf %28, %29 : vector<256x128xf32>
    %c0_13 = arith.constant 0 : index
    %c0_14 = arith.constant 0 : index
    %31 = vector.load %arg6[%c0_13, %c0_14] : memref<128x256xf32, #tpu.memory_space<vmem>>, vector<128x256xf32>
    %cst_15 = arith.constant dense<0.000000e+00> : vector<256x256xf32>
    %32 = tpu.matmul %30, %31, %cst_15 {dimension_numbers = #tpu.dot_dimension_numbers<[1], [0], [0], [1], [0, 0, 1, 1], [], []>} : vector<256x128xf32>, vector<128x256xf32>, vector<256x256xf32> -> vector<256x256xf32>
    %c0_16 = arith.constant 0 : index
    %c0_17 = arith.constant 0 : index
    %33 = vector.load %arg7[%c0_16, %c0_17] : memref<1x256xf32, #tpu.memory_space<vmem>>, vector<1x256xf32>
    %34 = vector.broadcast %33 : vector<1x256xf32> to vector<256x256xf32>
    %35 = arith.addf %32, %34 : vector<256x256xf32>
    %cst_18 = arith.constant 0.000000e+00 : f32
    %36 = vector.broadcast %cst_18 : f32 to vector<256x256xf32>
    %37 = arith.maximumf %35, %36 : vector<256x256xf32>
    %c0_19 = arith.constant 0 : index
    %c0_20 = arith.constant 0 : index
    %38 = vector.load %arg8[%c0_19, %c0_20] : memref<256x256xf32, #tpu.memory_space<vmem>>, vector<256x256xf32>
    tpu.vector_store %arg8[%c0_19, %c0_20], %37 {strides = array<i32>} : memref<256x256xf32, #tpu.memory_space<vmem>>, vector<256x256xf32>,
    %cst_21 = arith.constant dense<0xFF800000> : vector<256xf32>
    %39 = vector.multi_reduction <maximumf>, %37, %cst_21 [0] : vector<256x256xf32> to vector<256xf32>
    %40 = vector.shape_cast %39 : vector<256xf32> to vector<1x256xf32>
    %41 = vector.shape_cast %40 : vector<1x256xf32> to vector<1x256xf32>
    %42 = vector.broadcast %41 : vector<1x256xf32> to vector<8x256xf32>
    %c0_22 = arith.constant 0 : index
    %c0_23 = arith.constant 0 : index
    %43 = vector.load %arg9[%c0_22, %c0_23] : memref<8x256xf32, #tpu.memory_space<vmem>>, vector<8x256xf32>
    tpu.vector_store %arg9[%c0_22, %c0_23], %42 {strides = array<i32>} : memref<8x256xf32, #tpu.memory_space<vmem>>, vector<8x256xf32>,
    return
  }
  func.func @transform_0(%arg0: i32) -> (i32, i32) {
    %c0_i32 = arith.constant 0 : i32
    %c0_i32_0 = arith.constant 0 : i32
    return %arg0, %c0_i32 : i32, i32
  }
  func.func @transform_1(%arg0: i32) -> (i32, i32) {
    %c0_i32 = arith.constant 0 : i32
    %c0_i32_0 = arith.constant 0 : i32
    %c0_i32_1 = arith.constant 0 : i32
    return %c0_i32, %c0_i32_0 : i32, i32
  }
  func.func @transform_2(%arg0: i32) -> (i32, i32) {
    %c0_i32 = arith.constant 0 : i32
    %c0_i32_0 = arith.constant 0 : i32
    %c0_i32_1 = arith.constant 0 : i32
    return %c0_i32, %c0_i32_0 : i32, i32
  }
  func.func @transform_3(%arg0: i32) -> (i32, i32) {
    %c0_i32 = arith.constant 0 : i32
    %c0_i32_0 = arith.constant 0 : i32
    %c0_i32_1 = arith.constant 0 : i32
    return %c0_i32, %c0_i32_0 : i32, i32
  }
  func.func @transform_4(%arg0: i32) -> (i32, i32) {
    %c0_i32 = arith.constant 0 : i32
    %c0_i32_0 = arith.constant 0 : i32
    %c0_i32_1 = arith.constant 0 : i32
    return %c0_i32, %c0_i32_0 : i32, i32
  }
  func.func @transform_5(%arg0: i32) -> (i32, i32) {
    %c0_i32 = arith.constant 0 : i32
    %c0_i32_0 = arith.constant 0 : i32
    %c0_i32_1 = arith.constant 0 : i32
    return %c0_i32, %c0_i32_0 : i32, i32
  }
  func.func @transform_6(%arg0: i32) -> (i32, i32) {
    %c0_i32 = arith.constant 0 : i32
    %c0_i32_0 = arith.constant 0 : i32
    %c0_i32_1 = arith.constant 0 : i32
    return %c0_i32, %c0_i32_0 : i32, i32
  }
  func.func @transform_7(%arg0: i32) -> (i32, i32) {
    %c0_i32 = arith.constant 0 : i32
    %c0_i32_0 = arith.constant 0 : i32
    return %arg0, %c0_i32 : i32, i32
  }
  func.func @transform_8(%arg0: i32) -> (i32, i32) {
    %c0_i32 = arith.constant 0 : i32
    %c0_i32_0 = arith.constant 0 : i32
    return %arg0, %c0_i32 : i32, i32
  }
}

module attributes {stable_mosaic.version = 11 : i64} {
  func.func @_fusion_kernel(%arg0: i32, %arg1: memref<256x256xf32, #tpu.memory_space<vmem>>, %arg2: memref<8x256xf32, #tpu.memory_space<vmem>>, %arg3: memref<256x512xf32, #tpu.memory_space<vmem>>, %arg4: memref<1x512xf32, #tpu.memory_space<vmem>>, %arg5: memref<256x256xf32, #tpu.memory_space<vmem>>, %arg6: memref<512x256xf32, #tpu.memory_space<vmem>>, %arg7: memref<1x256xf32, #tpu.memory_space<vmem>>, %arg8: memref<256x128xf32, #tpu.memory_space<vmem>>, %arg9: memref<1x128xf32, #tpu.memory_space<vmem>>, %arg10: memref<128x4xf32, #tpu.memory_space<vmem>>, %arg11: memref<1x4xf32, #tpu.memory_space<vmem>>, %arg12: memref<256x4xf32, #tpu.memory_space<vmem>>) attributes {dimension_semantics = [#tpu.dimension_semantics<parallel>], iteration_bounds = array<i64: 1>, scalar_prefetch = 0 : i64, scratch_operands = 0 : i64, tpu.core_type = #tpu.core_type<tc>, window_params = [{transform_indices = @transform_0, window_bounds = array<i64: 256, 256>}, {pipeline_mode = #tpu.pipeline_mode<synchronous>, transform_indices = @transform_1, window_bounds = array<i64: 8, 256>}, {pipeline_mode = #tpu.pipeline_mode<synchronous>, transform_indices = @transform_2, window_bounds = array<i64: 256, 512>}, {pipeline_mode = #tpu.pipeline_mode<synchronous>, transform_indices = @transform_3, window_bounds = array<i64: 1, 512>}, {pipeline_mode = #tpu.pipeline_mode<synchronous>, transform_indices = @transform_4, window_bounds = array<i64: 256, 256>}, {pipeline_mode = #tpu.pipeline_mode<synchronous>, transform_indices = @transform_5, window_bounds = array<i64: 512, 256>}, {pipeline_mode = #tpu.pipeline_mode<synchronous>, transform_indices = @transform_6, window_bounds = array<i64: 1, 256>}, {pipeline_mode = #tpu.pipeline_mode<synchronous>, transform_indices = @transform_7, window_bounds = array<i64: 256, 128>}, {pipeline_mode = #tpu.pipeline_mode<synchronous>, transform_indices = @transform_8, window_bounds = array<i64: 1, 128>}, {pipeline_mode = #tpu.pipeline_mode<synchronous>, transform_indices = @transform_9, window_bounds = array<i64: 128, 4>}, {pipeline_mode = #tpu.pipeline_mode<synchronous>, transform_indices = @transform_10, window_bounds = array<i64: 1, 4>}, {transform_indices = @transform_11, window_bounds = array<i64: 256, 4>}]} {
    %c0 = arith.constant 0 : index
    %c0_0 = arith.constant 0 : index
    %0 = vector.load %arg2[%c0, %c0_0] : memref<8x256xf32, #tpu.memory_space<vmem>>, vector<8x256xf32>
    %c0_1 = arith.constant 0 : index
    %c0_2 = arith.constant 0 : index
    %1 = vector.load %arg3[%c0_1, %c0_2] : memref<256x512xf32, #tpu.memory_space<vmem>>, vector<256x512xf32>
    %cst = arith.constant dense<0.000000e+00> : vector<8x512xf32>
    %2 = tpu.matmul %0, %1, %cst {dimension_numbers = #tpu.dot_dimension_numbers<[1], [0], [0], [1], [0, 0, 1, 1], [], []>} : vector<8x256xf32>, vector<256x512xf32>, vector<8x512xf32> -> vector<8x512xf32>
    %c0_3 = arith.constant 0 : index
    %c0_4 = arith.constant 0 : index
    %3 = vector.load %arg4[%c0_3, %c0_4] : memref<1x512xf32, #tpu.memory_space<vmem>>, vector<1x512xf32>
    %4 = vector.broadcast %3 : vector<1x512xf32> to vector<8x512xf32>
    %5 = arith.addf %2, %4 : vector<8x512xf32>
    %cst_5 = arith.constant 0.000000e+00 : f32
    %6 = vector.broadcast %cst_5 : f32 to vector<8x512xf32>
    %7 = arith.maximumf %5, %6 : vector<8x512xf32>
    %c0_6 = arith.constant 0 : index
    %c0_7 = arith.constant 0 : index
    %8 = vector.load %arg6[%c0_6, %c0_7] : memref<512x256xf32, #tpu.memory_space<vmem>>, vector<512x256xf32>
    %cst_8 = arith.constant dense<0.000000e+00> : vector<8x256xf32>
    %9 = tpu.matmul %7, %8, %cst_8 {dimension_numbers = #tpu.dot_dimension_numbers<[1], [0], [0], [1], [0, 0, 1, 1], [], []>} : vector<8x512xf32>, vector<512x256xf32>, vector<8x256xf32> -> vector<8x256xf32>
    %c0_9 = arith.constant 0 : index
    %c0_10 = arith.constant 0 : index
    %10 = vector.load %arg7[%c0_9, %c0_10] : memref<1x256xf32, #tpu.memory_space<vmem>>, vector<1x256xf32>
    %11 = vector.broadcast %10 : vector<1x256xf32> to vector<8x256xf32>
    %12 = arith.addf %9, %11 : vector<8x256xf32>
    %13 = vector.extract_strided_slice %12 {offsets = [0, 0], sizes = [1, 256], strides = [1, 1]} : vector<8x256xf32> to vector<1x256xf32>
    %c0_11 = arith.constant 0 : index
    %c0_12 = arith.constant 0 : index
    %14 = vector.load %arg1[%c0_11, %c0_12] : memref<256x256xf32, #tpu.memory_space<vmem>>, vector<256x256xf32>
    %c0_13 = arith.constant 0 : index
    %c0_14 = arith.constant 0 : index
    %15 = vector.load %arg5[%c0_13, %c0_14] : memref<256x256xf32, #tpu.memory_space<vmem>>, vector<256x256xf32>
    %cst_15 = arith.constant dense<0.000000e+00> : vector<256x256xf32>
    %16 = tpu.matmul %14, %15, %cst_15 {dimension_numbers = #tpu.dot_dimension_numbers<[1], [0], [0], [1], [0, 0, 1, 1], [], []>} : vector<256x256xf32>, vector<256x256xf32>, vector<256x256xf32> -> vector<256x256xf32>
    %17 = vector.broadcast %13 : vector<1x256xf32> to vector<256x256xf32>
    %18 = arith.addf %16, %17 : vector<256x256xf32>
    %cst_16 = arith.constant 0.000000e+00 : f32
    %19 = vector.broadcast %cst_16 : f32 to vector<256x256xf32>
    %20 = arith.maximumf %18, %19 : vector<256x256xf32>
    %c0_17 = arith.constant 0 : index
    %c0_18 = arith.constant 0 : index
    %21 = vector.load %arg8[%c0_17, %c0_18] : memref<256x128xf32, #tpu.memory_space<vmem>>, vector<256x128xf32>
    %cst_19 = arith.constant dense<0.000000e+00> : vector<256x128xf32>
    %22 = tpu.matmul %20, %21, %cst_19 {dimension_numbers = #tpu.dot_dimension_numbers<[1], [0], [0], [1], [0, 0, 1, 1], [], []>} : vector<256x256xf32>, vector<256x128xf32>, vector<256x128xf32> -> vector<256x128xf32>
    %c0_20 = arith.constant 0 : index
    %c0_21 = arith.constant 0 : index
    %23 = vector.load %arg9[%c0_20, %c0_21] : memref<1x128xf32, #tpu.memory_space<vmem>>, vector<1x128xf32>
    %24 = vector.broadcast %23 : vector<1x128xf32> to vector<256x128xf32>
    %25 = arith.addf %22, %24 : vector<256x128xf32>
    %cst_22 = arith.constant 0.000000e+00 : f32
    %26 = vector.broadcast %cst_22 : f32 to vector<256x128xf32>
    %27 = arith.maximumf %25, %26 : vector<256x128xf32>
    %c0_23 = arith.constant 0 : index
    %c0_24 = arith.constant 0 : index
    %28 = vector.load %arg10[%c0_23, %c0_24] : memref<128x4xf32, #tpu.memory_space<vmem>>, vector<128x4xf32>
    %cst_25 = arith.constant dense<0.000000e+00> : vector<256x4xf32>
    %29 = tpu.matmul %27, %28, %cst_25 {dimension_numbers = #tpu.dot_dimension_numbers<[1], [0], [0], [1], [0, 0, 1, 1], [], []>} : vector<256x128xf32>, vector<128x4xf32>, vector<256x4xf32> -> vector<256x4xf32>
    %c0_26 = arith.constant 0 : index
    %c0_27 = arith.constant 0 : index
    %30 = vector.load %arg11[%c0_26, %c0_27] : memref<1x4xf32, #tpu.memory_space<vmem>>, vector<1x4xf32>
    %31 = vector.broadcast %30 : vector<1x4xf32> to vector<256x4xf32>
    %32 = arith.addf %29, %31 : vector<256x4xf32>
    %c0_28 = arith.constant 0 : index
    %c0_29 = arith.constant 0 : index
    %33 = vector.load %arg12[%c0_28, %c0_29] : memref<256x4xf32, #tpu.memory_space<vmem>>, vector<256x4xf32>
    tpu.vector_store %arg12[%c0_28, %c0_29], %32 {strides = array<i32>} : memref<256x4xf32, #tpu.memory_space<vmem>>, vector<256x4xf32>,
    return
  }
  func.func @transform_0(%arg0: i32) -> (i32, i32) {
    %c0_i32 = arith.constant 0 : i32
    %c0_i32_0 = arith.constant 0 : i32
    return %arg0, %c0_i32 : i32, i32
  }
  func.func @transform_1(%arg0: i32) -> (i32, i32) {
    %c0_i32 = arith.constant 0 : i32
    %c0_i32_0 = arith.constant 0 : i32
    %c0_i32_1 = arith.constant 0 : i32
    return %c0_i32, %c0_i32_0 : i32, i32
  }
  func.func @transform_2(%arg0: i32) -> (i32, i32) {
    %c0_i32 = arith.constant 0 : i32
    %c0_i32_0 = arith.constant 0 : i32
    %c0_i32_1 = arith.constant 0 : i32
    return %c0_i32, %c0_i32_0 : i32, i32
  }
  func.func @transform_3(%arg0: i32) -> (i32, i32) {
    %c0_i32 = arith.constant 0 : i32
    %c0_i32_0 = arith.constant 0 : i32
    %c0_i32_1 = arith.constant 0 : i32
    return %c0_i32, %c0_i32_0 : i32, i32
  }
  func.func @transform_4(%arg0: i32) -> (i32, i32) {
    %c0_i32 = arith.constant 0 : i32
    %c0_i32_0 = arith.constant 0 : i32
    %c0_i32_1 = arith.constant 0 : i32
    return %c0_i32, %c0_i32_0 : i32, i32
  }
  func.func @transform_5(%arg0: i32) -> (i32, i32) {
    %c0_i32 = arith.constant 0 : i32
    %c0_i32_0 = arith.constant 0 : i32
    %c0_i32_1 = arith.constant 0 : i32
    return %c0_i32, %c0_i32_0 : i32, i32
  }
  func.func @transform_6(%arg0: i32) -> (i32, i32) {
    %c0_i32 = arith.constant 0 : i32
    %c0_i32_0 = arith.constant 0 : i32
    %c0_i32_1 = arith.constant 0 : i32
    return %c0_i32, %c0_i32_0 : i32, i32
  }
  func.func @transform_7(%arg0: i32) -> (i32, i32) {
    %c0_i32 = arith.constant 0 : i32
    %c0_i32_0 = arith.constant 0 : i32
    %c0_i32_1 = arith.constant 0 : i32
    return %c0_i32, %c0_i32_0 : i32, i32
  }
  func.func @transform_8(%arg0: i32) -> (i32, i32) {
    %c0_i32 = arith.constant 0 : i32
    %c0_i32_0 = arith.constant 0 : i32
    %c0_i32_1 = arith.constant 0 : i32
    return %c0_i32, %c0_i32_0 : i32, i32
  }
  func.func @transform_9(%arg0: i32) -> (i32, i32) {
    %c0_i32 = arith.constant 0 : i32
    %c0_i32_0 = arith.constant 0 : i32
    %c0_i32_1 = arith.constant 0 : i32
    return %c0_i32, %c0_i32_0 : i32, i32
  }
  func.func @transform_10(%arg0: i32) -> (i32, i32) {
    %c0_i32 = arith.constant 0 : i32
    %c0_i32_0 = arith.constant 0 : i32
    %c0_i32_1 = arith.constant 0 : i32
    return %c0_i32, %c0_i32_0 : i32, i32
  }
  func.func @transform_11(%arg0: i32) -> (i32, i32) {
    %c0_i32 = arith.constant 0 : i32
    %c0_i32_0 = arith.constant 0 : i32
    return %arg0, %c0_i32 : i32, i32
  }
}

</mosaic_0001>

<llo_original>
// kernel: pointnet_forward.2
$region0: #{pointnet_forward.2}
  #allocation0 [shape = 'u32[]', space=smem, size = 0x4, offset = 0x4, fixed_abs, tag = 'smem constant byte address 0x4 - core index']
  #allocation1 [shape = 'u32[72,128]{1,0:T(1,128)}', space=vmem, size = 0x9000, scoped, tag = 'internal scratch']
  %s0 = inlined_call_operand.vmem [shape: f32[256,3], index: 0, kind: input, shape index: {}]
  %s1 = inlined_call_operand.vmem [shape: f32[3,64], index: 1, kind: input, shape index: {}]
  %s2 = inlined_call_operand.vmem [shape: f32[1,64], index: 2, kind: input, shape index: {}]
  %s3 = inlined_call_operand.vmem [shape: f32[64,128], index: 3, kind: input, shape index: {}]
  %s4 = inlined_call_operand.vmem [shape: f32[1,128], index: 4, kind: input, shape index: {}]
  %s5 = inlined_call_operand.vmem [shape: f32[128,256], index: 5, kind: input, shape index: {}]
  %s6 = inlined_call_operand.vmem [shape: f32[1,256], index: 6, kind: input, shape index: {}]
  %s7 = inlined_call_operand.vmem [shape: f32[256,256], index: 7, kind: output, shape index: {0}]
  %s8 = inlined_call_operand.vmem [shape: f32[8,256], index: 8, kind: output, shape index: {1}]
  %9 = xla_tuple %s7, %s8
  %s10 = sld [smem:[#allocation0]]
  $region46: #{pointnet_forward.2} parent=0
    _
  %s12 = ssub.s32 1, %s10
  %s13 = scalar_select 0, %s12, %s10
  // Predicated region
  $region2: #{pointnet_forward.2} parent=0 // pred_check
    _
  $region3: #{pointnet_forward.2} parent=0 // pred_check_branch
    %15 = sbr.rel (0) target = $region5
  $region4: #{pointnet_forward.2} parent=0 // pred_region
    _
  $region5: #{pointnet_forward.2} parent=0 // pred_fallthru
    _
  // Predicated region
  $region6: #{pointnet_forward.2} parent=0 // pred_check
    _
  $region7: #{pointnet_forward.2} parent=0 // pred_check_branch
    %17 = sbr.rel (0) target = $region9
  $region8: #{pointnet_forward.2} parent=0 // pred_region
    _
  $region9: #{pointnet_forward.2} parent=0 // pred_fallthru
    _
  // Predicated region
  $region10: #{pointnet_forward.2} parent=0 // pred_check
    _
  $region11: #{pointnet_forward.2} parent=0 // pred_check_branch
    %19 = sbr.rel (0) target = $region13
  $region12: #{pointnet_forward.2} parent=0 // pred_region
    _
  $region13: #{pointnet_forward.2} parent=0 // pred_fallthru
    _
  // Predicated region
  $region14: #{pointnet_forward.2} parent=0 // pred_check
    _
  $region15: #{pointnet_forward.2} parent=0 // pred_check_branch
    %21 = sbr.rel (0) target = $region17
  $region16: #{pointnet_forward.2} parent=0 // pred_region
    _
  $region17: #{pointnet_forward.2} parent=0 // pred_fallthru
    _
  // Predicated region
  $region18: #{pointnet_forward.2} parent=0 // pred_check
    _
  $region19: #{pointnet_forward.2} parent=0 // pred_check_branch
    %23 = sbr.rel (0) target = $region21
  $region20: #{pointnet_forward.2} parent=0 // pred_region
    _
  $region21: #{pointnet_forward.2} parent=0 // pred_fallthru
    _
  // Predicated region
  $region22: #{pointnet_forward.2} parent=0 // pred_check
    _
  $region23: #{pointnet_forward.2} parent=0 // pred_check_branch
    %25 = sbr.rel (0) target = $region25
  $region24: #{pointnet_forward.2} parent=0 // pred_region
    _
  $region25: #{pointnet_forward.2} parent=0 // pred_fallthru
    _
  // Predicated region
  $region26: #{pointnet_forward.2} parent=0 // pred_check
    _
  $region27: #{pointnet_forward.2} parent=0 // pred_check_branch
    %27 = sbr.rel (0) target = $region29
  $region28: #{pointnet_forward.2} parent=0 // pred_region
    _
  $region29: #{pointnet_forward.2} parent=0 // pred_fallthru
    _
  %v28 = vld [vmem:[%s0] sm:$0xff]
  %v29 = vld [vmem:[%s0 + $0x8] sm:$0xff]
  %v30 = vld [vmem:[%s0 + $0x10] sm:$0xff]
  %v31 = vld [vmem:[%s0 + $0x18] sm:$0xff]
  %v32 = vld [vmem:[%s0 + $0x20] sm:$0xff]
  %v33 = vld [vmem:[%s0 + $0x28] sm:$0xff]
  %v34 = vld [vmem:[%s0 + $0x30] sm:$0xff]
  %v35 = vld [vmem:[%s0 + $0x38] sm:$0xff]
  %v36 = vld [vmem:[%s0 + $0x40] sm:$0xff]
  %v37 = vld [vmem:[%s0 + $0x48] sm:$0xff]
  %v38 = vld [vmem:[%s0 + $0x50] sm:$0xff]
  %v39 = vld [vmem:[%s0 + $0x58] sm:$0xff]
  %v40 = vld [vmem:[%s0 + $0x60] sm:$0xff]
  %v41 = vld [vmem:[%s0 + $0x68] sm:$0xff]
  %v42 = vld [vmem:[%s0 + $0x70] sm:$0xff]
  %v43 = vld [vmem:[%s0 + $0x78] sm:$0xff]
  %v44 = vld [vmem:[%s0 + $0x80] sm:$0xff]
  %v45 = vld [vmem:[%s0 + $0x88] sm:$0xff]
  %v46 = vld [vmem:[%s0 + $0x90] sm:$0xff]
  %v47 = vld [vmem:[%s0 + $0x98] sm:$0xff]
  %v48 = vld [vmem:[%s0 + $0xa0] sm:$0xff]
  %v49 = vld [vmem:[%s0 + $0xa8] sm:$0xff]
  %v50 = vld [vmem:[%s0 + $0xb0] sm:$0xff]
  %v51 = vld [vmem:[%s0 + $0xb8] sm:$0xff]
  %v52 = vld [vmem:[%s0 + $0xc0] sm:$0xff]
  %v53 = vld [vmem:[%s0 + $0xc8] sm:$0xff]
  %v54 = vld [vmem:[%s0 + $0xd0] sm:$0xff]
  %v55 = vld [vmem:[%s0 + $0xd8] sm:$0xff]
  %v56 = vld [vmem:[%s0 + $0xe0] sm:$0xff]
  %v57 = vld [vmem:[%s0 + $0xe8] sm:$0xff]
  %v58 = vld [vmem:[%s0 + $0xf0] sm:$0xff]
  %v59 = vld [vmem:[%s0 + $0xf8] sm:$0xff]
  %v60 = vld [vmem:[%s2] sm:$0x1]
  %v62 = vperm.slane %v60, 0
  %v64 = vld [vmem:[%s1] sm:$0x1]
  %66 = vset.pattern.permute.xlu0 0
  %67 = vperm.xlu0 %66, %v28
  %v68 = vpop.permute.xlu0 %67
  %71 = vset.pattern.permute.xlu0 0
  %72 = vperm.xlu0 %71, %v29
  %v73 = vpop.permute.xlu0 %72
  %76 = vset.pattern.permute.xlu0 0
  %77 = vperm.xlu0 %76, %v30
  %v78 = vpop.permute.xlu0 %77
  %81 = vset.pattern.permute.xlu0 0
  %82 = vperm.xlu0 %81, %v31
  %v83 = vpop.permute.xlu0 %82
  %86 = vset.pattern.permute.xlu0 0
  %87 = vperm.xlu0 %86, %v32
  %v88 = vpop.permute.xlu0 %87
  %91 = vset.pattern.permute.xlu0 0
  %92 = vperm.xlu0 %91, %v33
  %v93 = vpop.permute.xlu0 %92
  %96 = vset.pattern.permute.xlu0 0
  %97 = vperm.xlu0 %96, %v34
  %v98 = vpop.permute.xlu0 %97
  %101 = vset.pattern.permute.xlu0 0
  %102 = vperm.xlu0 %101, %v35
  %v103 = vpop.permute.xlu0 %102
  %106 = vset.pattern.permute.xlu0 0
  %107 = vperm.xlu0 %106, %v36
  %v108 = vpop.permute.xlu0 %107
  %111 = vset.pattern.permute.xlu0 0
  %112 = vperm.xlu0 %111, %v37
  %v113 = vpop.permute.xlu0 %112
  %116 = vset.pattern.permute.xlu0 0
  %117 = vperm.xlu0 %116, %v38
  %v118 = vpop.permute.xlu0 %117
  %121 = vset.pattern.permute.xlu0 0
  %122 = vperm.xlu0 %121, %v39
  %v123 = vpop.permute.xlu0 %122
  %126 = vset.pattern.permute.xlu0 0
  %127 = vperm.xlu0 %126, %v40
  %v128 = vpop.permute.xlu0 %127
  %131 = vset.pattern.permute.xlu0 0
  %132 = vperm.xlu0 %131, %v41
  %v133 = vpop.permute.xlu0 %132
  %136 = vset.pattern.permute.xlu0 0
  %137 = vperm.xlu0 %136, %v42
  %v138 = vpop.permute.xlu0 %137
  %141 = vset.pattern.permute.xlu0 0
  %142 = vperm.xlu0 %141, %v43
  %v143 = vpop.permute.xlu0 %142
  %146 = vset.pattern.permute.xlu0 0
  %147 = vperm.xlu0 %146, %v44
  %v148 = vpop.permute.xlu0 %147
  %151 = vset.pattern.permute.xlu0 0
  %152 = vperm.xlu0 %151, %v45
  %v153 = vpop.permute.xlu0 %152
  %156 = vset.pattern.permute.xlu0 0
  %157 = vperm.xlu0 %156, %v46
  %v158 = vpop.permute.xlu0 %157
  %161 = vset.pattern.permute.xlu0 0
  %162 = vperm.xlu0 %161, %v47
  %v163 = vpop.permute.xlu0 %162
  %166 = vset.pattern.permute.xlu0 0
  %167 = vperm.xlu0 %166, %v48
  %v168 = vpop.permute.xlu0 %167
  %171 = vset.pattern.permute.xlu0 0
  %172 = vperm.xlu0 %171, %v49
  %v173 = vpop.permute.xlu0 %172
  %176 = vset.pattern.permute.xlu0 0
  %177 = vperm.xlu0 %176, %v50
  %v178 = vpop.permute.xlu0 %177
  %181 = vset.pattern.permute.xlu0 0
  %182 = vperm.xlu0 %181, %v51
  %v183 = vpop.permute.xlu0 %182
  %186 = vset.pattern.permute.xlu0 0
  %187 = vperm.xlu0 %186, %v52
  %v188 = vpop.permute.xlu0 %187
  %191 = vset.pattern.permute.xlu0 0
  %192 = vperm.xlu0 %191, %v53
  %v193 = vpop.permute.xlu0 %192
  %196 = vset.pattern.permute.xlu0 0
  %197 = vperm.xlu0 %196, %v54
  %v198 = vpop.permute.xlu0 %197
  %201 = vset.pattern.permute.xlu0 0
  %202 = vperm.xlu0 %201, %v55
  %v203 = vpop.permute.xlu0 %202
  %206 = vset.pattern.permute.xlu0 0
  %207 = vperm.xlu0 %206, %v56
  %v208 = vpop.permute.xlu0 %207
  %211 = vset.pattern.permute.xlu0 0
  %212 = vperm.xlu0 %211, %v57
  %v213 = vpop.permute.xlu0 %212
  %216 = vset.pattern.permute.xlu0 0
  %217 = vperm.xlu0 %216, %v58
  %v218 = vpop.permute.xlu0 %217
  %221 = vset.pattern.permute.xlu0 0
  %222 = vperm.xlu0 %221, %v59
  %v223 = vpop.permute.xlu0 %222
  %v225 = vperm.slane %v64, 0
  %v226 = vmul.f32 %v68, %v225
  %v227 = vmul.f32 %v73, %v225
  %v228 = vmul.f32 %v78, %v225
  %v229 = vmul.f32 %v83, %v225
  %v230 = vmul.f32 %v88, %v225
  %v231 = vmul.f32 %v93, %v225
  %v232 = vmul.f32 %v98, %v225
  %v233 = vmul.f32 %v103, %v225
  %v234 = vmul.f32 %v108, %v225
  %v235 = vmul.f32 %v113, %v225
  %v236 = vmul.f32 %v118, %v225
  %v237 = vmul.f32 %v123, %v225
  %v238 = vmul.f32 %v128, %v225
  %v239 = vmul.f32 %v133, %v225
  %v240 = vmul.f32 %v138, %v225
  %v241 = vmul.f32 %v143, %v225
  %v242 = vmul.f32 %v148, %v225
  %v243 = vmul.f32 %v153, %v225
  %v244 = vmul.f32 %v158, %v225
  %v245 = vmul.f32 %v163, %v225
  %v246 = vmul.f32 %v168, %v225
  %v247 = vmul.f32 %v173, %v225
  %v248 = vmul.f32 %v178, %v225
  %v249 = vmul.f32 %v183, %v225
  %v250 = vmul.f32 %v188, %v225
  %v251 = vmul.f32 %v193, %v225
  %v252 = vmul.f32 %v198, %v225
  %v253 = vmul.f32 %v203, %v225
  %v254 = vmul.f32 %v208, %v225
  %v255 = vmul.f32 %v213, %v225
  %v256 = vmul.f32 %v218, %v225
  %v257 = vmul.f32 %v223, %v225
  %v258 = vadd.f32 %v62, %v226
  %v259 = vadd.f32 %v62, %v227
  %v260 = vadd.f32 %v62, %v228
  %v261 = vadd.f32 %v62, %v229
  %v262 = vadd.f32 %v62, %v230
  %v263 = vadd.f32 %v62, %v231
  %v264 = vadd.f32 %v62, %v232
  %v265 = vadd.f32 %v62, %v233
  %v266 = vadd.f32 %v62, %v234
  %v267 = vadd.f32 %v62, %v235
  %v268 = vadd.f32 %v62, %v236
  %v269 = vadd.f32 %v62, %v237
  %v270 = vadd.f32 %v62, %v238
  %v271 = vadd.f32 %v62, %v239
  %v272 = vadd.f32 %v62, %v240
  %v273 = vadd.f32 %v62, %v241
  %v274 = vadd.f32 %v62, %v242
  %v275 = vadd.f32 %v62, %v243
  %v276 = vadd.f32 %v62, %v244
  %v277 = vadd.f32 %v62, %v245
  %v278 = vadd.f32 %v62, %v246
  %v279 = vadd.f32 %v62, %v247
  %v280 = vadd.f32 %v62, %v248
  %v281 = vadd.f32 %v62, %v249
  %v282 = vadd.f32 %v62, %v250
  %v283 = vadd.f32 %v62, %v251
  %v284 = vadd.f32 %v62, %v252
  %v285 = vadd.f32 %v62, %v253
  %v286 = vadd.f32 %v62, %v254
  %v287 = vadd.f32 %v62, %v255
  %v288 = vadd.f32 %v62, %v256
  %v289 = vadd.f32 %v62, %v257
  %v290 = vld [vmem:[%s1 + $0x1] sm:$0x1]
  %291 = vset.pattern.permute.xlu0 1
  %292 = vperm.xlu0 %291, %v28
  %v293 = vpop.permute.xlu0 %292
  %295 = vset.pattern.permute.xlu0 1
  %296 = vperm.xlu0 %295, %v29
  %v297 = vpop.permute.xlu0 %296
  %299 = vset.pattern.permute.xlu0 1
  %300 = vperm.xlu0 %299, %v30
  %v301 = vpop.permute.xlu0 %300
  %303 = vset.pattern.permute.xlu0 1
  %304 = vperm.xlu0 %303, %v31
  %v305 = vpop.permute.xlu0 %304
  %307 = vset.pattern.permute.xlu0 1
  %308 = vperm.xlu0 %307, %v32
  %v309 = vpop.permute.xlu0 %308
  %311 = vset.pattern.permute.xlu0 1
  %312 = vperm.xlu0 %311, %v33
  %v313 = vpop.permute.xlu0 %312
  %315 = vset.pattern.permute.xlu0 1
  %316 = vperm.xlu0 %315, %v34
  %v317 = vpop.permute.xlu0 %316
  %319 = vset.pattern.permute.xlu0 1
  %320 = vperm.xlu0 %319, %v35
  %v321 = vpop.permute.xlu0 %320
  %323 = vset.pattern.permute.xlu0 1
  %324 = vperm.xlu0 %323, %v36
  %v325 = vpop.permute.xlu0 %324
  %327 = vset.pattern.permute.xlu0 1
  %328 = vperm.xlu0 %327, %v37
  %v329 = vpop.permute.xlu0 %328
  %331 = vset.pattern.permute.xlu0 1
  %332 = vperm.xlu0 %331, %v38
  %v333 = vpop.permute.xlu0 %332
  %335 = vset.pattern.permute.xlu0 1
  %336 = vperm.xlu0 %335, %v39
  %v337 = vpop.permute.xlu0 %336
  %339 = vset.pattern.permute.xlu0 1
  %340 = vperm.xlu0 %339, %v40
  %v341 = vpop.permute.xlu0 %340
  %343 = vset.pattern.permute.xlu0 1
  %344 = vperm.xlu0 %343, %v41
  %v345 = vpop.permute.xlu0 %344
  %347 = vset.pattern.permute.xlu0 1
  %348 = vperm.xlu0 %347, %v42
  %v349 = vpop.permute.xlu0 %348
  %351 = vset.pattern.permute.xlu0 1
  %352 = vperm.xlu0 %351, %v43
  %v353 = vpop.permute.xlu0 %352
  %355 = vset.pattern.permute.xlu0 1
  %356 = vperm.xlu0 %355, %v44
  %v357 = vpop.permute.xlu0 %356
  %359 = vset.pattern.permute.xlu0 1
  %360 = vperm.xlu0 %359, %v45
  %v361 = vpop.permute.xlu0 %360
  %363 = vset.pattern.permute.xlu0 1
  %364 = vperm.xlu0 %363, %v46
  %v365 = vpop.permute.xlu0 %364
  %367 = vset.pattern.permute.xlu0 1
  %368 = vperm.xlu0 %367, %v47
  %v369 = vpop.permute.xlu0 %368
  %371 = vset.pattern.permute.xlu0 1
  %372 = vperm.xlu0 %371, %v48
  %v373 = vpop.permute.xlu0 %372
  %375 = vset.pattern.permute.xlu0 1
  %376 = vperm.xlu0 %375, %v49
  %v377 = vpop.permute.xlu0 %376
  %379 = vset.pattern.permute.xlu0 1
  %380 = vperm.xlu0 %379, %v50
  %v381 = vpop.permute.xlu0 %380
  %383 = vset.pattern.permute.xlu0 1
  %384 = vperm.xlu0 %383, %v51
  %v385 = vpop.permute.xlu0 %384
  %387 = vset.pattern.permute.xlu0 1
  %388 = vperm.xlu0 %387, %v52
  %v389 = vpop.permute.xlu0 %388
  %391 = vset.pattern.permute.xlu0 1
  %392 = vperm.xlu0 %391, %v53
  %v393 = vpop.permute.xlu0 %392
  %395 = vset.pattern.permute.xlu0 1
  %396 = vperm.xlu0 %395, %v54
  %v397 = vpop.permute.xlu0 %396
  %399 = vset.pattern.permute.xlu0 1
  %400 = vperm.xlu0 %399, %v55
  %v401 = vpop.permute.xlu0 %400
  %403 = vset.pattern.permute.xlu0 1
  %404 = vperm.xlu0 %403, %v56
  %v405 = vpop.permute.xlu0 %404
  %407 = vset.pattern.permute.xlu0 1
  %408 = vperm.xlu0 %407, %v57
  %v409 = vpop.permute.xlu0 %408
  %411 = vset.pattern.permute.xlu0 1
  %412 = vperm.xlu0 %411, %v58
  %v413 = vpop.permute.xlu0 %412
  %415 = vset.pattern.permute.xlu0 1
  %416 = vperm.xlu0 %415, %v59
  %v417 = vpop.permute.xlu0 %416
  %v419 = vperm.slane %v290, 0
  %v420 = vmul.f32 %v293, %v419
  %v421 = vmul.f32 %v297, %v419
  %v422 = vmul.f32 %v301, %v419
  %v423 = vmul.f32 %v305, %v419
  %v424 = vmul.f32 %v309, %v419
  %v425 = vmul.f32 %v313, %v419
  %v426 = vmul.f32 %v317, %v419
  %v427 = vmul.f32 %v321, %v419
  %v428 = vmul.f32 %v325, %v419
  %v429 = vmul.f32 %v329, %v419
  %v430 = vmul.f32 %v333, %v419
  %v431 = vmul.f32 %v337, %v419
  %v432 = vmul.f32 %v341, %v419
  %v433 = vmul.f32 %v345, %v419
  %v434 = vmul.f32 %v349, %v419
  %v435 = vmul.f32 %v353, %v419
  %v436 = vmul.f32 %v357, %v419
  %v437 = vmul.f32 %v361, %v419
  %v438 = vmul.f32 %v365, %v419
  %v439 = vmul.f32 %v369, %v419
  %v440 = vmul.f32 %v373, %v419
  %v441 = vmul.f32 %v377, %v419
  %v442 = vmul.f32 %v381, %v419
  %v443 = vmul.f32 %v385, %v419
  %v444 = vmul.f32 %v389, %v419
  %v445 = vmul.f32 %v393, %v419
  %v446 = vmul.f32 %v397, %v419
  %v447 = vmul.f32 %v401, %v419
  %v448 = vmul.f32 %v405, %v419
  %v449 = vmul.f32 %v409, %v419
  %v450 = vmul.f32 %v413, %v419
  %v451 = vmul.f32 %v417, %v419
  %v452 = vadd.f32 %v258, %v420
  %v453 = vadd.f32 %v259, %v421
  %v454 = vadd.f32 %v260, %v422
  %v455 = vadd.f32 %v261, %v423
  %v456 = vadd.f32 %v262, %v424
  %v457 = vadd.f32 %v263, %v425
  %v458 = vadd.f32 %v264, %v426
  %v459 = vadd.f32 %v265, %v427
  %v460 = vadd.f32 %v266, %v428
  %v461 = vadd.f32 %v267, %v429
  %v462 = vadd.f32 %v268, %v430
  %v463 = vadd.f32 %v269, %v431
  %v464 = vadd.f32 %v270, %v432
  %v465 = vadd.f32 %v271, %v433
  %v466 = vadd.f32 %v272, %v434
  %v467 = vadd.f32 %v273, %v435
  %v468 = vadd.f32 %v274, %v436
  %v469 = vadd.f32 %v275, %v437
  %v470 = vadd.f32 %v276, %v438
  %v471 = vadd.f32 %v277, %v439
  %v472 = vadd.f32 %v278, %v440
  %v473 = vadd.f32 %v279, %v441
  %v474 = vadd.f32 %v280, %v442
  %v475 = vadd.f32 %v281, %v443
  %v476 = vadd.f32 %v282, %v444
  %v477 = vadd.f32 %v283, %v445
  %v478 = vadd.f32 %v284, %v446
  %v479 = vadd.f32 %v285, %v447
  %v480 = vadd.f32 %v286, %v448
  %v481 = vadd.f32 %v287, %v449
  %v482 = vadd.f32 %v288, %v450
  %v483 = vadd.f32 %v289, %v451
  %v484 = vld [vmem:[%s1 + $0x2] sm:$0x1]
  %485 = vset.pattern.permute.xlu0 2
  %486 = vperm.xlu0 %485, %v28
  %v487 = vpop.permute.xlu0 %486
  %489 = vset.pattern.permute.xlu0 2
  %490 = vperm.xlu0 %489, %v29
  %v491 = vpop.permute.xlu0 %490
  %493 = vset.pattern.permute.xlu0 2
  %494 = vperm.xlu0 %493, %v30
  %v495 = vpop.permute.xlu0 %494
  %497 = vset.pattern.permute.xlu0 2
  %498 = vperm.xlu0 %497, %v31
  %v499 = vpop.permute.xlu0 %498
  %501 = vset.pattern.permute.xlu0 2
  %502 = vperm.xlu0 %501, %v32
  %v503 = vpop.permute.xlu0 %502
  %505 = vset.pattern.permute.xlu0 2
  %506 = vperm.xlu0 %505, %v33
  %v507 = vpop.permute.xlu0 %506
  %509 = vset.pattern.permute.xlu0 2
  %510 = vperm.xlu0 %509, %v34
  %v511 = vpop.permute.xlu0 %510
  %513 = vset.pattern.permute.xlu0 2
  %514 = vperm.xlu0 %513, %v35
  %v515 = vpop.permute.xlu0 %514
  %517 = vset.pattern.permute.xlu0 2
  %518 = vperm.xlu0 %517, %v36
  %v519 = vpop.permute.xlu0 %518
  %521 = vset.pattern.permute.xlu0 2
  %522 = vperm.xlu0 %521, %v37
  %v523 = vpop.permute.xlu0 %522
  %525 = vset.pattern.permute.xlu0 2
  %526 = vperm.xlu0 %525, %v38
  %v527 = vpop.permute.xlu0 %526
  %529 = vset.pattern.permute.xlu0 2
  %530 = vperm.xlu0 %529, %v39
  %v531 = vpop.permute.xlu0 %530
  %533 = vset.pattern.permute.xlu0 2
  %534 = vperm.xlu0 %533, %v40
  %v535 = vpop.permute.xlu0 %534
  %537 = vset.pattern.permute.xlu0 2
  %538 = vperm.xlu0 %537, %v41
  %v539 = vpop.permute.xlu0 %538
  %541 = vset.pattern.permute.xlu0 2
  %542 = vperm.xlu0 %541, %v42
  %v543 = vpop.permute.xlu0 %542
  %545 = vset.pattern.permute.xlu0 2
  %546 = vperm.xlu0 %545, %v43
  %v547 = vpop.permute.xlu0 %546
  %549 = vset.pattern.permute.xlu0 2
  %550 = vperm.xlu0 %549, %v44
  %v551 = vpop.permute.xlu0 %550
  %553 = vset.pattern.permute.xlu0 2
  %554 = vperm.xlu0 %553, %v45
  %v555 = vpop.permute.xlu0 %554
  %557 = vset.pattern.permute.xlu0 2
  %558 = vperm.xlu0 %557, %v46
  %v559 = vpop.permute.xlu0 %558
  %561 = vset.pattern.permute.xlu0 2
  %562 = vperm.xlu0 %561, %v47
  %v563 = vpop.permute.xlu0 %562
  %565 = vset.pattern.permute.xlu0 2
  %566 = vperm.xlu0 %565, %v48
  %v567 = vpop.permute.xlu0 %566
  %569 = vset.pattern.permute.xlu0 2
  %570 = vperm.xlu0 %569, %v49
  %v571 = vpop.permute.xlu0 %570
  %573 = vset.pattern.permute.xlu0 2
  %574 = vperm.xlu0 %573, %v50
  %v575 = vpop.permute.xlu0 %574
  %577 = vset.pattern.permute.xlu0 2
  %578 = vperm.xlu0 %577, %v51
  %v579 = vpop.permute.xlu0 %578
  %581 = vset.pattern.permute.xlu0 2
  %582 = vperm.xlu0 %581, %v52
  %v583 = vpop.permute.xlu0 %582
  %585 = vset.pattern.permute.xlu0 2
  %586 = vperm.xlu0 %585, %v53
  %v587 = vpop.permute.xlu0 %586
  %589 = vset.pattern.permute.xlu0 2
  %590 = vperm.xlu0 %589, %v54
  %v591 = vpop.permute.xlu0 %590
  %593 = vset.pattern.permute.xlu0 2
  %594 = vperm.xlu0 %593, %v55
  %v595 = vpop.permute.xlu0 %594
  %597 = vset.pattern.permute.xlu0 2
  %598 = vperm.xlu0 %597, %v56
  %v599 = vpop.permute.xlu0 %598
  %601 = vset.pattern.permute.xlu0 2
  %602 = vperm.xlu0 %601, %v57
  %v603 = vpop.permute.xlu0 %602
  %605 = vset.pattern.permute.xlu0 2
  %606 = vperm.xlu0 %605, %v58
  %v607 = vpop.permute.xlu0 %606
  %609 = vset.pattern.permute.xlu0 2
  %610 = vperm.xlu0 %609, %v59
  %v611 = vpop.permute.xlu0 %610
  %v613 = vperm.slane %v484, 0
  %v614 = vmul.f32 %v487, %v613
  %v615 = vmul.f32 %v491, %v613
  %v616 = vmul.f32 %v495, %v613
  %v617 = vmul.f32 %v499, %v613
  %v618 = vmul.f32 %v503, %v613
  %v619 = vmul.f32 %v507, %v613
  %v620 = vmul.f32 %v511, %v613
  %v621 = vmul.f32 %v515, %v613
  %v622 = vmul.f32 %v519, %v613
  %v623 = vmul.f32 %v523, %v613
  %v624 = vmul.f32 %v527, %v613
  %v625 = vmul.f32 %v531, %v613
  %v626 = vmul.f32 %v535, %v613
  %v627 = vmul.f32 %v539, %v613
  %v628 = vmul.f32 %v543, %v613
  %v629 = vmul.f32 %v547, %v613
  %v630 = vmul.f32 %v551, %v613
  %v631 = vmul.f32 %v555, %v613
  %v632 = vmul.f32 %v559, %v613
  %v633 = vmul.f32 %v563, %v613
  %v634 = vmul.f32 %v567, %v613
  %v635 = vmul.f32 %v571, %v613
  %v636 = vmul.f32 %v575, %v613
  %v637 = vmul.f32 %v579, %v613
  %v638 = vmul.f32 %v583, %v613
  %v639 = vmul.f32 %v587, %v613
  %v640 = vmul.f32 %v591, %v613
  %v641 = vmul.f32 %v595, %v613
  %v642 = vmul.f32 %v599, %v613
  %v643 = vmul.f32 %v603, %v613
  %v644 = vmul.f32 %v607, %v613
  %v645 = vmul.f32 %v611, %v613
  %v646 = vadd.f32 %v452, %v614
  %v647 = vadd.f32 %v453, %v615
  %v648 = vadd.f32 %v454, %v616
  %v649 = vadd.f32 %v455, %v617
  %v650 = vadd.f32 %v456, %v618
  %v651 = vadd.f32 %v457, %v619
  %v652 = vadd.f32 %v458, %v620
  %v653 = vadd.f32 %v459, %v621
  %v654 = vadd.f32 %v460, %v622
  %v655 = vadd.f32 %v461, %v623
  %v656 = vadd.f32 %v462, %v624
  %v657 = vadd.f32 %v463, %v625
  %v658 = vadd.f32 %v464, %v626
  %v659 = vadd.f32 %v465, %v627
  %v660 = vadd.f32 %v466, %v628
  %v661 = vadd.f32 %v467, %v629
  %v662 = vadd.f32 %v468, %v630
  %v663 = vadd.f32 %v469, %v631
  %v664 = vadd.f32 %v470, %v632
  %v665 = vadd.f32 %v471, %v633
  %v666 = vadd.f32 %v472, %v634
  %v667 = vadd.f32 %v473, %v635
  %v668 = vadd.f32 %v474, %v636
  %v669 = vadd.f32 %v475, %v637
  %v670 = vadd.f32 %v476, %v638
  %v671 = vadd.f32 %v477, %v639
  %v672 = vadd.f32 %v478, %v640
  %v673 = vadd.f32 %v479, %v641
  %v674 = vadd.f32 %v480, %v642
  %v675 = vadd.f32 %v481, %v643
  %v676 = vadd.f32 %v482, %v644
  %v677 = vadd.f32 %v483, %v645
  %v678 = vmax.f32 %v646, 0.0
  %v679 = vmax.f32 %v647, 0.0
  %v680 = vmax.f32 %v648, 0.0
  %v681 = vmax.f32 %v649, 0.0
  %v682 = vmax.f32 %v650, 0.0
  %v683 = vmax.f32 %v651, 0.0
  %v684 = vmax.f32 %v652, 0.0
  %v685 = vmax.f32 %v653, 0.0
  %v686 = vmax.f32 %v654, 0.0
  %v687 = vmax.f32 %v655, 0.0
  %v688 = vmax.f32 %v656, 0.0
  %v689 = vmax.f32 %v657, 0.0
  %v690 = vmax.f32 %v658, 0.0
  %v691 = vmax.f32 %v659, 0.0
  %v692 = vmax.f32 %v660, 0.0
  %v693 = vmax.f32 %v661, 0.0
  %v694 = vmax.f32 %v662, 0.0
  %v695 = vmax.f32 %v663, 0.0
  %v696 = vmax.f32 %v664, 0.0
  %v697 = vmax.f32 %v665, 0.0
  %v698 = vmax.f32 %v666, 0.0
  %v699 = vmax.f32 %v667, 0.0
  %v700 = vmax.f32 %v668, 0.0
  %v701 = vmax.f32 %v669, 0.0
  %v702 = vmax.f32 %v670, 0.0
  %v703 = vmax.f32 %v671, 0.0
  %v704 = vmax.f32 %v672, 0.0
  %v705 = vmax.f32 %v673, 0.0
  %v706 = vmax.f32 %v674, 0.0
  %v707 = vmax.f32 %v675, 0.0
  %v708 = vmax.f32 %v676, 0.0
  %v709 = vmax.f32 %v677, 0.0
  %v710 = vld [vmem:[%s3] sm:$0xff]
  %v711 = vld [vmem:[%s3 + $0x8] sm:$0xff]
  %v712 = vld [vmem:[%s3 + $0x10] sm:$0xff]
  %v713 = vld [vmem:[%s3 + $0x18] sm:$0xff]
  %v714 = vld [vmem:[%s3 + $0x20] sm:$0xff]
  %v715 = vld [vmem:[%s3 + $0x28] sm:$0xff]
  %v716 = vld [vmem:[%s3 + $0x30] sm:$0xff]
  %v717 = vld [vmem:[%s3 + $0x38] sm:$0xff]
  %v718 = vld [vmem:[%s4] sm:$0x1]
  %v720 = vperm.slane %v718, 0
  %vm722 = vcmask 523264
  %v724 = vsel %vm722, %v678, 0
  %v727 = vsel %vm722, %v679, 0
  %v730 = vsel %vm722, %v680, 0
  %v733 = vsel %vm722, %v681, 0
  %v736 = vsel %vm722, %v682, 0
  %v739 = vsel %vm722, %v683, 0
  %v742 = vsel %vm722, %v684, 0
  %v745 = vsel %vm722, %v685, 0
  %v748 = vsel %vm722, %v686, 0
  %v751 = vsel %vm722, %v687, 0
  %v754 = vsel %vm722, %v688, 0
  %v757 = vsel %vm722, %v689, 0
  %v760 = vsel %vm722, %v690, 0
  %v763 = vsel %vm722, %v691, 0
  %v766 = vsel %vm722, %v692, 0
  %v769 = vsel %vm722, %v693, 0
  %v772 = vsel %vm722, %v694, 0
  %v775 = vsel %vm722, %v695, 0
  %v778 = vsel %vm722, %v696, 0
  %v781 = vsel %vm722, %v697, 0
  %v784 = vsel %vm722, %v698, 0
  %v787 = vsel %vm722, %v699, 0
  %v790 = vsel %vm722, %v700, 0
  %v793 = vsel %vm722, %v701, 0
  %v796 = vsel %vm722, %v702, 0
  %v799 = vsel %vm722, %v703, 0
  %v802 = vsel %vm722, %v704, 0
  %v805 = vsel %vm722, %v705, 0
  %v808 = vsel %vm722, %v706, 0
  %v811 = vsel %vm722, %v707, 0
  %v814 = vsel %vm722, %v708, 0
  %v817 = vsel %vm722, %v709, 0
  %819 = vmatpush.msra.mxu0 0.0
  %820 = vmatpush.msra.mxu0 0.0
  %821 = vmatpush.msra.mxu0 0.0
  %822 = vmatpush.msra.mxu0 0.0
  %823 = vmatpush.msra.mxu0 0.0
  %824 = vmatpush.msra.mxu0 0.0
  %825 = vmatpush.msra.mxu0 0.0
  %826 = vmatpush.msra.mxu0 0.0
  %827 = vmatpush.msra.mxu0 %v717
  %828 = vmatpush.msra.mxu0 %v716
  %829 = vmatpush.msra.mxu0 %v715
  %830 = vmatpush.msra.mxu0 %v714
  %831 = vmatpush.msra.mxu0 %v713
  %832 = vmatpush.msra.mxu0 %v712
  %833 = vmatpush.msra.mxu0 %v711
  %834 = vmatpush.msra.mxu0 %v710
  %835 = vmatmul.f32.gmra.mxu0 %v724
  %v836 = vpop.f32.mrf.mxu0
  %v837 = vadd.f32 %v720, %v836
  %838 = vmatmul.f32.gmra.mxu0 %v727
  %v839 = vpop.f32.mrf.mxu0
  %v840 = vadd.f32 %v720, %v839
  %841 = vmatmul.f32.gmra.mxu0 %v730
  %v842 = vpop.f32.mrf.mxu0
  %v843 = vadd.f32 %v720, %v842
  %844 = vmatmul.f32.gmra.mxu0 %v733
  %v845 = vpop.f32.mrf.mxu0
  %v846 = vadd.f32 %v720, %v845
  %847 = vmatmul.f32.gmra.mxu0 %v736
  %v848 = vpop.f32.mrf.mxu0
  %v849 = vadd.f32 %v720, %v848
  %850 = vmatmul.f32.gmra.mxu0 %v739
  %v851 = vpop.f32.mrf.mxu0
  %v852 = vadd.f32 %v720, %v851
  %853 = vmatmul.f32.gmra.mxu0 %v742
  %v854 = vpop.f32.mrf.mxu0
  %v855 = vadd.f32 %v720, %v854
  %856 = vmatmul.f32.gmra.mxu0 %v745
  %v857 = vpop.f32.mrf.mxu0
  %v858 = vadd.f32 %v720, %v857
  %859 = vmatmul.f32.gmra.mxu0 %v748
  %v860 = vpop.f32.mrf.mxu0
  %v861 = vadd.f32 %v720, %v860
  %862 = vmatmul.f32.gmra.mxu0 %v751
  %v863 = vpop.f32.mrf.mxu0
  %v864 = vadd.f32 %v720, %v863
  %865 = vmatmul.f32.gmra.mxu0 %v754
  %v866 = vpop.f32.mrf.mxu0
  %v867 = vadd.f32 %v720, %v866
  %868 = vmatmul.f32.gmra.mxu0 %v757
  %v869 = vpop.f32.mrf.mxu0
  %v870 = vadd.f32 %v720, %v869
  %871 = vmatmul.f32.gmra.mxu0 %v760
  %v872 = vpop.f32.mrf.mxu0
  %v873 = vadd.f32 %v720, %v872
  %874 = vmatmul.f32.gmra.mxu0 %v763
  %v875 = vpop.f32.mrf.mxu0
  %v876 = vadd.f32 %v720, %v875
  %877 = vmatmul.f32.gmra.mxu0 %v766
  %v878 = vpop.f32.mrf.mxu0
  %v879 = vadd.f32 %v720, %v878
  %880 = vmatmul.f32.gmra.mxu0 %v769
  %v881 = vpop.f32.mrf.mxu0
  %v882 = vadd.f32 %v720, %v881
  %883 = vmatmul.f32.gmra.mxu0 %v772
  %v884 = vpop.f32.mrf.mxu0
  %v885 = vadd.f32 %v720, %v884
  %886 = vmatmul.f32.gmra.mxu0 %v775
  %v887 = vpop.f32.mrf.mxu0
  %v888 = vadd.f32 %v720, %v887
  %889 = vmatmul.f32.gmra.mxu0 %v778
  %v890 = vpop.f32.mrf.mxu0
  %v891 = vadd.f32 %v720, %v890
  %892 = vmatmul.f32.gmra.mxu0 %v781
  %v893 = vpop.f32.mrf.mxu0
  %v894 = vadd.f32 %v720, %v893
  %895 = vmatmul.f32.gmra.mxu0 %v784
  %v896 = vpop.f32.mrf.mxu0
  %v897 = vadd.f32 %v720, %v896
  %898 = vmatmul.f32.gmra.mxu0 %v787
  %v899 = vpop.f32.mrf.mxu0
  %v900 = vadd.f32 %v720, %v899
  %901 = vmatmul.f32.gmra.mxu0 %v790
  %v902 = vpop.f32.mrf.mxu0
  %v903 = vadd.f32 %v720, %v902
  %904 = vmatmul.f32.gmra.mxu0 %v793
  %v905 = vpop.f32.mrf.mxu0
  %v906 = vadd.f32 %v720, %v905
  %907 = vmatmul.f32.gmra.mxu0 %v796
  %v908 = vpop.f32.mrf.mxu0
  %v909 = vadd.f32 %v720, %v908
  %910 = vmatmul.f32.gmra.mxu0 %v799
  %v911 = vpop.f32.mrf.mxu0
  %v912 = vadd.f32 %v720, %v911
  %913 = vmatmul.f32.gmra.mxu0 %v802
  %v914 = vpop.f32.mrf.mxu0
  %v915 = vadd.f32 %v720, %v914
  %916 = vmatmul.f32.gmra.mxu0 %v805
  %v917 = vpop.f32.mrf.mxu0
  %v918 = vadd.f32 %v720, %v917
  %919 = vmatmul.f32.gmra.mxu0 %v808
  %v920 = vpop.f32.mrf.mxu0
  %v921 = vadd.f32 %v720, %v920
  %922 = vmatmul.f32.gmra.mxu0 %v811
  %v923 = vpop.f32.mrf.mxu0
  %v924 = vadd.f32 %v720, %v923
  %925 = vmatmul.f32.gmra.mxu0 %v814
  %v926 = vpop.f32.mrf.mxu0
  %v927 = vadd.f32 %v720, %v926
  %928 = vmatmul.f32.gmra.mxu0 %v817
  %v929 = vpop.f32.mrf.mxu0
  %v930 = vadd.f32 %v720, %v929
  %931 = vdwg.mxu0
  %v932 = vmax.f32 %v837, 0.0
  %v933 = vmax.f32 %v840, 0.0
  %v934 = vmax.f32 %v843, 0.0
  %v935 = vmax.f32 %v846, 0.0
  %v936 = vmax.f32 %v849, 0.0
  %v937 = vmax.f32 %v852, 0.0
  %v938 = vmax.f32 %v855, 0.0
  %v939 = vmax.f32 %v858, 0.0
  %v940 = vmax.f32 %v861, 0.0
  %v941 = vmax.f32 %v864, 0.0
  %v942 = vmax.f32 %v867, 0.0
  %v943 = vmax.f32 %v870, 0.0
  %v944 = vmax.f32 %v873, 0.0
  %v945 = vmax.f32 %v876, 0.0
  %v946 = vmax.f32 %v879, 0.0
  %v947 = vmax.f32 %v882, 0.0
  %v948 = vmax.f32 %v885, 0.0
  %v949 = vmax.f32 %v888, 0.0
  %v950 = vmax.f32 %v891, 0.0
  %v951 = vmax.f32 %v894, 0.0
  %v952 = vmax.f32 %v897, 0.0
  %v953 = vmax.f32 %v900, 0.0
  %v954 = vmax.f32 %v903, 0.0
  %v955 = vmax.f32 %v906, 0.0
  %v956 = vmax.f32 %v909, 0.0
  %v957 = vmax.f32 %v912, 0.0
  %v958 = vmax.f32 %v915, 0.0
  %v959 = vmax.f32 %v918, 0.0
  %v960 = vmax.f32 %v921, 0.0
  %v961 = vmax.f32 %v924, 0.0
  %v962 = vmax.f32 %v927, 0.0
  %v963 = vmax.f32 %v930, 0.0
  %v964 = vld [vmem:[%s5] sm:$0xff]
  %v965 = vld [vmem:[%s5 + $0x8] sm:$0xff]
  %v966 = vld [vmem:[%s5 + $0x10] sm:$0xff]
  %v967 = vld [vmem:[%s5 + $0x18] sm:$0xff]
  %v968 = vld [vmem:[%s5 + $0x20] sm:$0xff]
  %v969 = vld [vmem:[%s5 + $0x28] sm:$0xff]
  %v970 = vld [vmem:[%s5 + $0x30] sm:$0xff]
  %v971 = vld [vmem:[%s5 + $0x38] sm:$0xff]
  %v972 = vld [vmem:[%s5 + $0x40] sm:$0xff]
  %v973 = vld [vmem:[%s5 + $0x48] sm:$0xff]
  %v974 = vld [vmem:[%s5 + $0x50] sm:$0xff]
  %v975 = vld [vmem:[%s5 + $0x58] sm:$0xff]
  %v976 = vld [vmem:[%s5 + $0x60] sm:$0xff]
  %v977 = vld [vmem:[%s5 + $0x68] sm:$0xff]
  %v978 = vld [vmem:[%s5 + $0x70] sm:$0xff]
  %v979 = vld [vmem:[%s5 + $0x78] sm:$0xff]
  %v980 = vld [vmem:[%s5 + $0x80] sm:$0xff]
  %v981 = vld [vmem:[%s5 + $0x88] sm:$0xff]
  %v982 = vld [vmem:[%s5 + $0x90] sm:$0xff]
  %v983 = vld [vmem:[%s5 + $0x98] sm:$0xff]
  %v984 = vld [vmem:[%s5 + $0xa0] sm:$0xff]
  %v985 = vld [vmem:[%s5 + $0xa8] sm:$0xff]
  %v986 = vld [vmem:[%s5 + $0xb0] sm:$0xff]
  %v987 = vld [vmem:[%s5 + $0xb8] sm:$0xff]
  %v988 = vld [vmem:[%s5 + $0xc0] sm:$0xff]
  %v989 = vld [vmem:[%s5 + $0xc8] sm:$0xff]
  %v990 = vld [vmem:[%s5 + $0xd0] sm:$0xff]
  %v991 = vld [vmem:[%s5 + $0xd8] sm:$0xff]
  %v992 = vld [vmem:[%s5 + $0xe0] sm:$0xff]
  %v993 = vld [vmem:[%s5 + $0xe8] sm:$0xff]
  %v994 = vld [vmem:[%s5 + $0xf0] sm:$0xff]
  %v995 = vld [vmem:[%s5 + $0xf8] sm:$0xff]
  %v996 = vld [vmem:[%s6] sm:$0x3]
  %v998 = vperm.slane %v996, 0
  %v999 = vperm.slane %v996, 1
  %1002 = vmatpush.msra.mxu0 %v994
  %1003 = vmatpush.msra.mxu0 %v992
  %1004 = vmatpush.msra.mxu0 %v990
  %1005 = vmatpush.msra.mxu0 %v988
  %1006 = vmatpush.msra.mxu0 %v986
  %1007 = vmatpush.msra.mxu0 %v984
  %1008 = vmatpush.msra.mxu0 %v982
  %1009 = vmatpush.msra.mxu0 %v980
  %1010 = vmatpush.msra.mxu0 %v978
  %1011 = vmatpush.msra.mxu0 %v976
  %1012 = vmatpush.msra.mxu0 %v974
  %1013 = vmatpush.msra.mxu0 %v972
  %1014 = vmatpush.msra.mxu0 %v970
  %1015 = vmatpush.msra.mxu0 %v968
  %1016 = vmatpush.msra.mxu0 %v966
  %1017 = vmatpush.msra.mxu0 %v964
  %1018 = vmatmul.f32.gmra.mxu0 %v932
  %v1019 = vpop.f32.mrf.mxu0
  %v1020 = vadd.f32 %v998, %v1019
  %1021 = vmatmul.f32.gmra.mxu0 %v933
  %v1022 = vpop.f32.mrf.mxu0
  %v1023 = vadd.f32 %v998, %v1022
  %1024 = vmatmul.f32.gmra.mxu0 %v934
  %v1025 = vpop.f32.mrf.mxu0
  %v1026 = vadd.f32 %v998, %v1025
  %1027 = vmatmul.f32.gmra.mxu0 %v935
  %v1028 = vpop.f32.mrf.mxu0
  %v1029 = vadd.f32 %v998, %v1028
  %1030 = vmatmul.f32.gmra.mxu0 %v936
  %v1031 = vpop.f32.mrf.mxu0
  %v1032 = vadd.f32 %v998, %v1031
  %1033 = vmatmul.f32.gmra.mxu0 %v937
  %v1034 = vpop.f32.mrf.mxu0
  %v1035 = vadd.f32 %v998, %v1034
  %1036 = vmatmul.f32.gmra.mxu0 %v938
  %v1037 = vpop.f32.mrf.mxu0
  %v1038 = vadd.f32 %v998, %v1037
  %1039 = vmatmul.f32.gmra.mxu0 %v939
  %v1040 = vpop.f32.mrf.mxu0
  %v1041 = vadd.f32 %v998, %v1040
  %1042 = vmatmul.f32.gmra.mxu0 %v940
  %v1043 = vpop.f32.mrf.mxu0
  %v1044 = vadd.f32 %v998, %v1043
  %1045 = vmatmul.f32.gmra.mxu0 %v941
  %v1046 = vpop.f32.mrf.mxu0
  %v1047 = vadd.f32 %v998, %v1046
  %1048 = vmatmul.f32.gmra.mxu0 %v942
  %v1049 = vpop.f32.mrf.mxu0
  %v1050 = vadd.f32 %v998, %v1049
  %1051 = vmatmul.f32.gmra.mxu0 %v943
  %v1052 = vpop.f32.mrf.mxu0
  %v1053 = vadd.f32 %v998, %v1052
  %1054 = vmatmul.f32.gmra.mxu0 %v944
  %v1055 = vpop.f32.mrf.mxu0
  %v1056 = vadd.f32 %v998, %v1055
  %1057 = vmatmul.f32.gmra.mxu0 %v945
  %v1058 = vpop.f32.mrf.mxu0
  %v1059 = vadd.f32 %v998, %v1058
  %1060 = vmatmul.f32.gmra.mxu0 %v946
  %v1061 = vpop.f32.mrf.mxu0
  %v1062 = vadd.f32 %v998, %v1061
  %1063 = vmatmul.f32.gmra.mxu0 %v947
  %v1064 = vpop.f32.mrf.mxu0
  %v1065 = vadd.f32 %v998, %v1064
  %1066 = vmatmul.f32.gmra.mxu0 %v948
  %v1067 = vpop.f32.mrf.mxu0
  %v1068 = vadd.f32 %v998, %v1067
  %1069 = vmatmul.f32.gmra.mxu0 %v949
  %v1070 = vpop.f32.mrf.mxu0
  %v1071 = vadd.f32 %v998, %v1070
  %1072 = vmatmul.f32.gmra.mxu0 %v950
  %v1073 = vpop.f32.mrf.mxu0
  %v1074 = vadd.f32 %v998, %v1073
  %1075 = vmatmul.f32.gmra.mxu0 %v951
  %v1076 = vpop.f32.mrf.mxu0
  %v1077 = vadd.f32 %v998, %v1076
  %1078 = vmatmul.f32.gmra.mxu0 %v952
  %v1079 = vpop.f32.mrf.mxu0
  %v1080 = vadd.f32 %v998, %v1079
  %1081 = vmatmul.f32.gmra.mxu0 %v953
  %v1082 = vpop.f32.mrf.mxu0
  %v1083 = vadd.f32 %v998, %v1082
  %1084 = vmatmul.f32.gmra.mxu0 %v954
  %v1085 = vpop.f32.mrf.mxu0
  %v1086 = vadd.f32 %v998, %v1085
  %1087 = vmatmul.f32.gmra.mxu0 %v955
  %v1088 = vpop.f32.mrf.mxu0
  %v1089 = vadd.f32 %v998, %v1088
  %1090 = vmatmul.f32.gmra.mxu0 %v956
  %v1091 = vpop.f32.mrf.mxu0
  %v1092 = vadd.f32 %v998, %v1091
  %1093 = vmatmul.f32.gmra.mxu0 %v957
  %v1094 = vpop.f32.mrf.mxu0
  %v1095 = vadd.f32 %v998, %v1094
  %1096 = vmatmul.f32.gmra.mxu0 %v958
  %v1097 = vpop.f32.mrf.mxu0
  %v1098 = vadd.f32 %v998, %v1097
  %1099 = vmatmul.f32.gmra.mxu0 %v959
  %v1100 = vpop.f32.mrf.mxu0
  %v1101 = vadd.f32 %v998, %v1100
  %1102 = vmatmul.f32.gmra.mxu0 %v960
  %v1103 = vpop.f32.mrf.mxu0
  %v1104 = vadd.f32 %v998, %v1103
  %1105 = vmatmul.f32.gmra.mxu0 %v961
  %v1106 = vpop.f32.mrf.mxu0
  %v1107 = vadd.f32 %v998, %v1106
  %1108 = vmatmul.f32.gmra.mxu0 %v962
  %v1109 = vpop.f32.mrf.mxu0
  %v1110 = vadd.f32 %v998, %v1109
  %1111 = vmatmul.f32.gmra.mxu0 %v963
  %v1112 = vpop.f32.mrf.mxu0
  %v1113 = vadd.f32 %v998, %v1112
  %1114 = vdwg.mxu0
  %1115 = vmatpush.msra.mxu0 %v995
  %1116 = vmatpush.msra.mxu0 %v993
  %1117 = vmatpush.msra.mxu0 %v991
  %1118 = vmatpush.msra.mxu0 %v989
  %1119 = vmatpush.msra.mxu0 %v987
  %1120 = vmatpush.msra.mxu0 %v985
  %1121 = vmatpush.msra.mxu0 %v983
  %1122 = vmatpush.msra.mxu0 %v981
  %1123 = vmatpush.msra.mxu0 %v979
  %1124 = vmatpush.msra.mxu0 %v977
  %1125 = vmatpush.msra.mxu0 %v975
  %1126 = vmatpush.msra.mxu0 %v973
  %1127 = vmatpush.msra.mxu0 %v971
  %1128 = vmatpush.msra.mxu0 %v969
  %1129 = vmatpush.msra.mxu0 %v967
  %1130 = vmatpush.msra.mxu0 %v965
  %1131 = vmatmul.f32.gmra.mxu0 %v932
  %v1132 = vpop.f32.mrf.mxu0
  %v1133 = vadd.f32 %v999, %v1132
  %1134 = vmatmul.f32.gmra.mxu0 %v933
  %v1135 = vpop.f32.mrf.mxu0
  %v1136 = vadd.f32 %v999, %v1135
  %1137 = vmatmul.f32.gmra.mxu0 %v934
  %v1138 = vpop.f32.mrf.mxu0
  %v1139 = vadd.f32 %v999, %v1138
  %1140 = vmatmul.f32.gmra.mxu0 %v935
  %v1141 = vpop.f32.mrf.mxu0
  %v1142 = vadd.f32 %v999, %v1141
  %1143 = vmatmul.f32.gmra.mxu0 %v936
  %v1144 = vpop.f32.mrf.mxu0
  %v1145 = vadd.f32 %v999, %v1144
  %1146 = vmatmul.f32.gmra.mxu0 %v937
  %v1147 = vpop.f32.mrf.mxu0
  %v1148 = vadd.f32 %v999, %v1147
  %1149 = vmatmul.f32.gmra.mxu0 %v938
  %v1150 = vpop.f32.mrf.mxu0
  %v1151 = vadd.f32 %v999, %v1150
  %1152 = vmatmul.f32.gmra.mxu0 %v939
  %v1153 = vpop.f32.mrf.mxu0
  %v1154 = vadd.f32 %v999, %v1153
  %1155 = vmatmul.f32.gmra.mxu0 %v940
  %v1156 = vpop.f32.mrf.mxu0
  %v1157 = vadd.f32 %v999, %v1156
  %1158 = vmatmul.f32.gmra.mxu0 %v941
  %v1159 = vpop.f32.mrf.mxu0
  %v1160 = vadd.f32 %v999, %v1159
  %1161 = vmatmul.f32.gmra.mxu0 %v942
  %v1162 = vpop.f32.mrf.mxu0
  %v1163 = vadd.f32 %v999, %v1162
  %1164 = vmatmul.f32.gmra.mxu0 %v943
  %v1165 = vpop.f32.mrf.mxu0
  %v1166 = vadd.f32 %v999, %v1165
  %1167 = vmatmul.f32.gmra.mxu0 %v944
  %v1168 = vpop.f32.mrf.mxu0
  %v1169 = vadd.f32 %v999, %v1168
  %1170 = vmatmul.f32.gmra.mxu0 %v945
  %v1171 = vpop.f32.mrf.mxu0
  %v1172 = vadd.f32 %v999, %v1171
  %1173 = vmatmul.f32.gmra.mxu0 %v946
  %v1174 = vpop.f32.mrf.mxu0
  %v1175 = vadd.f32 %v999, %v1174
  %1176 = vmatmul.f32.gmra.mxu0 %v947
  %v1177 = vpop.f32.mrf.mxu0
  %v1178 = vadd.f32 %v999, %v1177
  %1179 = vmatmul.f32.gmra.mxu0 %v948
  %v1180 = vpop.f32.mrf.mxu0
  %v1181 = vadd.f32 %v999, %v1180
  %1182 = vmatmul.f32.gmra.mxu0 %v949
  %v1183 = vpop.f32.mrf.mxu0
  %v1184 = vadd.f32 %v999, %v1183
  %1185 = vmatmul.f32.gmra.mxu0 %v950
  %v1186 = vpop.f32.mrf.mxu0
  %v1187 = vadd.f32 %v999, %v1186
  %1188 = vmatmul.f32.gmra.mxu0 %v951
  %v1189 = vpop.f32.mrf.mxu0
  %v1190 = vadd.f32 %v999, %v1189
  %1191 = vmatmul.f32.gmra.mxu0 %v952
  %v1192 = vpop.f32.mrf.mxu0
  %v1193 = vadd.f32 %v999, %v1192
  %1194 = vmatmul.f32.gmra.mxu0 %v953
  %v1195 = vpop.f32.mrf.mxu0
  %v1196 = vadd.f32 %v999, %v1195
  %1197 = vmatmul.f32.gmra.mxu0 %v954
  %v1198 = vpop.f32.mrf.mxu0
  %v1199 = vadd.f32 %v999, %v1198
  %1200 = vmatmul.f32.gmra.mxu0 %v955
  %v1201 = vpop.f32.mrf.mxu0
  %v1202 = vadd.f32 %v999, %v1201
  %1203 = vmatmul.f32.gmra.mxu0 %v956
  %v1204 = vpop.f32.mrf.mxu0
  %v1205 = vadd.f32 %v999, %v1204
  %1206 = vmatmul.f32.gmra.mxu0 %v957
  %v1207 = vpop.f32.mrf.mxu0
  %v1208 = vadd.f32 %v999, %v1207
  %1209 = vmatmul.f32.gmra.mxu0 %v958
  %v1210 = vpop.f32.mrf.mxu0
  %v1211 = vadd.f32 %v999, %v1210
  %1212 = vmatmul.f32.gmra.mxu0 %v959
  %v1213 = vpop.f32.mrf.mxu0
  %v1214 = vadd.f32 %v999, %v1213
  %1215 = vmatmul.f32.gmra.mxu0 %v960
  %v1216 = vpop.f32.mrf.mxu0
  %v1217 = vadd.f32 %v999, %v1216
  %1218 = vmatmul.f32.gmra.mxu0 %v961
  %v1219 = vpop.f32.mrf.mxu0
  %v1220 = vadd.f32 %v999, %v1219
  %1221 = vmatmul.f32.gmra.mxu0 %v962
  %v1222 = vpop.f32.mrf.mxu0
  %v1223 = vadd.f32 %v999, %v1222
  %1224 = vmatmul.f32.gmra.mxu0 %v963
  %v1225 = vpop.f32.mrf.mxu0
  %v1226 = vadd.f32 %v999, %v1225
  %1227 = vdwg.mxu0
  %v1228 = vmax.f32 %v1020, 0.0
  %v1229 = vmax.f32 %v1133, 0.0
  %v1230 = vmax.f32 %v1023, 0.0
  %v1231 = vmax.f32 %v1136, 0.0
  %v1232 = vmax.f32 %v1026, 0.0
  %v1233 = vmax.f32 %v1139, 0.0
  %v1234 = vmax.f32 %v1029, 0.0
  %v1235 = vmax.f32 %v1142, 0.0
  %v1236 = vmax.f32 %v1032, 0.0
  %v1237 = vmax.f32 %v1145, 0.0
  %v1238 = vmax.f32 %v1035, 0.0
  %v1239 = vmax.f32 %v1148, 0.0
  %v1240 = vmax.f32 %v1038, 0.0
  %v1241 = vmax.f32 %v1151, 0.0
  %v1242 = vmax.f32 %v1041, 0.0
  %v1243 = vmax.f32 %v1154, 0.0
  %v1244 = vmax.f32 %v1044, 0.0
  %v1245 = vmax.f32 %v1157, 0.0
  %v1246 = vmax.f32 %v1047, 0.0
  %v1247 = vmax.f32 %v1160, 0.0
  %v1248 = vmax.f32 %v1050, 0.0
  %v1249 = vmax.f32 %v1163, 0.0
  %v1250 = vmax.f32 %v1053, 0.0
  %v1251 = vmax.f32 %v1166, 0.0
  %v1252 = vmax.f32 %v1056, 0.0
  %v1253 = vmax.f32 %v1169, 0.0
  %v1254 = vmax.f32 %v1059, 0.0
  %v1255 = vmax.f32 %v1172, 0.0
  %v1256 = vmax.f32 %v1062, 0.0
  %v1257 = vmax.f32 %v1175, 0.0
  %v1258 = vmax.f32 %v1065, 0.0
  %v1259 = vmax.f32 %v1178, 0.0
  %v1260 = vmax.f32 %v1068, 0.0
  %v1261 = vmax.f32 %v1181, 0.0
  %v1262 = vmax.f32 %v1071, 0.0
  %v1263 = vmax.f32 %v1184, 0.0
  %v1264 = vmax.f32 %v1074, 0.0
  %v1265 = vmax.f32 %v1187, 0.0
  %v1266 = vmax.f32 %v1077, 0.0
  %v1267 = vmax.f32 %v1190, 0.0
  %v1268 = vmax.f32 %v1080, 0.0
  %v1269 = vmax.f32 %v1193, 0.0
  %v1270 = vmax.f32 %v1083, 0.0
  %v1271 = vmax.f32 %v1196, 0.0
  %v1272 = vmax.f32 %v1086, 0.0
  %v1273 = vmax.f32 %v1199, 0.0
  %v1274 = vmax.f32 %v1089, 0.0
  %v1275 = vmax.f32 %v1202, 0.0
  %v1276 = vmax.f32 %v1092, 0.0
  %v1277 = vmax.f32 %v1205, 0.0
  %v1278 = vmax.f32 %v1095, 0.0
  %v1279 = vmax.f32 %v1208, 0.0
  %v1280 = vmax.f32 %v1098, 0.0
  %v1281 = vmax.f32 %v1211, 0.0
  %v1282 = vmax.f32 %v1101, 0.0
  %v1283 = vmax.f32 %v1214, 0.0
  %v1284 = vmax.f32 %v1104, 0.0
  %v1285 = vmax.f32 %v1217, 0.0
  %v1286 = vmax.f32 %v1107, 0.0
  %v1287 = vmax.f32 %v1220, 0.0
  %v1288 = vmax.f32 %v1110, 0.0
  %v1289 = vmax.f32 %v1223, 0.0
  %v1290 = vmax.f32 %v1113, 0.0
  %v1291 = vmax.f32 %v1226, 0.0
  %1292 = vst [vmem:[%s7] sm:$0xff] %v1228
  %1293 = vst [vmem:[%s7 + $0x8] sm:$0xff] %v1229
  %1294 = vst [vmem:[%s7 + $0x10] sm:$0xff] %v1230
  %1295 = vst [vmem:[%s7 + $0x18] sm:$0xff] %v1231
  %1296 = vst [vmem:[%s7 + $0x20] sm:$0xff] %v1232
  %1297 = vst [vmem:[%s7 + $0x28] sm:$0xff] %v1233
  %1298 = vst [vmem:[%s7 + $0x30] sm:$0xff] %v1234
  %1299 = vst [vmem:[%s7 + $0x38] sm:$0xff] %v1235
  %1300 = vst [vmem:[%s7 + $0x40] sm:$0xff] %v1236
  %1301 = vst [vmem:[%s7 + $0x48] sm:$0xff] %v1237
  %1302 = vst [vmem:[%s7 + $0x50] sm:$0xff] %v1238
  %1303 = vst [vmem:[%s7 + $0x58] sm:$0xff] %v1239
  %1304 = vst [vmem:[%s7 + $0x60] sm:$0xff] %v1240
  %1305 = vst [vmem:[%s7 + $0x68] sm:$0xff] %v1241
  %1306 = vst [vmem:[%s7 + $0x70] sm:$0xff] %v1242
  %1307 = vst [vmem:[%s7 + $0x78] sm:$0xff] %v1243
  %1308 = vst [vmem:[%s7 + $0x80] sm:$0xff] %v1244
  %1309 = vst [vmem:[%s7 + $0x88] sm:$0xff] %v1245
  %1310 = vst [vmem:[%s7 + $0x90] sm:$0xff] %v1246
  %1311 = vst [vmem:[%s7 + $0x98] sm:$0xff] %v1247
  %1312 = vst [vmem:[%s7 + $0xa0] sm:$0xff] %v1248
  %1313 = vst [vmem:[%s7 + $0xa8] sm:$0xff] %v1249
  %1314 = vst [vmem:[%s7 + $0xb0] sm:$0xff] %v1250
  %1315 = vst [vmem:[%s7 + $0xb8] sm:$0xff] %v1251
  %1316 = vst [vmem:[%s7 + $0xc0] sm:$0xff] %v1252
  %1317 = vst [vmem:[%s7 + $0xc8] sm:$0xff] %v1253
  %1318 = vst [vmem:[%s7 + $0xd0] sm:$0xff] %v1254
  %1319 = vst [vmem:[%s7 + $0xd8] sm:$0xff] %v1255
  %1320 = vst [vmem:[%s7 + $0xe0] sm:$0xff] %v1256
  %1321 = vst [vmem:[%s7 + $0xe8] sm:$0xff] %v1257
  %1322 = vst [vmem:[%s7 + $0xf0] sm:$0xff] %v1258
  %1323 = vst [vmem:[%s7 + $0xf8] sm:$0xff] %v1259
  %1324 = vst [vmem:[%s7 + $0x100] sm:$0xff] %v1260
  %1325 = vst [vmem:[%s7 + $0x108] sm:$0xff] %v1261
  %1326 = vst [vmem:[%s7 + $0x110] sm:$0xff] %v1262
  %1327 = vst [vmem:[%s7 + $0x118] sm:$0xff] %v1263
  %1328 = vst [vmem:[%s7 + $0x120] sm:$0xff] %v1264
  %1329 = vst [vmem:[%s7 + $0x128] sm:$0xff] %v1265
  %1330 = vst [vmem:[%s7 + $0x130] sm:$0xff] %v1266
  %1331 = vst [vmem:[%s7 + $0x138] sm:$0xff] %v1267
  %1332 = vst [vmem:[%s7 + $0x140] sm:$0xff] %v1268
  %1333 = vst [vmem:[%s7 + $0x148] sm:$0xff] %v1269
  %1334 = vst [vmem:[%s7 + $0x150] sm:$0xff] %v1270
  %1335 = vst [vmem:[%s7 + $0x158] sm:$0xff] %v1271
  %1336 = vst [vmem:[%s7 + $0x160] sm:$0xff] %v1272
  %1337 = vst [vmem:[%s7 + $0x168] sm:$0xff] %v1273
  %1338 = vst [vmem:[%s7 + $0x170] sm:$0xff] %v1274
  %1339 = vst [vmem:[%s7 + $0x178] sm:$0xff] %v1275
  %1340 = vst [vmem:[%s7 + $0x180] sm:$0xff] %v1276
  %1341 = vst [vmem:[%s7 + $0x188] sm:$0xff] %v1277
  %1342 = vst [vmem:[%s7 + $0x190] sm:$0xff] %v1278
  %1343 = vst [vmem:[%s7 + $0x198] sm:$0xff] %v1279
  %1344 = vst [vmem:[%s7 + $0x1a0] sm:$0xff] %v1280
  %1345 = vst [vmem:[%s7 + $0x1a8] sm:$0xff] %v1281
  %1346 = vst [vmem:[%s7 + $0x1b0] sm:$0xff] %v1282
  %1347 = vst [vmem:[%s7 + $0x1b8] sm:$0xff] %v1283
  %1348 = vst [vmem:[%s7 + $0x1c0] sm:$0xff] %v1284
  %1349 = vst [vmem:[%s7 + $0x1c8] sm:$0xff] %v1285
  %1350 = vst [vmem:[%s7 + $0x1d0] sm:$0xff] %v1286
  %1351 = vst [vmem:[%s7 + $0x1d8] sm:$0xff] %v1287
  %1352 = vst [vmem:[%s7 + $0x1e0] sm:$0xff] %v1288
  %1353 = vst [vmem:[%s7 + $0x1e8] sm:$0xff] %v1289
  %1354 = vst [vmem:[%s7 + $0x1f0] sm:$0xff] %v1290
  %1355 = vst [vmem:[%s7 + $0x1f8] sm:$0xff] %v1291
  %v1356 = vmax.f32 %v1228, %v1232
  %v1357 = vmax.f32 %v1230, %v1234
  %v1358 = vmax.f32 %v1356, %v1236
  %v1359 = vmax.f32 %v1357, %v1238
  %v1360 = vmax.f32 %v1358, %v1240
  %v1361 = vmax.f32 %v1359, %v1242
  %v1362 = vmax.f32 %v1360, %v1244
  %v1363 = vmax.f32 %v1361, %v1246
  %v1364 = vmax.f32 %v1362, %v1248
  %v1365 = vmax.f32 %v1363, %v1250
  %v1366 = vmax.f32 %v1364, %v1252
  %v1367 = vmax.f32 %v1365, %v1254
  %v1368 = vmax.f32 %v1366, %v1256
  %v1369 = vmax.f32 %v1367, %v1258
  %v1370 = vmax.f32 %v1368, %v1260
  %v1371 = vmax.f32 %v1369, %v1262
  %v1372 = vmax.f32 %v1370, %v1264
  %v1373 = vmax.f32 %v1371, %v1266
  %v1374 = vmax.f32 %v1372, %v1268
  %v1375 = vmax.f32 %v1373, %v1270
  %v1376 = vmax.f32 %v1374, %v1272
  %v1377 = vmax.f32 %v1375, %v1274
  %v1378 = vmax.f32 %v1376, %v1276
  %v1379 = vmax.f32 %v1377, %v1278
  %v1380 = vmax.f32 %v1378, %v1280
  %v1381 = vmax.f32 %v1379, %v1282
  %v1382 = vmax.f32 %v1380, %v1284
  %v1383 = vmax.f32 %v1381, %v1286
  %v1384 = vmax.f32 %v1382, %v1288
  %v1385 = vmax.f32 %v1383, %v1290
  %v1386 = vmax.f32 %v1384, %v1385
  %v1387 = vrot.slane %v1386, 4
  %v1388 = vmax.f32 %v1386, %v1387
  %v1389 = vrot.slane %v1388, 2
  %v1390 = vmax.f32 %v1388, %v1389
  %v1391 = vrot.slane %v1390, 1
  %v1392 = vmax.f32 %v1390, %v1391
  %v1393 = vmax.f32 %v1229, %v1233
  %v1394 = vmax.f32 %v1231, %v1235
  %v1395 = vmax.f32 %v1393, %v1237
  %v1396 = vmax.f32 %v1394, %v1239
  %v1397 = vmax.f32 %v1395, %v1241
  %v1398 = vmax.f32 %v1396, %v1243
  %v1399 = vmax.f32 %v1397, %v1245
  %v1400 = vmax.f32 %v1398, %v1247
  %v1401 = vmax.f32 %v1399, %v1249
  %v1402 = vmax.f32 %v1400, %v1251
  %v1403 = vmax.f32 %v1401, %v1253
  %v1404 = vmax.f32 %v1402, %v1255
  %v1405 = vmax.f32 %v1403, %v1257
  %v1406 = vmax.f32 %v1404, %v1259
  %v1407 = vmax.f32 %v1405, %v1261
  %v1408 = vmax.f32 %v1406, %v1263
  %v1409 = vmax.f32 %v1407, %v1265
  %v1410 = vmax.f32 %v1408, %v1267
  %v1411 = vmax.f32 %v1409, %v1269
  %v1412 = vmax.f32 %v1410, %v1271
  %v1413 = vmax.f32 %v1411, %v1273
  %v1414 = vmax.f32 %v1412, %v1275
  %v1415 = vmax.f32 %v1413, %v1277
  %v1416 = vmax.f32 %v1414, %v1279
  %v1417 = vmax.f32 %v1415, %v1281
  %v1418 = vmax.f32 %v1416, %v1283
  %v1419 = vmax.f32 %v1417, %v1285
  %v1420 = vmax.f32 %v1418, %v1287
  %v1421 = vmax.f32 %v1419, %v1289
  %v1422 = vmax.f32 %v1420, %v1291
  %v1423 = vmax.f32 %v1421, %v1422
  %v1424 = vrot.slane %v1423, 4
  %v1425 = vmax.f32 %v1423, %v1424
  %v1426 = vrot.slane %v1425, 2
  %v1427 = vmax.f32 %v1425, %v1426
  %v1428 = vrot.slane %v1427, 1
  %v1429 = vmax.f32 %v1427, %v1428
  %1430 = vst [vmem:[%s8] sm:$0xff] %v1392
  %1431 = vst [vmem:[%s8 + $0x8] sm:$0xff] %v1429
  // Predicated region
  $region30: #{pointnet_forward.2} parent=0 // pred_check
    _
  $region31: #{pointnet_forward.2} parent=0 // pred_check_branch
    %1433 = sbr.rel (0) target = $region33
  $region32: #{pointnet_forward.2} parent=0 // pred_region
    _
  $region33: #{pointnet_forward.2} parent=0 // pred_fallthru
    _
  // Predicated region
  $region34: #{pointnet_forward.2} parent=0 // pred_check
    _
  $region35: #{pointnet_forward.2} parent=0 // pred_check_branch
    %1435 = sbr.rel (0) target = $region37
  $region36: #{pointnet_forward.2} parent=0 // pred_region
    _
  $region37: #{pointnet_forward.2} parent=0 // pred_fallthru
    _
  // Predicated region
  $region38: #{pointnet_forward.2} parent=0 // pred_check
    _
  $region39: #{pointnet_forward.2} parent=0 // pred_check_branch
    %1437 = sbr.rel (0) target = $region41
  $region40: #{pointnet_forward.2} parent=0 // pred_region
    _
  $region41: #{pointnet_forward.2} parent=0 // pred_fallthru
    _
  // Predicated region
  $region42: #{pointnet_forward.2} parent=0 // pred_check
    _
  $region43: #{pointnet_forward.2} parent=0 // pred_check_branch
    %1439 = sbr.rel (0) target = $region45
  $region44: #{pointnet_forward.2} parent=0 // pred_region
    _
  $region45: #{pointnet_forward.2} parent=0 // pred_fallthru
    _

// kernel: pointnet_forward.3
$region0: #{pointnet_forward.3}
  #allocation0 [shape = 'u32[]', space=smem, size = 0x4, offset = 0x4, fixed_abs, tag = 'smem constant byte address 0x4 - core index']
  #allocation1 [shape = 'u32[72,128]{1,0:T(1,128)}', space=vmem, size = 0x9000, scoped, tag = 'internal scratch']
  %s0 = inlined_call_operand.vmem [shape: f32[256,256], index: 0, kind: input, shape index: {}]
  %s1 = inlined_call_operand.vmem [shape: f32[8,256], index: 1, kind: input, shape index: {}]
  %s2 = inlined_call_operand.vmem [shape: f32[256,512], index: 2, kind: input, shape index: {}]
  %s3 = inlined_call_operand.vmem [shape: f32[1,512], index: 3, kind: input, shape index: {}]
  %s4 = inlined_call_operand.vmem [shape: f32[256,256], index: 4, kind: input, shape index: {}]
  %s5 = inlined_call_operand.vmem [shape: f32[512,256], index: 5, kind: input, shape index: {}]
  %s6 = inlined_call_operand.vmem [shape: f32[1,256], index: 6, kind: input, shape index: {}]
  %s7 = inlined_call_operand.vmem [shape: f32[256,128], index: 7, kind: input, shape index: {}]
  %s8 = inlined_call_operand.vmem [shape: f32[1,128], index: 8, kind: input, shape index: {}]
  %s9 = inlined_call_operand.vmem [shape: f32[128,4], index: 9, kind: input, shape index: {}]
  %s10 = inlined_call_operand.vmem [shape: f32[1,4], index: 10, kind: input, shape index: {}]
  %s11 = inlined_call_operand.vmem [shape: f32[256,4], index: 11, kind: output, shape index: {}]
  %s12 = sld [smem:[#allocation0]]
  $region54: #{pointnet_forward.3} parent=0
    _
  %s14 = ssub.s32 1, %s12
  %s15 = scalar_select 0, %s14, %s12
  // Predicated region
  $region2: #{pointnet_forward.3} parent=0 // pred_check
    _
  $region3: #{pointnet_forward.3} parent=0 // pred_check_branch
    %17 = sbr.rel (0) target = $region5
  $region4: #{pointnet_forward.3} parent=0 // pred_region
    _
  $region5: #{pointnet_forward.3} parent=0 // pred_fallthru
    _
  // Predicated region
  $region6: #{pointnet_forward.3} parent=0 // pred_check
    _
  $region7: #{pointnet_forward.3} parent=0 // pred_check_branch
    %19 = sbr.rel (0) target = $region9
  $region8: #{pointnet_forward.3} parent=0 // pred_region
    _
  $region9: #{pointnet_forward.3} parent=0 // pred_fallthru
    _
  // Predicated region
  $region10: #{pointnet_forward.3} parent=0 // pred_check
    _
  $region11: #{pointnet_forward.3} parent=0 // pred_check_branch
    %21 = sbr.rel (0) target = $region13
  $region12: #{pointnet_forward.3} parent=0 // pred_region
    _
  $region13: #{pointnet_forward.3} parent=0 // pred_fallthru
    _
  // Predicated region
  $region14: #{pointnet_forward.3} parent=0 // pred_check
    _
  $region15: #{pointnet_forward.3} parent=0 // pred_check_branch
    %23 = sbr.rel (0) target = $region17
  $region16: #{pointnet_forward.3} parent=0 // pred_region
    _
  $region17: #{pointnet_forward.3} parent=0 // pred_fallthru
    _
  // Predicated region
  $region18: #{pointnet_forward.3} parent=0 // pred_check
    _
  $region19: #{pointnet_forward.3} parent=0 // pred_check_branch
    %25 = sbr.rel (0) target = $region21
  $region20: #{pointnet_forward.3} parent=0 // pred_region
    _
  $region21: #{pointnet_forward.3} parent=0 // pred_fallthru
    _
  // Predicated region
  $region22: #{pointnet_forward.3} parent=0 // pred_check
    _
  $region23: #{pointnet_forward.3} parent=0 // pred_check_branch
    %27 = sbr.rel (0) target = $region25
  $region24: #{pointnet_forward.3} parent=0 // pred_region
    _
  $region25: #{pointnet_forward.3} parent=0 // pred_fallthru
    _
  // Predicated region
  $region26: #{pointnet_forward.3} parent=0 // pred_check
    _
  $region27: #{pointnet_forward.3} parent=0 // pred_check_branch
    %29 = sbr.rel (0) target = $region29
  $region28: #{pointnet_forward.3} parent=0 // pred_region
    _
  $region29: #{pointnet_forward.3} parent=0 // pred_fallthru
    _
  // Predicated region
  $region30: #{pointnet_forward.3} parent=0 // pred_check
    _
  $region31: #{pointnet_forward.3} parent=0 // pred_check_branch
    %31 = sbr.rel (0) target = $region33
  $region32: #{pointnet_forward.3} parent=0 // pred_region
    _
  $region33: #{pointnet_forward.3} parent=0 // pred_fallthru
    _
  // Predicated region
  $region34: #{pointnet_forward.3} parent=0 // pred_check
    _
  $region35: #{pointnet_forward.3} parent=0 // pred_check_branch
    %33 = sbr.rel (0) target = $region37
  $region36: #{pointnet_forward.3} parent=0 // pred_region
    _
  $region37: #{pointnet_forward.3} parent=0 // pred_fallthru
    _
  // Predicated region
  $region38: #{pointnet_forward.3} parent=0 // pred_check
    _
  $region39: #{pointnet_forward.3} parent=0 // pred_check_branch
    %35 = sbr.rel (0) target = $region41
  $region40: #{pointnet_forward.3} parent=0 // pred_region
    _
  $region41: #{pointnet_forward.3} parent=0 // pred_fallthru
    _
  // Predicated region
  $region42: #{pointnet_forward.3} parent=0 // pred_check
    _
  $region43: #{pointnet_forward.3} parent=0 // pred_check_branch
    %37 = sbr.rel (0) target = $region45
  $region44: #{pointnet_forward.3} parent=0 // pred_region
    _
  $region45: #{pointnet_forward.3} parent=0 // pred_fallthru
    _
  %v38 = vld [vmem:[%s1] sm:$0xff]
  %v39 = vld [vmem:[%s1 + $0x8] sm:$0xff]
  %v40 = vld [vmem:[%s2] sm:$0xff]
  %v41 = vld [vmem:[%s2 + $0x8] sm:$0xff]
  %v42 = vld [vmem:[%s2 + $0x10] sm:$0xff]
  %v43 = vld [vmem:[%s2 + $0x18] sm:$0xff]
  %v44 = vld [vmem:[%s2 + $0x20] sm:$0xff]
  %v45 = vld [vmem:[%s2 + $0x28] sm:$0xff]
  %v46 = vld [vmem:[%s2 + $0x30] sm:$0xff]
  %v47 = vld [vmem:[%s2 + $0x38] sm:$0xff]
  %v48 = vld [vmem:[%s2 + $0x40] sm:$0xff]
  %v49 = vld [vmem:[%s2 + $0x48] sm:$0xff]
  %v50 = vld [vmem:[%s2 + $0x50] sm:$0xff]
  %v51 = vld [vmem:[%s2 + $0x58] sm:$0xff]
  %v52 = vld [vmem:[%s2 + $0x60] sm:$0xff]
  %v53 = vld [vmem:[%s2 + $0x68] sm:$0xff]
  %v54 = vld [vmem:[%s2 + $0x70] sm:$0xff]
  %v55 = vld [vmem:[%s2 + $0x78] sm:$0xff]
  %v56 = vld [vmem:[%s2 + $0x80] sm:$0xff]
  %v57 = vld [vmem:[%s2 + $0x88] sm:$0xff]
  %v58 = vld [vmem:[%s2 + $0x90] sm:$0xff]
  %v59 = vld [vmem:[%s2 + $0x98] sm:$0xff]
  %v60 = vld [vmem:[%s2 + $0xa0] sm:$0xff]
  %v61 = vld [vmem:[%s2 + $0xa8] sm:$0xff]
  %v62 = vld [vmem:[%s2 + $0xb0] sm:$0xff]
  %v63 = vld [vmem:[%s2 + $0xb8] sm:$0xff]
  %v64 = vld [vmem:[%s2 + $0xc0] sm:$0xff]
  %v65 = vld [vmem:[%s2 + $0xc8] sm:$0xff]
  %v66 = vld [vmem:[%s2 + $0xd0] sm:$0xff]
  %v67 = vld [vmem:[%s2 + $0xd8] sm:$0xff]
  %v68 = vld [vmem:[%s2 + $0xe0] sm:$0xff]
  %v69 = vld [vmem:[%s2 + $0xe8] sm:$0xff]
  %v70 = vld [vmem:[%s2 + $0xf0] sm:$0xff]
  %v71 = vld [vmem:[%s2 + $0xf8] sm:$0xff]
  %v72 = vld [vmem:[%s2 + $0x100] sm:$0xff]
  %v73 = vld [vmem:[%s2 + $0x108] sm:$0xff]
  %v74 = vld [vmem:[%s2 + $0x110] sm:$0xff]
  %v75 = vld [vmem:[%s2 + $0x118] sm:$0xff]
  %v76 = vld [vmem:[%s2 + $0x120] sm:$0xff]
  %v77 = vld [vmem:[%s2 + $0x128] sm:$0xff]
  %v78 = vld [vmem:[%s2 + $0x130] sm:$0xff]
  %v79 = vld [vmem:[%s2 + $0x138] sm:$0xff]
  %v80 = vld [vmem:[%s2 + $0x140] sm:$0xff]
  %v81 = vld [vmem:[%s2 + $0x148] sm:$0xff]
  %v82 = vld [vmem:[%s2 + $0x150] sm:$0xff]
  %v83 = vld [vmem:[%s2 + $0x158] sm:$0xff]
  %v84 = vld [vmem:[%s2 + $0x160] sm:$0xff]
  %v85 = vld [vmem:[%s2 + $0x168] sm:$0xff]
  %v86 = vld [vmem:[%s2 + $0x170] sm:$0xff]
  %v87 = vld [vmem:[%s2 + $0x178] sm:$0xff]
  %v88 = vld [vmem:[%s2 + $0x180] sm:$0xff]
  %v89 = vld [vmem:[%s2 + $0x188] sm:$0xff]
  %v90 = vld [vmem:[%s2 + $0x190] sm:$0xff]
  %v91 = vld [vmem:[%s2 + $0x198] sm:$0xff]
  %v92 = vld [vmem:[%s2 + $0x1a0] sm:$0xff]
  %v93 = vld [vmem:[%s2 + $0x1a8] sm:$0xff]
  %v94 = vld [vmem:[%s2 + $0x1b0] sm:$0xff]
  %v95 = vld [vmem:[%s2 + $0x1b8] sm:$0xff]
  %v96 = vld [vmem:[%s2 + $0x1c0] sm:$0xff]
  %v97 = vld [vmem:[%s2 + $0x1c8] sm:$0xff]
  %v98 = vld [vmem:[%s2 + $0x1d0] sm:$0xff]
  %v99 = vld [vmem:[%s2 + $0x1d8] sm:$0xff]
  %v100 = vld [vmem:[%s2 + $0x1e0] sm:$0xff]
  %v101 = vld [vmem:[%s2 + $0x1e8] sm:$0xff]
  %v102 = vld [vmem:[%s2 + $0x1f0] sm:$0xff]
  %v103 = vld [vmem:[%s2 + $0x1f8] sm:$0xff]
  %v104 = vld [vmem:[%s2 + $0x200] sm:$0xff]
  %v105 = vld [vmem:[%s2 + $0x208] sm:$0xff]
  %v106 = vld [vmem:[%s2 + $0x210] sm:$0xff]
  %v107 = vld [vmem:[%s2 + $0x218] sm:$0xff]
  %v108 = vld [vmem:[%s2 + $0x220] sm:$0xff]
  %v109 = vld [vmem:[%s2 + $0x228] sm:$0xff]
  %v110 = vld [vmem:[%s2 + $0x230] sm:$0xff]
  %v111 = vld [vmem:[%s2 + $0x238] sm:$0xff]
  %v112 = vld [vmem:[%s2 + $0x240] sm:$0xff]
  %v113 = vld [vmem:[%s2 + $0x248] sm:$0xff]
  %v114 = vld [vmem:[%s2 + $0x250] sm:$0xff]
  %v115 = vld [vmem:[%s2 + $0x258] sm:$0xff]
  %v116 = vld [vmem:[%s2 + $0x260] sm:$0xff]
  %v117 = vld [vmem:[%s2 + $0x268] sm:$0xff]
  %v118 = vld [vmem:[%s2 + $0x270] sm:$0xff]
  %v119 = vld [vmem:[%s2 + $0x278] sm:$0xff]
  %v120 = vld [vmem:[%s2 + $0x280] sm:$0xff]
  %v121 = vld [vmem:[%s2 + $0x288] sm:$0xff]
  %v122 = vld [vmem:[%s2 + $0x290] sm:$0xff]
  %v123 = vld [vmem:[%s2 + $0x298] sm:$0xff]
  %v124 = vld [vmem:[%s2 + $0x2a0] sm:$0xff]
  %v125 = vld [vmem:[%s2 + $0x2a8] sm:$0xff]
  %v126 = vld [vmem:[%s2 + $0x2b0] sm:$0xff]
  %v127 = vld [vmem:[%s2 + $0x2b8] sm:$0xff]
  %v128 = vld [vmem:[%s2 + $0x2c0] sm:$0xff]
  %v129 = vld [vmem:[%s2 + $0x2c8] sm:$0xff]
  %v130 = vld [vmem:[%s2 + $0x2d0] sm:$0xff]
  %v131 = vld [vmem:[%s2 + $0x2d8] sm:$0xff]
  %v132 = vld [vmem:[%s2 + $0x2e0] sm:$0xff]
  %v133 = vld [vmem:[%s2 + $0x2e8] sm:$0xff]
  %v134 = vld [vmem:[%s2 + $0x2f0] sm:$0xff]
  %v135 = vld [vmem:[%s2 + $0x2f8] sm:$0xff]
  %v136 = vld [vmem:[%s2 + $0x300] sm:$0xff]
  %v137 = vld [vmem:[%s2 + $0x308] sm:$0xff]
  %v138 = vld [vmem:[%s2 + $0x310] sm:$0xff]
  %v139 = vld [vmem:[%s2 + $0x318] sm:$0xff]
  %v140 = vld [vmem:[%s2 + $0x320] sm:$0xff]
  %v141 = vld [vmem:[%s2 + $0x328] sm:$0xff]
  %v142 = vld [vmem:[%s2 + $0x330] sm:$0xff]
  %v143 = vld [vmem:[%s2 + $0x338] sm:$0xff]
  %v144 = vld [vmem:[%s2 + $0x340] sm:$0xff]
  %v145 = vld [vmem:[%s2 + $0x348] sm:$0xff]
  %v146 = vld [vmem:[%s2 + $0x350] sm:$0xff]
  %v147 = vld [vmem:[%s2 + $0x358] sm:$0xff]
  %v148 = vld [vmem:[%s2 + $0x360] sm:$0xff]
  %v149 = vld [vmem:[%s2 + $0x368] sm:$0xff]
  %v150 = vld [vmem:[%s2 + $0x370] sm:$0xff]
  %v151 = vld [vmem:[%s2 + $0x378] sm:$0xff]
  %v152 = vld [vmem:[%s2 + $0x380] sm:$0xff]
  %v153 = vld [vmem:[%s2 + $0x388] sm:$0xff]
  %v154 = vld [vmem:[%s2 + $0x390] sm:$0xff]
  %v155 = vld [vmem:[%s2 + $0x398] sm:$0xff]
  %v156 = vld [vmem:[%s2 + $0x3a0] sm:$0xff]
  %v157 = vld [vmem:[%s2 + $0x3a8] sm:$0xff]
  %v158 = vld [vmem:[%s2 + $0x3b0] sm:$0xff]
  %v159 = vld [vmem:[%s2 + $0x3b8] sm:$0xff]
  %v160 = vld [vmem:[%s2 + $0x3c0] sm:$0xff]
  %v161 = vld [vmem:[%s2 + $0x3c8] sm:$0xff]
  %v162 = vld [vmem:[%s2 + $0x3d0] sm:$0xff]
  %v163 = vld [vmem:[%s2 + $0x3d8] sm:$0xff]
  %v164 = vld [vmem:[%s2 + $0x3e0] sm:$0xff]
  %v165 = vld [vmem:[%s2 + $0x3e8] sm:$0xff]
  %v166 = vld [vmem:[%s2 + $0x3f0] sm:$0xff]
  %v167 = vld [vmem:[%s2 + $0x3f8] sm:$0xff]
  %v168 = vld [vmem:[%s3] sm:$0xf]
  %v170 = vperm.slane %v168, 0
  %v171 = vperm.slane %v168, 1
  %v172 = vperm.slane %v168, 2
  %v173 = vperm.slane %v168, 3
  %178 = vmatpush.msra.mxu0 %v100
  %179 = vmatpush.msra.mxu0 %v96
  %180 = vmatpush.msra.mxu0 %v92
  %181 = vmatpush.msra.mxu0 %v88
  %182 = vmatpush.msra.mxu0 %v84
  %183 = vmatpush.msra.mxu0 %v80
  %184 = vmatpush.msra.mxu0 %v76
  %185 = vmatpush.msra.mxu0 %v72
  %186 = vmatpush.msra.mxu0 %v68
  %187 = vmatpush.msra.mxu0 %v64
  %188 = vmatpush.msra.mxu0 %v60
  %189 = vmatpush.msra.mxu0 %v56
  %190 = vmatpush.msra.mxu0 %v52
  %191 = vmatpush.msra.mxu0 %v48
  %192 = vmatpush.msra.mxu0 %v44
  %193 = vmatpush.msra.mxu0 %v40
  %194 = vmatmul.f32.gmra.mxu0 %v38
  %v195 = vpop.f32.mrf.mxu0
  %v196 = vadd.f32 %v170, %v195
  %197 = vdwg.mxu0
  %198 = vmatpush.msra.mxu0 %v164
  %199 = vmatpush.msra.mxu0 %v160
  %200 = vmatpush.msra.mxu0 %v156
  %201 = vmatpush.msra.mxu0 %v152
  %202 = vmatpush.msra.mxu0 %v148
  %203 = vmatpush.msra.mxu0 %v144
  %204 = vmatpush.msra.mxu0 %v140
  %205 = vmatpush.msra.mxu0 %v136
  %206 = vmatpush.msra.mxu0 %v132
  %207 = vmatpush.msra.mxu0 %v128
  %208 = vmatpush.msra.mxu0 %v124
  %209 = vmatpush.msra.mxu0 %v120
  %210 = vmatpush.msra.mxu0 %v116
  %211 = vmatpush.msra.mxu0 %v112
  %212 = vmatpush.msra.mxu0 %v108
  %213 = vmatpush.msra.mxu0 %v104
  %214 = vmatmul.f32.gmra.mxu0 %v39
  %v215 = vpop.f32.mrf.mxu0
  %v216 = vadd.f32 %v196, %v215
  %217 = vdwg.mxu0
  %218 = vmatpush.msra.mxu0 %v101
  %219 = vmatpush.msra.mxu0 %v97
  %220 = vmatpush.msra.mxu0 %v93
  %221 = vmatpush.msra.mxu0 %v89
  %222 = vmatpush.msra.mxu0 %v85
  %223 = vmatpush.msra.mxu0 %v81
  %224 = vmatpush.msra.mxu0 %v77
  %225 = vmatpush.msra.mxu0 %v73
  %226 = vmatpush.msra.mxu0 %v69
  %227 = vmatpush.msra.mxu0 %v65
  %228 = vmatpush.msra.mxu0 %v61
  %229 = vmatpush.msra.mxu0 %v57
  %230 = vmatpush.msra.mxu0 %v53
  %231 = vmatpush.msra.mxu0 %v49
  %232 = vmatpush.msra.mxu0 %v45
  %233 = vmatpush.msra.mxu0 %v41
  %234 = vmatmul.f32.gmra.mxu0 %v38
  %v235 = vpop.f32.mrf.mxu0
  %v236 = vadd.f32 %v171, %v235
  %237 = vdwg.mxu0
  %238 = vmatpush.msra.mxu0 %v165
  %239 = vmatpush.msra.mxu0 %v161
  %240 = vmatpush.msra.mxu0 %v157
  %241 = vmatpush.msra.mxu0 %v153
  %242 = vmatpush.msra.mxu0 %v149
  %243 = vmatpush.msra.mxu0 %v145
  %244 = vmatpush.msra.mxu0 %v141
  %245 = vmatpush.msra.mxu0 %v137
  %246 = vmatpush.msra.mxu0 %v133
  %247 = vmatpush.msra.mxu0 %v129
  %248 = vmatpush.msra.mxu0 %v125
  %249 = vmatpush.msra.mxu0 %v121
  %250 = vmatpush.msra.mxu0 %v117
  %251 = vmatpush.msra.mxu0 %v113
  %252 = vmatpush.msra.mxu0 %v109
  %253 = vmatpush.msra.mxu0 %v105
  %254 = vmatmul.f32.gmra.mxu0 %v39
  %v255 = vpop.f32.mrf.mxu0
  %v256 = vadd.f32 %v236, %v255
  %257 = vdwg.mxu0
  %258 = vmatpush.msra.mxu0 %v102
  %259 = vmatpush.msra.mxu0 %v98
  %260 = vmatpush.msra.mxu0 %v94
  %261 = vmatpush.msra.mxu0 %v90
  %262 = vmatpush.msra.mxu0 %v86
  %263 = vmatpush.msra.mxu0 %v82
  %264 = vmatpush.msra.mxu0 %v78
  %265 = vmatpush.msra.mxu0 %v74
  %266 = vmatpush.msra.mxu0 %v70
  %267 = vmatpush.msra.mxu0 %v66
  %268 = vmatpush.msra.mxu0 %v62
  %269 = vmatpush.msra.mxu0 %v58
  %270 = vmatpush.msra.mxu0 %v54
  %271 = vmatpush.msra.mxu0 %v50
  %272 = vmatpush.msra.mxu0 %v46
  %273 = vmatpush.msra.mxu0 %v42
  %274 = vmatmul.f32.gmra.mxu0 %v38
  %v275 = vpop.f32.mrf.mxu0
  %v276 = vadd.f32 %v172, %v275
  %277 = vdwg.mxu0
  %278 = vmatpush.msra.mxu0 %v166
  %279 = vmatpush.msra.mxu0 %v162
  %280 = vmatpush.msra.mxu0 %v158
  %281 = vmatpush.msra.mxu0 %v154
  %282 = vmatpush.msra.mxu0 %v150
  %283 = vmatpush.msra.mxu0 %v146
  %284 = vmatpush.msra.mxu0 %v142
  %285 = vmatpush.msra.mxu0 %v138
  %286 = vmatpush.msra.mxu0 %v134
  %287 = vmatpush.msra.mxu0 %v130
  %288 = vmatpush.msra.mxu0 %v126
  %289 = vmatpush.msra.mxu0 %v122
  %290 = vmatpush.msra.mxu0 %v118
  %291 = vmatpush.msra.mxu0 %v114
  %292 = vmatpush.msra.mxu0 %v110
  %293 = vmatpush.msra.mxu0 %v106
  %294 = vmatmul.f32.gmra.mxu0 %v39
  %v295 = vpop.f32.mrf.mxu0
  %v296 = vadd.f32 %v276, %v295
  %297 = vdwg.mxu0
  %298 = vmatpush.msra.mxu0 %v103
  %299 = vmatpush.msra.mxu0 %v99
  %300 = vmatpush.msra.mxu0 %v95
  %301 = vmatpush.msra.mxu0 %v91
  %302 = vmatpush.msra.mxu0 %v87
  %303 = vmatpush.msra.mxu0 %v83
  %304 = vmatpush.msra.mxu0 %v79
  %305 = vmatpush.msra.mxu0 %v75
  %306 = vmatpush.msra.mxu0 %v71
  %307 = vmatpush.msra.mxu0 %v67
  %308 = vmatpush.msra.mxu0 %v63
  %309 = vmatpush.msra.mxu0 %v59
  %310 = vmatpush.msra.mxu0 %v55
  %311 = vmatpush.msra.mxu0 %v51
  %312 = vmatpush.msra.mxu0 %v47
  %313 = vmatpush.msra.mxu0 %v43
  %314 = vmatmul.f32.gmra.mxu0 %v38
  %v315 = vpop.f32.mrf.mxu0
  %v316 = vadd.f32 %v173, %v315
  %317 = vdwg.mxu0
  %318 = vmatpush.msra.mxu0 %v167
  %319 = vmatpush.msra.mxu0 %v163
  %320 = vmatpush.msra.mxu0 %v159
  %321 = vmatpush.msra.mxu0 %v155
  %322 = vmatpush.msra.mxu0 %v151
  %323 = vmatpush.msra.mxu0 %v147
  %324 = vmatpush.msra.mxu0 %v143
  %325 = vmatpush.msra.mxu0 %v139
  %326 = vmatpush.msra.mxu0 %v135
  %327 = vmatpush.msra.mxu0 %v131
  %328 = vmatpush.msra.mxu0 %v127
  %329 = vmatpush.msra.mxu0 %v123
  %330 = vmatpush.msra.mxu0 %v119
  %331 = vmatpush.msra.mxu0 %v115
  %332 = vmatpush.msra.mxu0 %v111
  %333 = vmatpush.msra.mxu0 %v107
  %334 = vmatmul.f32.gmra.mxu0 %v39
  %v335 = vpop.f32.mrf.mxu0
  %v336 = vadd.f32 %v316, %v335
  %337 = vdwg.mxu0
  %v338 = vmax.f32 %v216, 0.0
  %v339 = vmax.f32 %v256, 0.0
  %v340 = vmax.f32 %v296, 0.0
  %v341 = vmax.f32 %v336, 0.0
  %v342 = vld [vmem:[%s5] sm:$0xff]
  %v343 = vld [vmem:[%s5 + $0x8] sm:$0xff]
  %v344 = vld [vmem:[%s5 + $0x10] sm:$0xff]
  %v345 = vld [vmem:[%s5 + $0x18] sm:$0xff]
  %v346 = vld [vmem:[%s5 + $0x20] sm:$0xff]
  %v347 = vld [vmem:[%s5 + $0x28] sm:$0xff]
  %v348 = vld [vmem:[%s5 + $0x30] sm:$0xff]
  %v349 = vld [vmem:[%s5 + $0x38] sm:$0xff]
  %v350 = vld [vmem:[%s5 + $0x40] sm:$0xff]
  %v351 = vld [vmem:[%s5 + $0x48] sm:$0xff]
  %v352 = vld [vmem:[%s5 + $0x50] sm:$0xff]
  %v353 = vld [vmem:[%s5 + $0x58] sm:$0xff]
  %v354 = vld [vmem:[%s5 + $0x60] sm:$0xff]
  %v355 = vld [vmem:[%s5 + $0x68] sm:$0xff]
  %v356 = vld [vmem:[%s5 + $0x70] sm:$0xff]
  %v357 = vld [vmem:[%s5 + $0x78] sm:$0xff]
  %v358 = vld [vmem:[%s5 + $0x80] sm:$0xff]
  %v359 = vld [vmem:[%s5 + $0x88] sm:$0xff]
  %v360 = vld [vmem:[%s5 + $0x90] sm:$0xff]
  %v361 = vld [vmem:[%s5 + $0x98] sm:$0xff]
  %v362 = vld [vmem:[%s5 + $0xa0] sm:$0xff]
  %v363 = vld [vmem:[%s5 + $0xa8] sm:$0xff]
  %v364 = vld [vmem:[%s5 + $0xb0] sm:$0xff]
  %v365 = vld [vmem:[%s5 + $0xb8] sm:$0xff]
  %v366 = vld [vmem:[%s5 + $0xc0] sm:$0xff]
  %v367 = vld [vmem:[%s5 + $0xc8] sm:$0xff]
  %v368 = vld [vmem:[%s5 + $0xd0] sm:$0xff]
  %v369 = vld [vmem:[%s5 + $0xd8] sm:$0xff]
  %v370 = vld [vmem:[%s5 + $0xe0] sm:$0xff]
  %v371 = vld [vmem:[%s5 + $0xe8] sm:$0xff]
  %v372 = vld [vmem:[%s5 + $0xf0] sm:$0xff]
  %v373 = vld [vmem:[%s5 + $0xf8] sm:$0xff]
  %v374 = vld [vmem:[%s5 + $0x100] sm:$0xff]
  %v375 = vld [vmem:[%s5 + $0x108] sm:$0xff]
  %v376 = vld [vmem:[%s5 + $0x110] sm:$0xff]
  %v377 = vld [vmem:[%s5 + $0x118] sm:$0xff]
  %v378 = vld [vmem:[%s5 + $0x120] sm:$0xff]
  %v379 = vld [vmem:[%s5 + $0x128] sm:$0xff]
  %v380 = vld [vmem:[%s5 + $0x130] sm:$0xff]
  %v381 = vld [vmem:[%s5 + $0x138] sm:$0xff]
  %v382 = vld [vmem:[%s5 + $0x140] sm:$0xff]
  %v383 = vld [vmem:[%s5 + $0x148] sm:$0xff]
  %v384 = vld [vmem:[%s5 + $0x150] sm:$0xff]
  %v385 = vld [vmem:[%s5 + $0x158] sm:$0xff]
  %v386 = vld [vmem:[%s5 + $0x160] sm:$0xff]
  %v387 = vld [vmem:[%s5 + $0x168] sm:$0xff]
  %v388 = vld [vmem:[%s5 + $0x170] sm:$0xff]
  %v389 = vld [vmem:[%s5 + $0x178] sm:$0xff]
  %v390 = vld [vmem:[%s5 + $0x180] sm:$0xff]
  %v391 = vld [vmem:[%s5 + $0x188] sm:$0xff]
  %v392 = vld [vmem:[%s5 + $0x190] sm:$0xff]
  %v393 = vld [vmem:[%s5 + $0x198] sm:$0xff]
  %v394 = vld [vmem:[%s5 + $0x1a0] sm:$0xff]
  %v395 = vld [vmem:[%s5 + $0x1a8] sm:$0xff]
  %v396 = vld [vmem:[%s5 + $0x1b0] sm:$0xff]
  %v397 = vld [vmem:[%s5 + $0x1b8] sm:$0xff]
  %v398 = vld [vmem:[%s5 + $0x1c0] sm:$0xff]
  %v399 = vld [vmem:[%s5 + $0x1c8] sm:$0xff]
  %v400 = vld [vmem:[%s5 + $0x1d0] sm:$0xff]
  %v401 = vld [vmem:[%s5 + $0x1d8] sm:$0xff]
  %v402 = vld [vmem:[%s5 + $0x1e0] sm:$0xff]
  %v403 = vld [vmem:[%s5 + $0x1e8] sm:$0xff]
  %v404 = vld [vmem:[%s5 + $0x1f0] sm:$0xff]
  %v405 = vld [vmem:[%s5 + $0x1f8] sm:$0xff]
  %v406 = vld [vmem:[%s5 + $0x200] sm:$0xff]
  %v407 = vld [vmem:[%s5 + $0x208] sm:$0xff]
  %v408 = vld [vmem:[%s5 + $0x210] sm:$0xff]
  %v409 = vld [vmem:[%s5 + $0x218] sm:$0xff]
  %v410 = vld [vmem:[%s5 + $0x220] sm:$0xff]
  %v411 = vld [vmem:[%s5 + $0x228] sm:$0xff]
  %v412 = vld [vmem:[%s5 + $0x230] sm:$0xff]
  %v413 = vld [vmem:[%s5 + $0x238] sm:$0xff]
  %v414 = vld [vmem:[%s5 + $0x240] sm:$0xff]
  %v415 = vld [vmem:[%s5 + $0x248] sm:$0xff]
  %v416 = vld [vmem:[%s5 + $0x250] sm:$0xff]
  %v417 = vld [vmem:[%s5 + $0x258] sm:$0xff]
  %v418 = vld [vmem:[%s5 + $0x260] sm:$0xff]
  %v419 = vld [vmem:[%s5 + $0x268] sm:$0xff]
  %v420 = vld [vmem:[%s5 + $0x270] sm:$0xff]
  %v421 = vld [vmem:[%s5 + $0x278] sm:$0xff]
  %v422 = vld [vmem:[%s5 + $0x280] sm:$0xff]
  %v423 = vld [vmem:[%s5 + $0x288] sm:$0xff]
  %v424 = vld [vmem:[%s5 + $0x290] sm:$0xff]
  %v425 = vld [vmem:[%s5 + $0x298] sm:$0xff]
  %v426 = vld [vmem:[%s5 + $0x2a0] sm:$0xff]
  %v427 = vld [vmem:[%s5 + $0x2a8] sm:$0xff]
  %v428 = vld [vmem:[%s5 + $0x2b0] sm:$0xff]
  %v429 = vld [vmem:[%s5 + $0x2b8] sm:$0xff]
  %v430 = vld [vmem:[%s5 + $0x2c0] sm:$0xff]
  %v431 = vld [vmem:[%s5 + $0x2c8] sm:$0xff]
  %v432 = vld [vmem:[%s5 + $0x2d0] sm:$0xff]
  %v433 = vld [vmem:[%s5 + $0x2d8] sm:$0xff]
  %v434 = vld [vmem:[%s5 + $0x2e0] sm:$0xff]
  %v435 = vld [vmem:[%s5 + $0x2e8] sm:$0xff]
  %v436 = vld [vmem:[%s5 + $0x2f0] sm:$0xff]
  %v437 = vld [vmem:[%s5 + $0x2f8] sm:$0xff]
  %v438 = vld [vmem:[%s5 + $0x300] sm:$0xff]
  %v439 = vld [vmem:[%s5 + $0x308] sm:$0xff]
  %v440 = vld [vmem:[%s5 + $0x310] sm:$0xff]
  %v441 = vld [vmem:[%s5 + $0x318] sm:$0xff]
  %v442 = vld [vmem:[%s5 + $0x320] sm:$0xff]
  %v443 = vld [vmem:[%s5 + $0x328] sm:$0xff]
  %v444 = vld [vmem:[%s5 + $0x330] sm:$0xff]
  %v445 = vld [vmem:[%s5 + $0x338] sm:$0xff]
  %v446 = vld [vmem:[%s5 + $0x340] sm:$0xff]
  %v447 = vld [vmem:[%s5 + $0x348] sm:$0xff]
  %v448 = vld [vmem:[%s5 + $0x350] sm:$0xff]
  %v449 = vld [vmem:[%s5 + $0x358] sm:$0xff]
  %v450 = vld [vmem:[%s5 + $0x360] sm:$0xff]
  %v451 = vld [vmem:[%s5 + $0x368] sm:$0xff]
  %v452 = vld [vmem:[%s5 + $0x370] sm:$0xff]
  %v453 = vld [vmem:[%s5 + $0x378] sm:$0xff]
  %v454 = vld [vmem:[%s5 + $0x380] sm:$0xff]
  %v455 = vld [vmem:[%s5 + $0x388] sm:$0xff]
  %v456 = vld [vmem:[%s5 + $0x390] sm:$0xff]
  %v457 = vld [vmem:[%s5 + $0x398] sm:$0xff]
  %v458 = vld [vmem:[%s5 + $0x3a0] sm:$0xff]
  %v459 = vld [vmem:[%s5 + $0x3a8] sm:$0xff]
  %v460 = vld [vmem:[%s5 + $0x3b0] sm:$0xff]
  %v461 = vld [vmem:[%s5 + $0x3b8] sm:$0xff]
  %v462 = vld [vmem:[%s5 + $0x3c0] sm:$0xff]
  %v463 = vld [vmem:[%s5 + $0x3c8] sm:$0xff]
  %v464 = vld [vmem:[%s5 + $0x3d0] sm:$0xff]
  %v465 = vld [vmem:[%s5 + $0x3d8] sm:$0xff]
  %v466 = vld [vmem:[%s5 + $0x3e0] sm:$0xff]
  %v467 = vld [vmem:[%s5 + $0x3e8] sm:$0xff]
  %v468 = vld [vmem:[%s5 + $0x3f0] sm:$0xff]
  %v469 = vld [vmem:[%s5 + $0x3f8] sm:$0xff]
  %v470 = vld [vmem:[%s6] sm:$0x3]
  %v472 = vperm.slane %v470, 0
  %v473 = vperm.slane %v470, 1
  %476 = vmatpush.msra.mxu0 %v372
  %477 = vmatpush.msra.mxu0 %v370
  %478 = vmatpush.msra.mxu0 %v368
  %479 = vmatpush.msra.mxu0 %v366
  %480 = vmatpush.msra.mxu0 %v364
  %481 = vmatpush.msra.mxu0 %v362
  %482 = vmatpush.msra.mxu0 %v360
  %483 = vmatpush.msra.mxu0 %v358
  %484 = vmatpush.msra.mxu0 %v356
  %485 = vmatpush.msra.mxu0 %v354
  %486 = vmatpush.msra.mxu0 %v352
  %487 = vmatpush.msra.mxu0 %v350
  %488 = vmatpush.msra.mxu0 %v348
  %489 = vmatpush.msra.mxu0 %v346
  %490 = vmatpush.msra.mxu0 %v344
  %491 = vmatpush.msra.mxu0 %v342
  %492 = vmatmul.f32.gmra.mxu0 %v338
  %v493 = vpop.f32.mrf.mxu0
  %v494 = vadd.f32 %v472, %v493
  %495 = vdwg.mxu0
  %496 = vmatpush.msra.mxu0 %v404
  %497 = vmatpush.msra.mxu0 %v402
  %498 = vmatpush.msra.mxu0 %v400
  %499 = vmatpush.msra.mxu0 %v398
  %500 = vmatpush.msra.mxu0 %v396
  %501 = vmatpush.msra.mxu0 %v394
  %502 = vmatpush.msra.mxu0 %v392
  %503 = vmatpush.msra.mxu0 %v390
  %504 = vmatpush.msra.mxu0 %v388
  %505 = vmatpush.msra.mxu0 %v386
  %506 = vmatpush.msra.mxu0 %v384
  %507 = vmatpush.msra.mxu0 %v382
  %508 = vmatpush.msra.mxu0 %v380
  %509 = vmatpush.msra.mxu0 %v378
  %510 = vmatpush.msra.mxu0 %v376
  %511 = vmatpush.msra.mxu0 %v374
  %512 = vmatmul.f32.gmra.mxu0 %v339
  %v513 = vpop.f32.mrf.mxu0
  %v514 = vadd.f32 %v494, %v513
  %515 = vdwg.mxu0
  %516 = vmatpush.msra.mxu0 %v436
  %517 = vmatpush.msra.mxu0 %v434
  %518 = vmatpush.msra.mxu0 %v432
  %519 = vmatpush.msra.mxu0 %v430
  %520 = vmatpush.msra.mxu0 %v428
  %521 = vmatpush.msra.mxu0 %v426
  %522 = vmatpush.msra.mxu0 %v424
  %523 = vmatpush.msra.mxu0 %v422
  %524 = vmatpush.msra.mxu0 %v420
  %525 = vmatpush.msra.mxu0 %v418
  %526 = vmatpush.msra.mxu0 %v416
  %527 = vmatpush.msra.mxu0 %v414
  %528 = vmatpush.msra.mxu0 %v412
  %529 = vmatpush.msra.mxu0 %v410
  %530 = vmatpush.msra.mxu0 %v408
  %531 = vmatpush.msra.mxu0 %v406
  %532 = vmatmul.f32.gmra.mxu0 %v340
  %v533 = vpop.f32.mrf.mxu0
  %v534 = vadd.f32 %v514, %v533
  %535 = vdwg.mxu0
  %536 = vmatpush.msra.mxu0 %v468
  %537 = vmatpush.msra.mxu0 %v466
  %538 = vmatpush.msra.mxu0 %v464
  %539 = vmatpush.msra.mxu0 %v462
  %540 = vmatpush.msra.mxu0 %v460
  %541 = vmatpush.msra.mxu0 %v458
  %542 = vmatpush.msra.mxu0 %v456
  %543 = vmatpush.msra.mxu0 %v454
  %544 = vmatpush.msra.mxu0 %v452
  %545 = vmatpush.msra.mxu0 %v450
  %546 = vmatpush.msra.mxu0 %v448
  %547 = vmatpush.msra.mxu0 %v446
  %548 = vmatpush.msra.mxu0 %v444
  %549 = vmatpush.msra.mxu0 %v442
  %550 = vmatpush.msra.mxu0 %v440
  %551 = vmatpush.msra.mxu0 %v438
  %552 = vmatmul.f32.gmra.mxu0 %v341
  %v553 = vpop.f32.mrf.mxu0
  %v554 = vadd.f32 %v534, %v553
  %555 = vdwg.mxu0
  %556 = vmatpush.msra.mxu0 %v373
  %557 = vmatpush.msra.mxu0 %v371
  %558 = vmatpush.msra.mxu0 %v369
  %559 = vmatpush.msra.mxu0 %v367
  %560 = vmatpush.msra.mxu0 %v365
  %561 = vmatpush.msra.mxu0 %v363
  %562 = vmatpush.msra.mxu0 %v361
  %563 = vmatpush.msra.mxu0 %v359
  %564 = vmatpush.msra.mxu0 %v357
  %565 = vmatpush.msra.mxu0 %v355
  %566 = vmatpush.msra.mxu0 %v353
  %567 = vmatpush.msra.mxu0 %v351
  %568 = vmatpush.msra.mxu0 %v349
  %569 = vmatpush.msra.mxu0 %v347
  %570 = vmatpush.msra.mxu0 %v345
  %571 = vmatpush.msra.mxu0 %v343
  %572 = vmatmul.f32.gmra.mxu0 %v338
  %v573 = vpop.f32.mrf.mxu0
  %v574 = vadd.f32 %v473, %v573
  %575 = vdwg.mxu0
  %576 = vmatpush.msra.mxu0 %v405
  %577 = vmatpush.msra.mxu0 %v403
  %578 = vmatpush.msra.mxu0 %v401
  %579 = vmatpush.msra.mxu0 %v399
  %580 = vmatpush.msra.mxu0 %v397
  %581 = vmatpush.msra.mxu0 %v395
  %582 = vmatpush.msra.mxu0 %v393
  %583 = vmatpush.msra.mxu0 %v391
  %584 = vmatpush.msra.mxu0 %v389
  %585 = vmatpush.msra.mxu0 %v387
  %586 = vmatpush.msra.mxu0 %v385
  %587 = vmatpush.msra.mxu0 %v383
  %588 = vmatpush.msra.mxu0 %v381
  %589 = vmatpush.msra.mxu0 %v379
  %590 = vmatpush.msra.mxu0 %v377
  %591 = vmatpush.msra.mxu0 %v375
  %592 = vmatmul.f32.gmra.mxu0 %v339
  %v593 = vpop.f32.mrf.mxu0
  %v594 = vadd.f32 %v574, %v593
  %595 = vdwg.mxu0
  %596 = vmatpush.msra.mxu0 %v437
  %597 = vmatpush.msra.mxu0 %v435
  %598 = vmatpush.msra.mxu0 %v433
  %599 = vmatpush.msra.mxu0 %v431
  %600 = vmatpush.msra.mxu0 %v429
  %601 = vmatpush.msra.mxu0 %v427
  %602 = vmatpush.msra.mxu0 %v425
  %603 = vmatpush.msra.mxu0 %v423
  %604 = vmatpush.msra.mxu0 %v421
  %605 = vmatpush.msra.mxu0 %v419
  %606 = vmatpush.msra.mxu0 %v417
  %607 = vmatpush.msra.mxu0 %v415
  %608 = vmatpush.msra.mxu0 %v413
  %609 = vmatpush.msra.mxu0 %v411
  %610 = vmatpush.msra.mxu0 %v409
  %611 = vmatpush.msra.mxu0 %v407
  %612 = vmatmul.f32.gmra.mxu0 %v340
  %v613 = vpop.f32.mrf.mxu0
  %v614 = vadd.f32 %v594, %v613
  %615 = vdwg.mxu0
  %616 = vmatpush.msra.mxu0 %v469
  %617 = vmatpush.msra.mxu0 %v467
  %618 = vmatpush.msra.mxu0 %v465
  %619 = vmatpush.msra.mxu0 %v463
  %620 = vmatpush.msra.mxu0 %v461
  %621 = vmatpush.msra.mxu0 %v459
  %622 = vmatpush.msra.mxu0 %v457
  %623 = vmatpush.msra.mxu0 %v455
  %624 = vmatpush.msra.mxu0 %v453
  %625 = vmatpush.msra.mxu0 %v451
  %626 = vmatpush.msra.mxu0 %v449
  %627 = vmatpush.msra.mxu0 %v447
  %628 = vmatpush.msra.mxu0 %v445
  %629 = vmatpush.msra.mxu0 %v443
  %630 = vmatpush.msra.mxu0 %v441
  %631 = vmatpush.msra.mxu0 %v439
  %632 = vmatmul.f32.gmra.mxu0 %v341
  %v633 = vpop.f32.mrf.mxu0
  %v634 = vadd.f32 %v614, %v633
  %635 = vdwg.mxu0
  %v636 = vld [vmem:[%s0] sm:$0xff]
  %v637 = vld [vmem:[%s0 + $0x8] sm:$0xff]
  %v638 = vld [vmem:[%s0 + $0x10] sm:$0xff]
  %v639 = vld [vmem:[%s0 + $0x18] sm:$0xff]
  %v640 = vld [vmem:[%s0 + $0x20] sm:$0xff]
  %v641 = vld [vmem:[%s0 + $0x28] sm:$0xff]
  %v642 = vld [vmem:[%s0 + $0x30] sm:$0xff]
  %v643 = vld [vmem:[%s0 + $0x38] sm:$0xff]
  %v644 = vld [vmem:[%s0 + $0x40] sm:$0xff]
  %v645 = vld [vmem:[%s0 + $0x48] sm:$0xff]
  %v646 = vld [vmem:[%s0 + $0x50] sm:$0xff]
  %v647 = vld [vmem:[%s0 + $0x58] sm:$0xff]
  %v648 = vld [vmem:[%s0 + $0x60] sm:$0xff]
  %v649 = vld [vmem:[%s0 + $0x68] sm:$0xff]
  %v650 = vld [vmem:[%s0 + $0x70] sm:$0xff]
  %v651 = vld [vmem:[%s0 + $0x78] sm:$0xff]
  %v652 = vld [vmem:[%s0 + $0x80] sm:$0xff]
  %v653 = vld [vmem:[%s0 + $0x88] sm:$0xff]
  %v654 = vld [vmem:[%s0 + $0x90] sm:$0xff]
  %v655 = vld [vmem:[%s0 + $0x98] sm:$0xff]
  %v656 = vld [vmem:[%s0 + $0xa0] sm:$0xff]
  %v657 = vld [vmem:[%s0 + $0xa8] sm:$0xff]
  %v658 = vld [vmem:[%s0 + $0xb0] sm:$0xff]
  %v659 = vld [vmem:[%s0 + $0xb8] sm:$0xff]
  %v660 = vld [vmem:[%s0 + $0xc0] sm:$0xff]
  %v661 = vld [vmem:[%s0 + $0xc8] sm:$0xff]
  %v662 = vld [vmem:[%s0 + $0xd0] sm:$0xff]
  %v663 = vld [vmem:[%s0 + $0xd8] sm:$0xff]
  %v664 = vld [vmem:[%s0 + $0xe0] sm:$0xff]
  %v665 = vld [vmem:[%s0 + $0xe8] sm:$0xff]
  %v666 = vld [vmem:[%s0 + $0xf0] sm:$0xff]
  %v667 = vld [vmem:[%s0 + $0xf8] sm:$0xff]
  %v668 = vld [vmem:[%s0 + $0x100] sm:$0xff]
  %v669 = vld [vmem:[%s0 + $0x108] sm:$0xff]
  %v670 = vld [vmem:[%s0 + $0x110] sm:$0xff]
  %v671 = vld [vmem:[%s0 + $0x118] sm:$0xff]
  %v672 = vld [vmem:[%s0 + $0x120] sm:$0xff]
  %v673 = vld [vmem:[%s0 + $0x128] sm:$0xff]
  %v674 = vld [vmem:[%s0 + $0x130] sm:$0xff]
  %v675 = vld [vmem:[%s0 + $0x138] sm:$0xff]
  %v676 = vld [vmem:[%s0 + $0x140] sm:$0xff]
  %v677 = vld [vmem:[%s0 + $0x148] sm:$0xff]
  %v678 = vld [vmem:[%s0 + $0x150] sm:$0xff]
  %v679 = vld [vmem:[%s0 + $0x158] sm:$0xff]
  %v680 = vld [vmem:[%s0 + $0x160] sm:$0xff]
  %v681 = vld [vmem:[%s0 + $0x168] sm:$0xff]
  %v682 = vld [vmem:[%s0 + $0x170] sm:$0xff]
  %v683 = vld [vmem:[%s0 + $0x178] sm:$0xff]
  %v684 = vld [vmem:[%s0 + $0x180] sm:$0xff]
  %v685 = vld [vmem:[%s0 + $0x188] sm:$0xff]
  %v686 = vld [vmem:[%s0 + $0x190] sm:$0xff]
  %v687 = vld [vmem:[%s0 + $0x198] sm:$0xff]
  %v688 = vld [vmem:[%s0 + $0x1a0] sm:$0xff]
  %v689 = vld [vmem:[%s0 + $0x1a8] sm:$0xff]
  %v690 = vld [vmem:[%s0 + $0x1b0] sm:$0xff]
  %v691 = vld [vmem:[%s0 + $0x1b8] sm:$0xff]
  %v692 = vld [vmem:[%s0 + $0x1c0] sm:$0xff]
  %v693 = vld [vmem:[%s0 + $0x1c8] sm:$0xff]
  %v694 = vld [vmem:[%s0 + $0x1d0] sm:$0xff]
  %v695 = vld [vmem:[%s0 + $0x1d8] sm:$0xff]
  %v696 = vld [vmem:[%s0 + $0x1e0] sm:$0xff]
  %v697 = vld [vmem:[%s0 + $0x1e8] sm:$0xff]
  %v698 = vld [vmem:[%s0 + $0x1f0] sm:$0xff]
  %v699 = vld [vmem:[%s0 + $0x1f8] sm:$0xff]
  %v700 = vld [vmem:[%s4] sm:$0xff]
  %v701 = vld [vmem:[%s4 + $0x8] sm:$0xff]
  %v702 = vld [vmem:[%s4 + $0x10] sm:$0xff]
  %v703 = vld [vmem:[%s4 + $0x18] sm:$0xff]
  %v704 = vld [vmem:[%s4 + $0x20] sm:$0xff]
  %v705 = vld [vmem:[%s4 + $0x28] sm:$0xff]
  %v706 = vld [vmem:[%s4 + $0x30] sm:$0xff]
  %v707 = vld [vmem:[%s4 + $0x38] sm:$0xff]
  %v708 = vld [vmem:[%s4 + $0x40] sm:$0xff]
  %v709 = vld [vmem:[%s4 + $0x48] sm:$0xff]
  %v710 = vld [vmem:[%s4 + $0x50] sm:$0xff]
  %v711 = vld [vmem:[%s4 + $0x58] sm:$0xff]
  %v712 = vld [vmem:[%s4 + $0x60] sm:$0xff]
  %v713 = vld [vmem:[%s4 + $0x68] sm:$0xff]
  %v714 = vld [vmem:[%s4 + $0x70] sm:$0xff]
  %v715 = vld [vmem:[%s4 + $0x78] sm:$0xff]
  %v716 = vld [vmem:[%s4 + $0x80] sm:$0xff]
  %v717 = vld [vmem:[%s4 + $0x88] sm:$0xff]
  %v718 = vld [vmem:[%s4 + $0x90] sm:$0xff]
  %v719 = vld [vmem:[%s4 + $0x98] sm:$0xff]
  %v720 = vld [vmem:[%s4 + $0xa0] sm:$0xff]
  %v721 = vld [vmem:[%s4 + $0xa8] sm:$0xff]
  %v722 = vld [vmem:[%s4 + $0xb0] sm:$0xff]
  %v723 = vld [vmem:[%s4 + $0xb8] sm:$0xff]
  %v724 = vld [vmem:[%s4 + $0xc0] sm:$0xff]
  %v725 = vld [vmem:[%s4 + $0xc8] sm:$0xff]
  %v726 = vld [vmem:[%s4 + $0xd0] sm:$0xff]
  %v727 = vld [vmem:[%s4 + $0xd8] sm:$0xff]
  %v728 = vld [vmem:[%s4 + $0xe0] sm:$0xff]
  %v729 = vld [vmem:[%s4 + $0xe8] sm:$0xff]
  %v730 = vld [vmem:[%s4 + $0xf0] sm:$0xff]
  %v731 = vld [vmem:[%s4 + $0xf8] sm:$0xff]
  %v732 = vld [vmem:[%s4 + $0x100] sm:$0xff]
  %v733 = vld [vmem:[%s4 + $0x108] sm:$0xff]
  %v734 = vld [vmem:[%s4 + $0x110] sm:$0xff]
  %v735 = vld [vmem:[%s4 + $0x118] sm:$0xff]
  %v736 = vld [vmem:[%s4 + $0x120] sm:$0xff]
  %v737 = vld [vmem:[%s4 + $0x128] sm:$0xff]
  %v738 = vld [vmem:[%s4 + $0x130] sm:$0xff]
  %v739 = vld [vmem:[%s4 + $0x138] sm:$0xff]
  %v740 = vld [vmem:[%s4 + $0x140] sm:$0xff]
  %v741 = vld [vmem:[%s4 + $0x148] sm:$0xff]
  %v742 = vld [vmem:[%s4 + $0x150] sm:$0xff]
  %v743 = vld [vmem:[%s4 + $0x158] sm:$0xff]
  %v744 = vld [vmem:[%s4 + $0x160] sm:$0xff]
  %v745 = vld [vmem:[%s4 + $0x168] sm:$0xff]
  %v746 = vld [vmem:[%s4 + $0x170] sm:$0xff]
  %v747 = vld [vmem:[%s4 + $0x178] sm:$0xff]
  %v748 = vld [vmem:[%s4 + $0x180] sm:$0xff]
  %v749 = vld [vmem:[%s4 + $0x188] sm:$0xff]
  %v750 = vld [vmem:[%s4 + $0x190] sm:$0xff]
  %v751 = vld [vmem:[%s4 + $0x198] sm:$0xff]
  %v752 = vld [vmem:[%s4 + $0x1a0] sm:$0xff]
  %v753 = vld [vmem:[%s4 + $0x1a8] sm:$0xff]
  %v754 = vld [vmem:[%s4 + $0x1b0] sm:$0xff]
  %v755 = vld [vmem:[%s4 + $0x1b8] sm:$0xff]
  %v756 = vld [vmem:[%s4 + $0x1c0] sm:$0xff]
  %v757 = vld [vmem:[%s4 + $0x1c8] sm:$0xff]
  %v758 = vld [vmem:[%s4 + $0x1d0] sm:$0xff]
  %v759 = vld [vmem:[%s4 + $0x1d8] sm:$0xff]
  %v760 = vld [vmem:[%s4 + $0x1e0] sm:$0xff]
  %v761 = vld [vmem:[%s4 + $0x1e8] sm:$0xff]
  %v762 = vld [vmem:[%s4 + $0x1f0] sm:$0xff]
  %v763 = vld [vmem:[%s4 + $0x1f8] sm:$0xff]
  %v764 = vperm.slane %v554, 0
  %v765 = vperm.slane %v634, 0
  %766 = vmatpush.msra.mxu0 %v730
  %767 = vmatpush.msra.mxu0 %v728
  %768 = vmatpush.msra.mxu0 %v726
  %769 = vmatpush.msra.mxu0 %v724
  %770 = vmatpush.msra.mxu0 %v722
  %771 = vmatpush.msra.mxu0 %v720
  %772 = vmatpush.msra.mxu0 %v718
  %773 = vmatpush.msra.mxu0 %v716
  %774 = vmatpush.msra.mxu0 %v714
  %775 = vmatpush.msra.mxu0 %v712
  %776 = vmatpush.msra.mxu0 %v710
  %777 = vmatpush.msra.mxu0 %v708
  %778 = vmatpush.msra.mxu0 %v706
  %779 = vmatpush.msra.mxu0 %v704
  %780 = vmatpush.msra.mxu0 %v702
  %781 = vmatpush.msra.mxu0 %v700
  %782 = vmatmul.f32.gmra.mxu0 %v636
  %v783 = vpop.f32.mrf.mxu0
  %v784 = vadd.f32 %v764, %v783
  %785 = vmatmul.f32.gmra.mxu0 %v638
  %v786 = vpop.f32.mrf.mxu0
  %v787 = vadd.f32 %v764, %v786
  %788 = vmatmul.f32.gmra.mxu0 %v640
  %v789 = vpop.f32.mrf.mxu0
  %v790 = vadd.f32 %v764, %v789
  %791 = vmatmul.f32.gmra.mxu0 %v642
  %v792 = vpop.f32.mrf.mxu0
  %v793 = vadd.f32 %v764, %v792
  %794 = vmatmul.f32.gmra.mxu0 %v644
  %v795 = vpop.f32.mrf.mxu0
  %v796 = vadd.f32 %v764, %v795
  %797 = vmatmul.f32.gmra.mxu0 %v646
  %v798 = vpop.f32.mrf.mxu0
  %v799 = vadd.f32 %v764, %v798
  %800 = vmatmul.f32.gmra.mxu0 %v648
  %v801 = vpop.f32.mrf.mxu0
  %v802 = vadd.f32 %v764, %v801
  %803 = vmatmul.f32.gmra.mxu0 %v650
  %v804 = vpop.f32.mrf.mxu0
  %v805 = vadd.f32 %v764, %v804
  %806 = vmatmul.f32.gmra.mxu0 %v652
  %v807 = vpop.f32.mrf.mxu0
  %v808 = vadd.f32 %v764, %v807
  %809 = vmatmul.f32.gmra.mxu0 %v654
  %v810 = vpop.f32.mrf.mxu0
  %v811 = vadd.f32 %v764, %v810
  %812 = vmatmul.f32.gmra.mxu0 %v656
  %v813 = vpop.f32.mrf.mxu0
  %v814 = vadd.f32 %v764, %v813
  %815 = vmatmul.f32.gmra.mxu0 %v658
  %v816 = vpop.f32.mrf.mxu0
  %v817 = vadd.f32 %v764, %v816
  %818 = vmatmul.f32.gmra.mxu0 %v660
  %v819 = vpop.f32.mrf.mxu0
  %v820 = vadd.f32 %v764, %v819
  %821 = vmatmul.f32.gmra.mxu0 %v662
  %v822 = vpop.f32.mrf.mxu0
  %v823 = vadd.f32 %v764, %v822
  %824 = vmatmul.f32.gmra.mxu0 %v664
  %v825 = vpop.f32.mrf.mxu0
  %v826 = vadd.f32 %v764, %v825
  %827 = vmatmul.f32.gmra.mxu0 %v666
  %v828 = vpop.f32.mrf.mxu0
  %v829 = vadd.f32 %v764, %v828
  %830 = vmatmul.f32.gmra.mxu0 %v668
  %v831 = vpop.f32.mrf.mxu0
  %v832 = vadd.f32 %v764, %v831
  %833 = vmatmul.f32.gmra.mxu0 %v670
  %v834 = vpop.f32.mrf.mxu0
  %v835 = vadd.f32 %v764, %v834
  %836 = vmatmul.f32.gmra.mxu0 %v672
  %v837 = vpop.f32.mrf.mxu0
  %v838 = vadd.f32 %v764, %v837
  %839 = vmatmul.f32.gmra.mxu0 %v674
  %v840 = vpop.f32.mrf.mxu0
  %v841 = vadd.f32 %v764, %v840
  %842 = vmatmul.f32.gmra.mxu0 %v676
  %v843 = vpop.f32.mrf.mxu0
  %v844 = vadd.f32 %v764, %v843
  %845 = vmatmul.f32.gmra.mxu0 %v678
  %v846 = vpop.f32.mrf.mxu0
  %v847 = vadd.f32 %v764, %v846
  %848 = vmatmul.f32.gmra.mxu0 %v680
  %v849 = vpop.f32.mrf.mxu0
  %v850 = vadd.f32 %v764, %v849
  %851 = vmatmul.f32.gmra.mxu0 %v682
  %v852 = vpop.f32.mrf.mxu0
  %v853 = vadd.f32 %v764, %v852
  %854 = vmatmul.f32.gmra.mxu0 %v684
  %v855 = vpop.f32.mrf.mxu0
  %v856 = vadd.f32 %v764, %v855
  %857 = vmatmul.f32.gmra.mxu0 %v686
  %v858 = vpop.f32.mrf.mxu0
  %v859 = vadd.f32 %v764, %v858
  %860 = vmatmul.f32.gmra.mxu0 %v688
  %v861 = vpop.f32.mrf.mxu0
  %v862 = vadd.f32 %v764, %v861
  %863 = vmatmul.f32.gmra.mxu0 %v690
  %v864 = vpop.f32.mrf.mxu0
  %v865 = vadd.f32 %v764, %v864
  %866 = vmatmul.f32.gmra.mxu0 %v692
  %v867 = vpop.f32.mrf.mxu0
  %v868 = vadd.f32 %v764, %v867
  %869 = vmatmul.f32.gmra.mxu0 %v694
  %v870 = vpop.f32.mrf.mxu0
  %v871 = vadd.f32 %v764, %v870
  %872 = vmatmul.f32.gmra.mxu0 %v696
  %v873 = vpop.f32.mrf.mxu0
  %v874 = vadd.f32 %v764, %v873
  %875 = vmatmul.f32.gmra.mxu0 %v698
  %v876 = vpop.f32.mrf.mxu0
  %v877 = vadd.f32 %v764, %v876
  %878 = vdwg.mxu0
  %879 = vmatpush.msra.mxu0 %v762
  %880 = vmatpush.msra.mxu0 %v760
  %881 = vmatpush.msra.mxu0 %v758
  %882 = vmatpush.msra.mxu0 %v756
  %883 = vmatpush.msra.mxu0 %v754
  %884 = vmatpush.msra.mxu0 %v752
  %885 = vmatpush.msra.mxu0 %v750
  %886 = vmatpush.msra.mxu0 %v748
  %887 = vmatpush.msra.mxu0 %v746
  %888 = vmatpush.msra.mxu0 %v744
  %889 = vmatpush.msra.mxu0 %v742
  %890 = vmatpush.msra.mxu0 %v740
  %891 = vmatpush.msra.mxu0 %v738
  %892 = vmatpush.msra.mxu0 %v736
  %893 = vmatpush.msra.mxu0 %v734
  %894 = vmatpush.msra.mxu0 %v732
  %895 = vmatmul.f32.gmra.mxu0 %v637
  %v896 = vpop.f32.mrf.mxu0
  %v897 = vadd.f32 %v784, %v896
  %898 = vmatmul.f32.gmra.mxu0 %v639
  %v899 = vpop.f32.mrf.mxu0
  %v900 = vadd.f32 %v787, %v899
  %901 = vmatmul.f32.gmra.mxu0 %v641
  %v902 = vpop.f32.mrf.mxu0
  %v903 = vadd.f32 %v790, %v902
  %904 = vmatmul.f32.gmra.mxu0 %v643
  %v905 = vpop.f32.mrf.mxu0
  %v906 = vadd.f32 %v793, %v905
  %907 = vmatmul.f32.gmra.mxu0 %v645
  %v908 = vpop.f32.mrf.mxu0
  %v909 = vadd.f32 %v796, %v908
  %910 = vmatmul.f32.gmra.mxu0 %v647
  %v911 = vpop.f32.mrf.mxu0
  %v912 = vadd.f32 %v799, %v911
  %913 = vmatmul.f32.gmra.mxu0 %v649
  %v914 = vpop.f32.mrf.mxu0
  %v915 = vadd.f32 %v802, %v914
  %916 = vmatmul.f32.gmra.mxu0 %v651
  %v917 = vpop.f32.mrf.mxu0
  %v918 = vadd.f32 %v805, %v917
  %919 = vmatmul.f32.gmra.mxu0 %v653
  %v920 = vpop.f32.mrf.mxu0
  %v921 = vadd.f32 %v808, %v920
  %922 = vmatmul.f32.gmra.mxu0 %v655
  %v923 = vpop.f32.mrf.mxu0
  %v924 = vadd.f32 %v811, %v923
  %925 = vmatmul.f32.gmra.mxu0 %v657
  %v926 = vpop.f32.mrf.mxu0
  %v927 = vadd.f32 %v814, %v926
  %928 = vmatmul.f32.gmra.mxu0 %v659
  %v929 = vpop.f32.mrf.mxu0
  %v930 = vadd.f32 %v817, %v929
  %931 = vmatmul.f32.gmra.mxu0 %v661
  %v932 = vpop.f32.mrf.mxu0
  %v933 = vadd.f32 %v820, %v932
  %934 = vmatmul.f32.gmra.mxu0 %v663
  %v935 = vpop.f32.mrf.mxu0
  %v936 = vadd.f32 %v823, %v935
  %937 = vmatmul.f32.gmra.mxu0 %v665
  %v938 = vpop.f32.mrf.mxu0
  %v939 = vadd.f32 %v826, %v938
  %940 = vmatmul.f32.gmra.mxu0 %v667
  %v941 = vpop.f32.mrf.mxu0
  %v942 = vadd.f32 %v829, %v941
  %943 = vmatmul.f32.gmra.mxu0 %v669
  %v944 = vpop.f32.mrf.mxu0
  %v945 = vadd.f32 %v832, %v944
  %946 = vmatmul.f32.gmra.mxu0 %v671
  %v947 = vpop.f32.mrf.mxu0
  %v948 = vadd.f32 %v835, %v947
  %949 = vmatmul.f32.gmra.mxu0 %v673
  %v950 = vpop.f32.mrf.mxu0
  %v951 = vadd.f32 %v838, %v950
  %952 = vmatmul.f32.gmra.mxu0 %v675
  %v953 = vpop.f32.mrf.mxu0
  %v954 = vadd.f32 %v841, %v953
  %955 = vmatmul.f32.gmra.mxu0 %v677
  %v956 = vpop.f32.mrf.mxu0
  %v957 = vadd.f32 %v844, %v956
  %958 = vmatmul.f32.gmra.mxu0 %v679
  %v959 = vpop.f32.mrf.mxu0
  %v960 = vadd.f32 %v847, %v959
  %961 = vmatmul.f32.gmra.mxu0 %v681
  %v962 = vpop.f32.mrf.mxu0
  %v963 = vadd.f32 %v850, %v962
  %964 = vmatmul.f32.gmra.mxu0 %v683
  %v965 = vpop.f32.mrf.mxu0
  %v966 = vadd.f32 %v853, %v965
  %967 = vmatmul.f32.gmra.mxu0 %v685
  %v968 = vpop.f32.mrf.mxu0
  %v969 = vadd.f32 %v856, %v968
  %970 = vmatmul.f32.gmra.mxu0 %v687
  %v971 = vpop.f32.mrf.mxu0
  %v972 = vadd.f32 %v859, %v971
  %973 = vmatmul.f32.gmra.mxu0 %v689
  %v974 = vpop.f32.mrf.mxu0
  %v975 = vadd.f32 %v862, %v974
  %976 = vmatmul.f32.gmra.mxu0 %v691
  %v977 = vpop.f32.mrf.mxu0
  %v978 = vadd.f32 %v865, %v977
  %979 = vmatmul.f32.gmra.mxu0 %v693
  %v980 = vpop.f32.mrf.mxu0
  %v981 = vadd.f32 %v868, %v980
  %982 = vmatmul.f32.gmra.mxu0 %v695
  %v983 = vpop.f32.mrf.mxu0
  %v984 = vadd.f32 %v871, %v983
  %985 = vmatmul.f32.gmra.mxu0 %v697
  %v986 = vpop.f32.mrf.mxu0
  %v987 = vadd.f32 %v874, %v986
  %988 = vmatmul.f32.gmra.mxu0 %v699
  %v989 = vpop.f32.mrf.mxu0
  %v990 = vadd.f32 %v877, %v989
  %991 = vdwg.mxu0
  %992 = vmatpush.msra.mxu0 %v731
  %993 = vmatpush.msra.mxu0 %v729
  %994 = vmatpush.msra.mxu0 %v727
  %995 = vmatpush.msra.mxu0 %v725
  %996 = vmatpush.msra.mxu0 %v723
  %997 = vmatpush.msra.mxu0 %v721
  %998 = vmatpush.msra.mxu0 %v719
  %999 = vmatpush.msra.mxu0 %v717
  %1000 = vmatpush.msra.mxu0 %v715
  %1001 = vmatpush.msra.mxu0 %v713
  %1002 = vmatpush.msra.mxu0 %v711
  %1003 = vmatpush.msra.mxu0 %v709
  %1004 = vmatpush.msra.mxu0 %v707
  %1005 = vmatpush.msra.mxu0 %v705
  %1006 = vmatpush.msra.mxu0 %v703
  %1007 = vmatpush.msra.mxu0 %v701
  %1008 = vmatmul.f32.gmra.mxu0 %v636
  %v1009 = vpop.f32.mrf.mxu0
  %v1010 = vadd.f32 %v765, %v1009
  %1011 = vmatmul.f32.gmra.mxu0 %v638
  %v1012 = vpop.f32.mrf.mxu0
  %v1013 = vadd.f32 %v765, %v1012
  %1014 = vmatmul.f32.gmra.mxu0 %v640
  %v1015 = vpop.f32.mrf.mxu0
  %v1016 = vadd.f32 %v765, %v1015
  %1017 = vmatmul.f32.gmra.mxu0 %v642
  %v1018 = vpop.f32.mrf.mxu0
  %v1019 = vadd.f32 %v765, %v1018
  %1020 = vmatmul.f32.gmra.mxu0 %v644
  %v1021 = vpop.f32.mrf.mxu0
  %v1022 = vadd.f32 %v765, %v1021
  %1023 = vmatmul.f32.gmra.mxu0 %v646
  %v1024 = vpop.f32.mrf.mxu0
  %v1025 = vadd.f32 %v765, %v1024
  %1026 = vmatmul.f32.gmra.mxu0 %v648
  %v1027 = vpop.f32.mrf.mxu0
  %v1028 = vadd.f32 %v765, %v1027
  %1029 = vmatmul.f32.gmra.mxu0 %v650
  %v1030 = vpop.f32.mrf.mxu0
  %v1031 = vadd.f32 %v765, %v1030
  %1032 = vmatmul.f32.gmra.mxu0 %v652
  %v1033 = vpop.f32.mrf.mxu0
  %v1034 = vadd.f32 %v765, %v1033
  %1035 = vmatmul.f32.gmra.mxu0 %v654
  %v1036 = vpop.f32.mrf.mxu0
  %v1037 = vadd.f32 %v765, %v1036
  %1038 = vmatmul.f32.gmra.mxu0 %v656
  %v1039 = vpop.f32.mrf.mxu0
  %v1040 = vadd.f32 %v765, %v1039
  %1041 = vmatmul.f32.gmra.mxu0 %v658
  %v1042 = vpop.f32.mrf.mxu0
  %v1043 = vadd.f32 %v765, %v1042
  %1044 = vmatmul.f32.gmra.mxu0 %v660
  %v1045 = vpop.f32.mrf.mxu0
  %v1046 = vadd.f32 %v765, %v1045
  %1047 = vmatmul.f32.gmra.mxu0 %v662
  %v1048 = vpop.f32.mrf.mxu0
  %v1049 = vadd.f32 %v765, %v1048
  %1050 = vmatmul.f32.gmra.mxu0 %v664
  %v1051 = vpop.f32.mrf.mxu0
  %v1052 = vadd.f32 %v765, %v1051
  %1053 = vmatmul.f32.gmra.mxu0 %v666
  %v1054 = vpop.f32.mrf.mxu0
  %v1055 = vadd.f32 %v765, %v1054
  %1056 = vmatmul.f32.gmra.mxu0 %v668
  %v1057 = vpop.f32.mrf.mxu0
  %v1058 = vadd.f32 %v765, %v1057
  %1059 = vmatmul.f32.gmra.mxu0 %v670
  %v1060 = vpop.f32.mrf.mxu0
  %v1061 = vadd.f32 %v765, %v1060
  %1062 = vmatmul.f32.gmra.mxu0 %v672
  %v1063 = vpop.f32.mrf.mxu0
  %v1064 = vadd.f32 %v765, %v1063
  %1065 = vmatmul.f32.gmra.mxu0 %v674
  %v1066 = vpop.f32.mrf.mxu0
  %v1067 = vadd.f32 %v765, %v1066
  %1068 = vmatmul.f32.gmra.mxu0 %v676
  %v1069 = vpop.f32.mrf.mxu0
  %v1070 = vadd.f32 %v765, %v1069
  %1071 = vmatmul.f32.gmra.mxu0 %v678
  %v1072 = vpop.f32.mrf.mxu0
  %v1073 = vadd.f32 %v765, %v1072
  %1074 = vmatmul.f32.gmra.mxu0 %v680
  %v1075 = vpop.f32.mrf.mxu0
  %v1076 = vadd.f32 %v765, %v1075
  %1077 = vmatmul.f32.gmra.mxu0 %v682
  %v1078 = vpop.f32.mrf.mxu0
  %v1079 = vadd.f32 %v765, %v1078
  %1080 = vmatmul.f32.gmra.mxu0 %v684
  %v1081 = vpop.f32.mrf.mxu0
  %v1082 = vadd.f32 %v765, %v1081
  %1083 = vmatmul.f32.gmra.mxu0 %v686
  %v1084 = vpop.f32.mrf.mxu0
  %v1085 = vadd.f32 %v765, %v1084
  %1086 = vmatmul.f32.gmra.mxu0 %v688
  %v1087 = vpop.f32.mrf.mxu0
  %v1088 = vadd.f32 %v765, %v1087
  %1089 = vmatmul.f32.gmra.mxu0 %v690
  %v1090 = vpop.f32.mrf.mxu0
  %v1091 = vadd.f32 %v765, %v1090
  %1092 = vmatmul.f32.gmra.mxu0 %v692
  %v1093 = vpop.f32.mrf.mxu0
  %v1094 = vadd.f32 %v765, %v1093
  %1095 = vmatmul.f32.gmra.mxu0 %v694
  %v1096 = vpop.f32.mrf.mxu0
  %v1097 = vadd.f32 %v765, %v1096
  %1098 = vmatmul.f32.gmra.mxu0 %v696
  %v1099 = vpop.f32.mrf.mxu0
  %v1100 = vadd.f32 %v765, %v1099
  %1101 = vmatmul.f32.gmra.mxu0 %v698
  %v1102 = vpop.f32.mrf.mxu0
  %v1103 = vadd.f32 %v765, %v1102
  %1104 = vdwg.mxu0
  %1105 = vmatpush.msra.mxu0 %v763
  %1106 = vmatpush.msra.mxu0 %v761
  %1107 = vmatpush.msra.mxu0 %v759
  %1108 = vmatpush.msra.mxu0 %v757
  %1109 = vmatpush.msra.mxu0 %v755
  %1110 = vmatpush.msra.mxu0 %v753
  %1111 = vmatpush.msra.mxu0 %v751
  %1112 = vmatpush.msra.mxu0 %v749
  %1113 = vmatpush.msra.mxu0 %v747
  %1114 = vmatpush.msra.mxu0 %v745
  %1115 = vmatpush.msra.mxu0 %v743
  %1116 = vmatpush.msra.mxu0 %v741
  %1117 = vmatpush.msra.mxu0 %v739
  %1118 = vmatpush.msra.mxu0 %v737
  %1119 = vmatpush.msra.mxu0 %v735
  %1120 = vmatpush.msra.mxu0 %v733
  %1121 = vmatmul.f32.gmra.mxu0 %v637
  %v1122 = vpop.f32.mrf.mxu0
  %v1123 = vadd.f32 %v1010, %v1122
  %1124 = vmatmul.f32.gmra.mxu0 %v639
  %v1125 = vpop.f32.mrf.mxu0
  %v1126 = vadd.f32 %v1013, %v1125
  %1127 = vmatmul.f32.gmra.mxu0 %v641
  %v1128 = vpop.f32.mrf.mxu0
  %v1129 = vadd.f32 %v1016, %v1128
  %1130 = vmatmul.f32.gmra.mxu0 %v643
  %v1131 = vpop.f32.mrf.mxu0
  %v1132 = vadd.f32 %v1019, %v1131
  %1133 = vmatmul.f32.gmra.mxu0 %v645
  %v1134 = vpop.f32.mrf.mxu0
  %v1135 = vadd.f32 %v1022, %v1134
  %1136 = vmatmul.f32.gmra.mxu0 %v647
  %v1137 = vpop.f32.mrf.mxu0
  %v1138 = vadd.f32 %v1025, %v1137
  %1139 = vmatmul.f32.gmra.mxu0 %v649
  %v1140 = vpop.f32.mrf.mxu0
  %v1141 = vadd.f32 %v1028, %v1140
  %1142 = vmatmul.f32.gmra.mxu0 %v651
  %v1143 = vpop.f32.mrf.mxu0
  %v1144 = vadd.f32 %v1031, %v1143
  %1145 = vmatmul.f32.gmra.mxu0 %v653
  %v1146 = vpop.f32.mrf.mxu0
  %v1147 = vadd.f32 %v1034, %v1146
  %1148 = vmatmul.f32.gmra.mxu0 %v655
  %v1149 = vpop.f32.mrf.mxu0
  %v1150 = vadd.f32 %v1037, %v1149
  %1151 = vmatmul.f32.gmra.mxu0 %v657
  %v1152 = vpop.f32.mrf.mxu0
  %v1153 = vadd.f32 %v1040, %v1152
  %1154 = vmatmul.f32.gmra.mxu0 %v659
  %v1155 = vpop.f32.mrf.mxu0
  %v1156 = vadd.f32 %v1043, %v1155
  %1157 = vmatmul.f32.gmra.mxu0 %v661
  %v1158 = vpop.f32.mrf.mxu0
  %v1159 = vadd.f32 %v1046, %v1158
  %1160 = vmatmul.f32.gmra.mxu0 %v663
  %v1161 = vpop.f32.mrf.mxu0
  %v1162 = vadd.f32 %v1049, %v1161
  %1163 = vmatmul.f32.gmra.mxu0 %v665
  %v1164 = vpop.f32.mrf.mxu0
  %v1165 = vadd.f32 %v1052, %v1164
  %1166 = vmatmul.f32.gmra.mxu0 %v667
  %v1167 = vpop.f32.mrf.mxu0
  %v1168 = vadd.f32 %v1055, %v1167
  %1169 = vmatmul.f32.gmra.mxu0 %v669
  %v1170 = vpop.f32.mrf.mxu0
  %v1171 = vadd.f32 %v1058, %v1170
  %1172 = vmatmul.f32.gmra.mxu0 %v671
  %v1173 = vpop.f32.mrf.mxu0
  %v1174 = vadd.f32 %v1061, %v1173
  %1175 = vmatmul.f32.gmra.mxu0 %v673
  %v1176 = vpop.f32.mrf.mxu0
  %v1177 = vadd.f32 %v1064, %v1176
  %1178 = vmatmul.f32.gmra.mxu0 %v675
  %v1179 = vpop.f32.mrf.mxu0
  %v1180 = vadd.f32 %v1067, %v1179
  %1181 = vmatmul.f32.gmra.mxu0 %v677
  %v1182 = vpop.f32.mrf.mxu0
  %v1183 = vadd.f32 %v1070, %v1182
  %1184 = vmatmul.f32.gmra.mxu0 %v679
  %v1185 = vpop.f32.mrf.mxu0
  %v1186 = vadd.f32 %v1073, %v1185
  %1187 = vmatmul.f32.gmra.mxu0 %v681
  %v1188 = vpop.f32.mrf.mxu0
  %v1189 = vadd.f32 %v1076, %v1188
  %1190 = vmatmul.f32.gmra.mxu0 %v683
  %v1191 = vpop.f32.mrf.mxu0
  %v1192 = vadd.f32 %v1079, %v1191
  %1193 = vmatmul.f32.gmra.mxu0 %v685
  %v1194 = vpop.f32.mrf.mxu0
  %v1195 = vadd.f32 %v1082, %v1194
  %1196 = vmatmul.f32.gmra.mxu0 %v687
  %v1197 = vpop.f32.mrf.mxu0
  %v1198 = vadd.f32 %v1085, %v1197
  %1199 = vmatmul.f32.gmra.mxu0 %v689
  %v1200 = vpop.f32.mrf.mxu0
  %v1201 = vadd.f32 %v1088, %v1200
  %1202 = vmatmul.f32.gmra.mxu0 %v691
  %v1203 = vpop.f32.mrf.mxu0
  %v1204 = vadd.f32 %v1091, %v1203
  %1205 = vmatmul.f32.gmra.mxu0 %v693
  %v1206 = vpop.f32.mrf.mxu0
  %v1207 = vadd.f32 %v1094, %v1206
  %1208 = vmatmul.f32.gmra.mxu0 %v695
  %v1209 = vpop.f32.mrf.mxu0
  %v1210 = vadd.f32 %v1097, %v1209
  %1211 = vmatmul.f32.gmra.mxu0 %v697
  %v1212 = vpop.f32.mrf.mxu0
  %v1213 = vadd.f32 %v1100, %v1212
  %1214 = vmatmul.f32.gmra.mxu0 %v699
  %v1215 = vpop.f32.mrf.mxu0
  %v1216 = vadd.f32 %v1103, %v1215
  %1217 = vdwg.mxu0
  %v1218 = vmax.f32 %v897, 0.0
  %v1219 = vmax.f32 %v1123, 0.0
  %v1220 = vmax.f32 %v900, 0.0
  %v1221 = vmax.f32 %v1126, 0.0
  %v1222 = vmax.f32 %v903, 0.0
  %v1223 = vmax.f32 %v1129, 0.0
  %v1224 = vmax.f32 %v906, 0.0
  %v1225 = vmax.f32 %v1132, 0.0
  %v1226 = vmax.f32 %v909, 0.0
  %v1227 = vmax.f32 %v1135, 0.0
  %v1228 = vmax.f32 %v912, 0.0
  %v1229 = vmax.f32 %v1138, 0.0
  %v1230 = vmax.f32 %v915, 0.0
  %v1231 = vmax.f32 %v1141, 0.0
  %v1232 = vmax.f32 %v918, 0.0
  %v1233 = vmax.f32 %v1144, 0.0
  %v1234 = vmax.f32 %v921, 0.0
  %v1235 = vmax.f32 %v1147, 0.0
  %v1236 = vmax.f32 %v924, 0.0
  %v1237 = vmax.f32 %v1150, 0.0
  %v1238 = vmax.f32 %v927, 0.0
  %v1239 = vmax.f32 %v1153, 0.0
  %v1240 = vmax.f32 %v930, 0.0
  %v1241 = vmax.f32 %v1156, 0.0
  %v1242 = vmax.f32 %v933, 0.0
  %v1243 = vmax.f32 %v1159, 0.0
  %v1244 = vmax.f32 %v936, 0.0
  %v1245 = vmax.f32 %v1162, 0.0
  %v1246 = vmax.f32 %v939, 0.0
  %v1247 = vmax.f32 %v1165, 0.0
  %v1248 = vmax.f32 %v942, 0.0
  %v1249 = vmax.f32 %v1168, 0.0
  %v1250 = vmax.f32 %v945, 0.0
  %v1251 = vmax.f32 %v1171, 0.0
  %v1252 = vmax.f32 %v948, 0.0
  %v1253 = vmax.f32 %v1174, 0.0
  %v1254 = vmax.f32 %v951, 0.0
  %v1255 = vmax.f32 %v1177, 0.0
  %v1256 = vmax.f32 %v954, 0.0
  %v1257 = vmax.f32 %v1180, 0.0
  %v1258 = vmax.f32 %v957, 0.0
  %v1259 = vmax.f32 %v1183, 0.0
  %v1260 = vmax.f32 %v960, 0.0
  %v1261 = vmax.f32 %v1186, 0.0
  %v1262 = vmax.f32 %v963, 0.0
  %v1263 = vmax.f32 %v1189, 0.0
  %v1264 = vmax.f32 %v966, 0.0
  %v1265 = vmax.f32 %v1192, 0.0
  %v1266 = vmax.f32 %v969, 0.0
  %v1267 = vmax.f32 %v1195, 0.0
  %v1268 = vmax.f32 %v972, 0.0
  %v1269 = vmax.f32 %v1198, 0.0
  %v1270 = vmax.f32 %v975, 0.0
  %v1271 = vmax.f32 %v1201, 0.0
  %v1272 = vmax.f32 %v978, 0.0
  %v1273 = vmax.f32 %v1204, 0.0
  %v1274 = vmax.f32 %v981, 0.0
  %v1275 = vmax.f32 %v1207, 0.0
  %v1276 = vmax.f32 %v984, 0.0
  %v1277 = vmax.f32 %v1210, 0.0
  %v1278 = vmax.f32 %v987, 0.0
  %v1279 = vmax.f32 %v1213, 0.0
  %v1280 = vmax.f32 %v990, 0.0
  %v1281 = vmax.f32 %v1216, 0.0
  %v1282 = vld [vmem:[%s7] sm:$0xff]
  %v1283 = vld [vmem:[%s7 + $0x8] sm:$0xff]
  %v1284 = vld [vmem:[%s7 + $0x10] sm:$0xff]
  %v1285 = vld [vmem:[%s7 + $0x18] sm:$0xff]
  %v1286 = vld [vmem:[%s7 + $0x20] sm:$0xff]
  %v1287 = vld [vmem:[%s7 + $0x28] sm:$0xff]
  %v1288 = vld [vmem:[%s7 + $0x30] sm:$0xff]
  %v1289 = vld [vmem:[%s7 + $0x38] sm:$0xff]
  %v1290 = vld [vmem:[%s7 + $0x40] sm:$0xff]
  %v1291 = vld [vmem:[%s7 + $0x48] sm:$0xff]
  %v1292 = vld [vmem:[%s7 + $0x50] sm:$0xff]
  %v1293 = vld [vmem:[%s7 + $0x58] sm:$0xff]
  %v1294 = vld [vmem:[%s7 + $0x60] sm:$0xff]
  %v1295 = vld [vmem:[%s7 + $0x68] sm:$0xff]
  %v1296 = vld [vmem:[%s7 + $0x70] sm:$0xff]
  %v1297 = vld [vmem:[%s7 + $0x78] sm:$0xff]
  %v1298 = vld [vmem:[%s7 + $0x80] sm:$0xff]
  %v1299 = vld [vmem:[%s7 + $0x88] sm:$0xff]
  %v1300 = vld [vmem:[%s7 + $0x90] sm:$0xff]
  %v1301 = vld [vmem:[%s7 + $0x98] sm:$0xff]
  %v1302 = vld [vmem:[%s7 + $0xa0] sm:$0xff]
  %v1303 = vld [vmem:[%s7 + $0xa8] sm:$0xff]
  %v1304 = vld [vmem:[%s7 + $0xb0] sm:$0xff]
  %v1305 = vld [vmem:[%s7 + $0xb8] sm:$0xff]
  %v1306 = vld [vmem:[%s7 + $0xc0] sm:$0xff]
  %v1307 = vld [vmem:[%s7 + $0xc8] sm:$0xff]
  %v1308 = vld [vmem:[%s7 + $0xd0] sm:$0xff]
  %v1309 = vld [vmem:[%s7 + $0xd8] sm:$0xff]
  %v1310 = vld [vmem:[%s7 + $0xe0] sm:$0xff]
  %v1311 = vld [vmem:[%s7 + $0xe8] sm:$0xff]
  %v1312 = vld [vmem:[%s7 + $0xf0] sm:$0xff]
  %v1313 = vld [vmem:[%s7 + $0xf8] sm:$0xff]
  %v1314 = vld [vmem:[%s8] sm:$0x1]
  %v1316 = vperm.slane %v1314, 0
  %1318 = vmatpush.msra.mxu0 %v1297
  %1319 = vmatpush.msra.mxu0 %v1296
  %1320 = vmatpush.msra.mxu0 %v1295
  %1321 = vmatpush.msra.mxu0 %v1294
  %1322 = vmatpush.msra.mxu0 %v1293
  %1323 = vmatpush.msra.mxu0 %v1292
  %1324 = vmatpush.msra.mxu0 %v1291
  %1325 = vmatpush.msra.mxu0 %v1290
  %1326 = vmatpush.msra.mxu0 %v1289
  %1327 = vmatpush.msra.mxu0 %v1288
  %1328 = vmatpush.msra.mxu0 %v1287
  %1329 = vmatpush.msra.mxu0 %v1286
  %1330 = vmatpush.msra.mxu0 %v1285
  %1331 = vmatpush.msra.mxu0 %v1284
  %1332 = vmatpush.msra.mxu0 %v1283
  %1333 = vmatpush.msra.mxu0 %v1282
  %1334 = vmatmul.f32.gmra.mxu0 %v1218
  %v1335 = vpop.f32.mrf.mxu0
  %v1336 = vadd.f32 %v1316, %v1335
  %1337 = vmatmul.f32.gmra.mxu0 %v1220
  %v1338 = vpop.f32.mrf.mxu0
  %v1339 = vadd.f32 %v1316, %v1338
  %1340 = vmatmul.f32.gmra.mxu0 %v1222
  %v1341 = vpop.f32.mrf.mxu0
  %v1342 = vadd.f32 %v1316, %v1341
  %1343 = vmatmul.f32.gmra.mxu0 %v1224
  %v1344 = vpop.f32.mrf.mxu0
  %v1345 = vadd.f32 %v1316, %v1344
  %1346 = vmatmul.f32.gmra.mxu0 %v1226
  %v1347 = vpop.f32.mrf.mxu0
  %v1348 = vadd.f32 %v1316, %v1347
  %1349 = vmatmul.f32.gmra.mxu0 %v1228
  %v1350 = vpop.f32.mrf.mxu0
  %v1351 = vadd.f32 %v1316, %v1350
  %1352 = vmatmul.f32.gmra.mxu0 %v1230
  %v1353 = vpop.f32.mrf.mxu0
  %v1354 = vadd.f32 %v1316, %v1353
  %1355 = vmatmul.f32.gmra.mxu0 %v1232
  %v1356 = vpop.f32.mrf.mxu0
  %v1357 = vadd.f32 %v1316, %v1356
  %1358 = vmatmul.f32.gmra.mxu0 %v1234
  %v1359 = vpop.f32.mrf.mxu0
  %v1360 = vadd.f32 %v1316, %v1359
  %1361 = vmatmul.f32.gmra.mxu0 %v1236
  %v1362 = vpop.f32.mrf.mxu0
  %v1363 = vadd.f32 %v1316, %v1362
  %1364 = vmatmul.f32.gmra.mxu0 %v1238
  %v1365 = vpop.f32.mrf.mxu0
  %v1366 = vadd.f32 %v1316, %v1365
  %1367 = vmatmul.f32.gmra.mxu0 %v1240
  %v1368 = vpop.f32.mrf.mxu0
  %v1369 = vadd.f32 %v1316, %v1368
  %1370 = vmatmul.f32.gmra.mxu0 %v1242
  %v1371 = vpop.f32.mrf.mxu0
  %v1372 = vadd.f32 %v1316, %v1371
  %1373 = vmatmul.f32.gmra.mxu0 %v1244
  %v1374 = vpop.f32.mrf.mxu0
  %v1375 = vadd.f32 %v1316, %v1374
  %1376 = vmatmul.f32.gmra.mxu0 %v1246
  %v1377 = vpop.f32.mrf.mxu0
  %v1378 = vadd.f32 %v1316, %v1377
  %1379 = vmatmul.f32.gmra.mxu0 %v1248
  %v1380 = vpop.f32.mrf.mxu0
  %v1381 = vadd.f32 %v1316, %v1380
  %1382 = vmatmul.f32.gmra.mxu0 %v1250
  %v1383 = vpop.f32.mrf.mxu0
  %v1384 = vadd.f32 %v1316, %v1383
  %1385 = vmatmul.f32.gmra.mxu0 %v1252
  %v1386 = vpop.f32.mrf.mxu0
  %v1387 = vadd.f32 %v1316, %v1386
  %1388 = vmatmul.f32.gmra.mxu0 %v1254
  %v1389 = vpop.f32.mrf.mxu0
  %v1390 = vadd.f32 %v1316, %v1389
  %1391 = vmatmul.f32.gmra.mxu0 %v1256
  %v1392 = vpop.f32.mrf.mxu0
  %v1393 = vadd.f32 %v1316, %v1392
  %1394 = vmatmul.f32.gmra.mxu0 %v1258
  %v1395 = vpop.f32.mrf.mxu0
  %v1396 = vadd.f32 %v1316, %v1395
  %1397 = vmatmul.f32.gmra.mxu0 %v1260
  %v1398 = vpop.f32.mrf.mxu0
  %v1399 = vadd.f32 %v1316, %v1398
  %1400 = vmatmul.f32.gmra.mxu0 %v1262
  %v1401 = vpop.f32.mrf.mxu0
  %v1402 = vadd.f32 %v1316, %v1401
  %1403 = vmatmul.f32.gmra.mxu0 %v1264
  %v1404 = vpop.f32.mrf.mxu0
  %v1405 = vadd.f32 %v1316, %v1404
  %1406 = vmatmul.f32.gmra.mxu0 %v1266
  %v1407 = vpop.f32.mrf.mxu0
  %v1408 = vadd.f32 %v1316, %v1407
  %1409 = vmatmul.f32.gmra.mxu0 %v1268
  %v1410 = vpop.f32.mrf.mxu0
  %v1411 = vadd.f32 %v1316, %v1410
  %1412 = vmatmul.f32.gmra.mxu0 %v1270
  %v1413 = vpop.f32.mrf.mxu0
  %v1414 = vadd.f32 %v1316, %v1413
  %1415 = vmatmul.f32.gmra.mxu0 %v1272
  %v1416 = vpop.f32.mrf.mxu0
  %v1417 = vadd.f32 %v1316, %v1416
  %1418 = vmatmul.f32.gmra.mxu0 %v1274
  %v1419 = vpop.f32.mrf.mxu0
  %v1420 = vadd.f32 %v1316, %v1419
  %1421 = vmatmul.f32.gmra.mxu0 %v1276
  %v1422 = vpop.f32.mrf.mxu0
  %v1423 = vadd.f32 %v1316, %v1422
  %1424 = vmatmul.f32.gmra.mxu0 %v1278
  %v1425 = vpop.f32.mrf.mxu0
  %v1426 = vadd.f32 %v1316, %v1425
  %1427 = vmatmul.f32.gmra.mxu0 %v1280
  %v1428 = vpop.f32.mrf.mxu0
  %v1429 = vadd.f32 %v1316, %v1428
  %1430 = vdwg.mxu0
  %1431 = vmatpush.msra.mxu0 %v1313
  %1432 = vmatpush.msra.mxu0 %v1312
  %1433 = vmatpush.msra.mxu0 %v1311
  %1434 = vmatpush.msra.mxu0 %v1310
  %1435 = vmatpush.msra.mxu0 %v1309
  %1436 = vmatpush.msra.mxu0 %v1308
  %1437 = vmatpush.msra.mxu0 %v1307
  %1438 = vmatpush.msra.mxu0 %v1306
  %1439 = vmatpush.msra.mxu0 %v1305
  %1440 = vmatpush.msra.mxu0 %v1304
  %1441 = vmatpush.msra.mxu0 %v1303
  %1442 = vmatpush.msra.mxu0 %v1302
  %1443 = vmatpush.msra.mxu0 %v1301
  %1444 = vmatpush.msra.mxu0 %v1300
  %1445 = vmatpush.msra.mxu0 %v1299
  %1446 = vmatpush.msra.mxu0 %v1298
  %1447 = vmatmul.f32.gmra.mxu0 %v1219
  %v1448 = vpop.f32.mrf.mxu0
  %v1449 = vadd.f32 %v1336, %v1448
  %1450 = vmatmul.f32.gmra.mxu0 %v1221
  %v1451 = vpop.f32.mrf.mxu0
  %v1452 = vadd.f32 %v1339, %v1451
  %1453 = vmatmul.f32.gmra.mxu0 %v1223
  %v1454 = vpop.f32.mrf.mxu0
  %v1455 = vadd.f32 %v1342, %v1454
  %1456 = vmatmul.f32.gmra.mxu0 %v1225
  %v1457 = vpop.f32.mrf.mxu0
  %v1458 = vadd.f32 %v1345, %v1457
  %1459 = vmatmul.f32.gmra.mxu0 %v1227
  %v1460 = vpop.f32.mrf.mxu0
  %v1461 = vadd.f32 %v1348, %v1460
  %1462 = vmatmul.f32.gmra.mxu0 %v1229
  %v1463 = vpop.f32.mrf.mxu0
  %v1464 = vadd.f32 %v1351, %v1463
  %1465 = vmatmul.f32.gmra.mxu0 %v1231
  %v1466 = vpop.f32.mrf.mxu0
  %v1467 = vadd.f32 %v1354, %v1466
  %1468 = vmatmul.f32.gmra.mxu0 %v1233
  %v1469 = vpop.f32.mrf.mxu0
  %v1470 = vadd.f32 %v1357, %v1469
  %1471 = vmatmul.f32.gmra.mxu0 %v1235
  %v1472 = vpop.f32.mrf.mxu0
  %v1473 = vadd.f32 %v1360, %v1472
  %1474 = vmatmul.f32.gmra.mxu0 %v1237
  %v1475 = vpop.f32.mrf.mxu0
  %v1476 = vadd.f32 %v1363, %v1475
  %1477 = vmatmul.f32.gmra.mxu0 %v1239
  %v1478 = vpop.f32.mrf.mxu0
  %v1479 = vadd.f32 %v1366, %v1478
  %1480 = vmatmul.f32.gmra.mxu0 %v1241
  %v1481 = vpop.f32.mrf.mxu0
  %v1482 = vadd.f32 %v1369, %v1481
  %1483 = vmatmul.f32.gmra.mxu0 %v1243
  %v1484 = vpop.f32.mrf.mxu0
  %v1485 = vadd.f32 %v1372, %v1484
  %1486 = vmatmul.f32.gmra.mxu0 %v1245
  %v1487 = vpop.f32.mrf.mxu0
  %v1488 = vadd.f32 %v1375, %v1487
  %1489 = vmatmul.f32.gmra.mxu0 %v1247
  %v1490 = vpop.f32.mrf.mxu0
  %v1491 = vadd.f32 %v1378, %v1490
  %1492 = vmatmul.f32.gmra.mxu0 %v1249
  %v1493 = vpop.f32.mrf.mxu0
  %v1494 = vadd.f32 %v1381, %v1493
  %1495 = vmatmul.f32.gmra.mxu0 %v1251
  %v1496 = vpop.f32.mrf.mxu0
  %v1497 = vadd.f32 %v1384, %v1496
  %1498 = vmatmul.f32.gmra.mxu0 %v1253
  %v1499 = vpop.f32.mrf.mxu0
  %v1500 = vadd.f32 %v1387, %v1499
  %1501 = vmatmul.f32.gmra.mxu0 %v1255
  %v1502 = vpop.f32.mrf.mxu0
  %v1503 = vadd.f32 %v1390, %v1502
  %1504 = vmatmul.f32.gmra.mxu0 %v1257
  %v1505 = vpop.f32.mrf.mxu0
  %v1506 = vadd.f32 %v1393, %v1505
  %1507 = vmatmul.f32.gmra.mxu0 %v1259
  %v1508 = vpop.f32.mrf.mxu0
  %v1509 = vadd.f32 %v1396, %v1508
  %1510 = vmatmul.f32.gmra.mxu0 %v1261
  %v1511 = vpop.f32.mrf.mxu0
  %v1512 = vadd.f32 %v1399, %v1511
  %1513 = vmatmul.f32.gmra.mxu0 %v1263
  %v1514 = vpop.f32.mrf.mxu0
  %v1515 = vadd.f32 %v1402, %v1514
  %1516 = vmatmul.f32.gmra.mxu0 %v1265
  %v1517 = vpop.f32.mrf.mxu0
  %v1518 = vadd.f32 %v1405, %v1517
  %1519 = vmatmul.f32.gmra.mxu0 %v1267
  %v1520 = vpop.f32.mrf.mxu0
  %v1521 = vadd.f32 %v1408, %v1520
  %1522 = vmatmul.f32.gmra.mxu0 %v1269
  %v1523 = vpop.f32.mrf.mxu0
  %v1524 = vadd.f32 %v1411, %v1523
  %1525 = vmatmul.f32.gmra.mxu0 %v1271
  %v1526 = vpop.f32.mrf.mxu0
  %v1527 = vadd.f32 %v1414, %v1526
  %1528 = vmatmul.f32.gmra.mxu0 %v1273
  %v1529 = vpop.f32.mrf.mxu0
  %v1530 = vadd.f32 %v1417, %v1529
  %1531 = vmatmul.f32.gmra.mxu0 %v1275
  %v1532 = vpop.f32.mrf.mxu0
  %v1533 = vadd.f32 %v1420, %v1532
  %1534 = vmatmul.f32.gmra.mxu0 %v1277
  %v1535 = vpop.f32.mrf.mxu0
  %v1536 = vadd.f32 %v1423, %v1535
  %1537 = vmatmul.f32.gmra.mxu0 %v1279
  %v1538 = vpop.f32.mrf.mxu0
  %v1539 = vadd.f32 %v1426, %v1538
  %1540 = vmatmul.f32.gmra.mxu0 %v1281
  %v1541 = vpop.f32.mrf.mxu0
  %v1542 = vadd.f32 %v1429, %v1541
  %1543 = vdwg.mxu0
  %v1544 = vmax.f32 %v1449, 0.0
  %v1545 = vmax.f32 %v1452, 0.0
  %v1546 = vmax.f32 %v1455, 0.0
  %v1547 = vmax.f32 %v1458, 0.0
  %v1548 = vmax.f32 %v1461, 0.0
  %v1549 = vmax.f32 %v1464, 0.0
  %v1550 = vmax.f32 %v1467, 0.0
  %v1551 = vmax.f32 %v1470, 0.0
  %v1552 = vmax.f32 %v1473, 0.0
  %v1553 = vmax.f32 %v1476, 0.0
  %v1554 = vmax.f32 %v1479, 0.0
  %v1555 = vmax.f32 %v1482, 0.0
  %v1556 = vmax.f32 %v1485, 0.0
  %v1557 = vmax.f32 %v1488, 0.0
  %v1558 = vmax.f32 %v1491, 0.0
  %v1559 = vmax.f32 %v1494, 0.0
  %v1560 = vmax.f32 %v1497, 0.0
  %v1561 = vmax.f32 %v1500, 0.0
  %v1562 = vmax.f32 %v1503, 0.0
  %v1563 = vmax.f32 %v1506, 0.0
  %v1564 = vmax.f32 %v1509, 0.0
  %v1565 = vmax.f32 %v1512, 0.0
  %v1566 = vmax.f32 %v1515, 0.0
  %v1567 = vmax.f32 %v1518, 0.0
  %v1568 = vmax.f32 %v1521, 0.0
  %v1569 = vmax.f32 %v1524, 0.0
  %v1570 = vmax.f32 %v1527, 0.0
  %v1571 = vmax.f32 %v1530, 0.0
  %v1572 = vmax.f32 %v1533, 0.0
  %v1573 = vmax.f32 %v1536, 0.0
  %v1574 = vmax.f32 %v1539, 0.0
  %v1575 = vmax.f32 %v1542, 0.0
  %v1576 = vld [vmem:[%s9] sm:$0xff]
  %v1577 = vld [vmem:[%s9 + $0x8] sm:$0xff]
  %v1578 = vld [vmem:[%s9 + $0x10] sm:$0xff]
  %v1579 = vld [vmem:[%s9 + $0x18] sm:$0xff]
  %v1580 = vld [vmem:[%s9 + $0x20] sm:$0xff]
  %v1581 = vld [vmem:[%s9 + $0x28] sm:$0xff]
  %v1582 = vld [vmem:[%s9 + $0x30] sm:$0xff]
  %v1583 = vld [vmem:[%s9 + $0x38] sm:$0xff]
  %v1584 = vld [vmem:[%s9 + $0x40] sm:$0xff]
  %v1585 = vld [vmem:[%s9 + $0x48] sm:$0xff]
  %v1586 = vld [vmem:[%s9 + $0x50] sm:$0xff]
  %v1587 = vld [vmem:[%s9 + $0x58] sm:$0xff]
  %v1588 = vld [vmem:[%s9 + $0x60] sm:$0xff]
  %v1589 = vld [vmem:[%s9 + $0x68] sm:$0xff]
  %v1590 = vld [vmem:[%s9 + $0x70] sm:$0xff]
  %v1591 = vld [vmem:[%s9 + $0x78] sm:$0xff]
  %v1592 = vld [vmem:[%s10] sm:$0x1]
  %v1594 = vperm.slane %v1592, 0
  %1596 = vmatpush.msra.mxu0 %v1591
  %1597 = vmatpush.msra.mxu0 %v1590
  %1598 = vmatpush.msra.mxu0 %v1589
  %1599 = vmatpush.msra.mxu0 %v1588
  %1600 = vmatpush.msra.mxu0 %v1587
  %1601 = vmatpush.msra.mxu0 %v1586
  %1602 = vmatpush.msra.mxu0 %v1585
  %1603 = vmatpush.msra.mxu0 %v1584
  %1604 = vmatpush.msra.mxu0 %v1583
  %1605 = vmatpush.msra.mxu0 %v1582
  %1606 = vmatpush.msra.mxu0 %v1581
  %1607 = vmatpush.msra.mxu0 %v1580
  %1608 = vmatpush.msra.mxu0 %v1579
  %1609 = vmatpush.msra.mxu0 %v1578
  %1610 = vmatpush.msra.mxu0 %v1577
  %1611 = vmatpush.msra.mxu0 %v1576
  %1612 = vmatmul.f32.gmra.mxu0 %v1544
  %v1613 = vpop.f32.mrf.mxu0
  %v1614 = vadd.f32 %v1594, %v1613
  %1615 = vmatmul.f32.gmra.mxu0 %v1545
  %v1616 = vpop.f32.mrf.mxu0
  %v1617 = vadd.f32 %v1594, %v1616
  %1618 = vmatmul.f32.gmra.mxu0 %v1546
  %v1619 = vpop.f32.mrf.mxu0
  %v1620 = vadd.f32 %v1594, %v1619
  %1621 = vmatmul.f32.gmra.mxu0 %v1547
  %v1622 = vpop.f32.mrf.mxu0
  %v1623 = vadd.f32 %v1594, %v1622
  %1624 = vmatmul.f32.gmra.mxu0 %v1548
  %v1625 = vpop.f32.mrf.mxu0
  %v1626 = vadd.f32 %v1594, %v1625
  %1627 = vmatmul.f32.gmra.mxu0 %v1549
  %v1628 = vpop.f32.mrf.mxu0
  %v1629 = vadd.f32 %v1594, %v1628
  %1630 = vmatmul.f32.gmra.mxu0 %v1550
  %v1631 = vpop.f32.mrf.mxu0
  %v1632 = vadd.f32 %v1594, %v1631
  %1633 = vmatmul.f32.gmra.mxu0 %v1551
  %v1634 = vpop.f32.mrf.mxu0
  %v1635 = vadd.f32 %v1594, %v1634
  %1636 = vmatmul.f32.gmra.mxu0 %v1552
  %v1637 = vpop.f32.mrf.mxu0
  %v1638 = vadd.f32 %v1594, %v1637
  %1639 = vmatmul.f32.gmra.mxu0 %v1553
  %v1640 = vpop.f32.mrf.mxu0
  %v1641 = vadd.f32 %v1594, %v1640
  %1642 = vmatmul.f32.gmra.mxu0 %v1554
  %v1643 = vpop.f32.mrf.mxu0
  %v1644 = vadd.f32 %v1594, %v1643
  %1645 = vmatmul.f32.gmra.mxu0 %v1555
  %v1646 = vpop.f32.mrf.mxu0
  %v1647 = vadd.f32 %v1594, %v1646
  %1648 = vmatmul.f32.gmra.mxu0 %v1556
  %v1649 = vpop.f32.mrf.mxu0
  %v1650 = vadd.f32 %v1594, %v1649
  %1651 = vmatmul.f32.gmra.mxu0 %v1557
  %v1652 = vpop.f32.mrf.mxu0
  %v1653 = vadd.f32 %v1594, %v1652
  %1654 = vmatmul.f32.gmra.mxu0 %v1558
  %v1655 = vpop.f32.mrf.mxu0
  %v1656 = vadd.f32 %v1594, %v1655
  %1657 = vmatmul.f32.gmra.mxu0 %v1559
  %v1658 = vpop.f32.mrf.mxu0
  %v1659 = vadd.f32 %v1594, %v1658
  %1660 = vmatmul.f32.gmra.mxu0 %v1560
  %v1661 = vpop.f32.mrf.mxu0
  %v1662 = vadd.f32 %v1594, %v1661
  %1663 = vmatmul.f32.gmra.mxu0 %v1561
  %v1664 = vpop.f32.mrf.mxu0
  %v1665 = vadd.f32 %v1594, %v1664
  %1666 = vmatmul.f32.gmra.mxu0 %v1562
  %v1667 = vpop.f32.mrf.mxu0
  %v1668 = vadd.f32 %v1594, %v1667
  %1669 = vmatmul.f32.gmra.mxu0 %v1563
  %v1670 = vpop.f32.mrf.mxu0
  %v1671 = vadd.f32 %v1594, %v1670
  %1672 = vmatmul.f32.gmra.mxu0 %v1564
  %v1673 = vpop.f32.mrf.mxu0
  %v1674 = vadd.f32 %v1594, %v1673
  %1675 = vmatmul.f32.gmra.mxu0 %v1565
  %v1676 = vpop.f32.mrf.mxu0
  %v1677 = vadd.f32 %v1594, %v1676
  %1678 = vmatmul.f32.gmra.mxu0 %v1566
  %v1679 = vpop.f32.mrf.mxu0
  %v1680 = vadd.f32 %v1594, %v1679
  %1681 = vmatmul.f32.gmra.mxu0 %v1567
  %v1682 = vpop.f32.mrf.mxu0
  %v1683 = vadd.f32 %v1594, %v1682
  %1684 = vmatmul.f32.gmra.mxu0 %v1568
  %v1685 = vpop.f32.mrf.mxu0
  %v1686 = vadd.f32 %v1594, %v1685
  %1687 = vmatmul.f32.gmra.mxu0 %v1569
  %v1688 = vpop.f32.mrf.mxu0
  %v1689 = vadd.f32 %v1594, %v1688
  %1690 = vmatmul.f32.gmra.mxu0 %v1570
  %v1691 = vpop.f32.mrf.mxu0
  %v1692 = vadd.f32 %v1594, %v1691
  %1693 = vmatmul.f32.gmra.mxu0 %v1571
  %v1694 = vpop.f32.mrf.mxu0
  %v1695 = vadd.f32 %v1594, %v1694
  %1696 = vmatmul.f32.gmra.mxu0 %v1572
  %v1697 = vpop.f32.mrf.mxu0
  %v1698 = vadd.f32 %v1594, %v1697
  %1699 = vmatmul.f32.gmra.mxu0 %v1573
  %v1700 = vpop.f32.mrf.mxu0
  %v1701 = vadd.f32 %v1594, %v1700
  %1702 = vmatmul.f32.gmra.mxu0 %v1574
  %v1703 = vpop.f32.mrf.mxu0
  %v1704 = vadd.f32 %v1594, %v1703
  %1705 = vmatmul.f32.gmra.mxu0 %v1575
  %v1706 = vpop.f32.mrf.mxu0
  %v1707 = vadd.f32 %v1594, %v1706
  %1708 = vdwg.mxu0
  %vm1709 = vcmask 31744
  %1710 = vst.msk [vmem:[%s11] sm:$0xff] %vm1709, %v1614
  %1711 = vst.msk [vmem:[%s11 + $0x8] sm:$0xff] %vm1709, %v1617
  %1712 = vst.msk [vmem:[%s11 + $0x10] sm:$0xff] %vm1709, %v1620
  %1713 = vst.msk [vmem:[%s11 + $0x18] sm:$0xff] %vm1709, %v1623
  %1714 = vst.msk [vmem:[%s11 + $0x20] sm:$0xff] %vm1709, %v1626
  %1715 = vst.msk [vmem:[%s11 + $0x28] sm:$0xff] %vm1709, %v1629
  %1716 = vst.msk [vmem:[%s11 + $0x30] sm:$0xff] %vm1709, %v1632
  %1717 = vst.msk [vmem:[%s11 + $0x38] sm:$0xff] %vm1709, %v1635
  %1718 = vst.msk [vmem:[%s11 + $0x40] sm:$0xff] %vm1709, %v1638
  %1719 = vst.msk [vmem:[%s11 + $0x48] sm:$0xff] %vm1709, %v1641
  %1720 = vst.msk [vmem:[%s11 + $0x50] sm:$0xff] %vm1709, %v1644
  %1721 = vst.msk [vmem:[%s11 + $0x58] sm:$0xff] %vm1709, %v1647
  %1722 = vst.msk [vmem:[%s11 + $0x60] sm:$0xff] %vm1709, %v1650
  %1723 = vst.msk [vmem:[%s11 + $0x68] sm:$0xff] %vm1709, %v1653
  %1724 = vst.msk [vmem:[%s11 + $0x70] sm:$0xff] %vm1709, %v1656
  %1725 = vst.msk [vmem:[%s11 + $0x78] sm:$0xff] %vm1709, %v1659
  %1726 = vst.msk [vmem:[%s11 + $0x80] sm:$0xff] %vm1709, %v1662
  %1727 = vst.msk [vmem:[%s11 + $0x88] sm:$0xff] %vm1709, %v1665
  %1728 = vst.msk [vmem:[%s11 + $0x90] sm:$0xff] %vm1709, %v1668
  %1729 = vst.msk [vmem:[%s11 + $0x98] sm:$0xff] %vm1709, %v1671
  %1730 = vst.msk [vmem:[%s11 + $0xa0] sm:$0xff] %vm1709, %v1674
  %1731 = vst.msk [vmem:[%s11 + $0xa8] sm:$0xff] %vm1709, %v1677
  %1732 = vst.msk [vmem:[%s11 + $0xb0] sm:$0xff] %vm1709, %v1680
  %1733 = vst.msk [vmem:[%s11 + $0xb8] sm:$0xff] %vm1709, %v1683
  %1734 = vst.msk [vmem:[%s11 + $0xc0] sm:$0xff] %vm1709, %v1686
  %1735 = vst.msk [vmem:[%s11 + $0xc8] sm:$0xff] %vm1709, %v1689
  %1736 = vst.msk [vmem:[%s11 + $0xd0] sm:$0xff] %vm1709, %v1692
  %1737 = vst.msk [vmem:[%s11 + $0xd8] sm:$0xff] %vm1709, %v1695
  %1738 = vst.msk [vmem:[%s11 + $0xe0] sm:$0xff] %vm1709, %v1698
  %1739 = vst.msk [vmem:[%s11 + $0xe8] sm:$0xff] %vm1709, %v1701
  %1740 = vst.msk [vmem:[%s11 + $0xf0] sm:$0xff] %vm1709, %v1704
  %1741 = vst.msk [vmem:[%s11 + $0xf8] sm:$0xff] %vm1709, %v1707
  // Predicated region
  $region46: #{pointnet_forward.3} parent=0 // pred_check
    _
  $region47: #{pointnet_forward.3} parent=0 // pred_check_branch
    %1743 = sbr.rel (0) target = $region49
  $region48: #{pointnet_forward.3} parent=0 // pred_region
    _
  $region49: #{pointnet_forward.3} parent=0 // pred_fallthru
    _
  // Predicated region
  $region50: #{pointnet_forward.3} parent=0 // pred_check
    _
  $region51: #{pointnet_forward.3} parent=0 // pred_check_branch
    %1745 = sbr.rel (0) target = $region53
  $region52: #{pointnet_forward.3} parent=0 // pred_region
    _
  $region53: #{pointnet_forward.3} parent=0 // pred_fallthru
    _

</llo_original>
